<compile_context>
chip_gen: v5e
topology: v5e:2x2
jax: 0.10.0
libtpu: 0.0.40
codegen_flags: <defaults>
</compile_context>

<pallas_src>
import functools

import jax
import jax.numpy as jnp
from jax.experimental import pallas as pl
from jax.experimental.pallas import tpu as pltpu


# ------------------------------ kernel body ----------------------------------

def _gat_fused_kernel(x_ref, adjb2_ref, adjb3_ref,
                      wlr1_ref, blr1_ref, bm1s_ref, b1_ref,
                      wl2_ref, bl2_ref, wr2_ref, br2_ref, att2_ref, b2_ref,
                      out_ref, *, negative_slope):
    x = x_ref[...]                                   # [N, Fin]
    N = x.shape[0]
    hc = bm1s_ref.shape[0]                           # heads * hidden (= 128)

    # ============ layer 1: GATv2, all heads fused along the lane axis ========
    # One 256-lane projection (wl|wr concatenated host-side), static slices.
    y = jnp.dot(x, wlr1_ref[...], preferred_element_type=jnp.float32) + blr1_ref[...]
    gl = y[:, :hc]                                   # [N, HC]  (source messages)
    gr = y[:, hc:]                                   # [N, HC]  (target side)

    # Pairwise pre-activations z[i, j, k] = gr[i, k] + gl[j, k].
    z = gr[:, None, :] + gl[None, :, :]              # [N, N, HC]
    z = jnp.maximum(z, negative_slope * z)           # leaky_relu (ns in [0,1])

    # Per-head logits on the MXU: att1 folded into the block-diagonal matrix;
    # each head's logit is replicated across that head's C lanes (lane-dense).
    e = jnp.dot(z.reshape(N * N, hc), bm1s_ref[...],
                preferred_element_type=jnp.float32).reshape(N, N, hc)

    # Additive mask: 0 on edges, -1e9 elsewhere (no compares / selects).
    e = e + adjb3_ref[...]                           # [N, N, HC]

    # Masked softmax over sources j (axis=1) with deferred normalization.
    # Self-loops guarantee one zero-bias entry per row, so m stays finite and
    # exp underflows to exactly 0 for non-edges.
    m = jnp.max(e, axis=1, keepdims=True)            # [N, 1, HC]
    p = jnp.exp(e - m)                               # [N, N, HC]
    s = jnp.sum(p, axis=1)                           # [N, HC]
    acc = jnp.sum(p * gl[None], axis=1)              # [N, HC] unnormalized aggregate
    h = acc / jnp.maximum(s, 1e-30) + b1_ref[...]    # normalize on the small result

    # ============ ELU (dropout is identity in eval mode) =====================
    # TODO(synk): switch to jnp.expm1 once lax.expm1 lowering is available in
    # Mosaic; exp(min(x,0)) - 1 differs by < 1e-7 at these magnitudes.
    h = jnp.where(h > 0, h, jnp.exp(jnp.minimum(h, 0.0)) - 1.0)

    # ============ layer 2: single-head GATv2 on 2-D [N, N] planes ============
    gl2 = jnp.dot(h, wl2_ref[...], preferred_element_type=jnp.float32) + bl2_ref[...]
    gr2 = jnp.dot(h, wr2_ref[...], preferred_element_type=jnp.float32) + br2_ref[...]
    gl2t = jnp.transpose(gl2)                        # [C2, N] (tiny XLU transpose)
    a2 = att2_ref[...]                               # [1, C2]
    ncls = gl2.shape[1]

    # Logits e2[i, j] = sum_c att2[c] * leaky_relu(gr2[i, c] + gl2[j, c]),
    # accumulated per channel on lane-dense [N, N] planes; the additive mask
    # is folded in by starting the accumulator from the bias plane.
    e2 = adjb2_ref[...]                              # [N, N]
    for c in range(ncls):                            # static channel loop (C2 = 4)
        zc = gr2[:, c:c + 1] + gl2t[c:c + 1, :]      # [N, N] outer broadcast
        zc = jnp.maximum(zc, negative_slope * zc)
        e2 = e2 + a2[:, c:c + 1] * zc

    m2 = jnp.max(e2, axis=-1, keepdims=True)         # [N, 1] lane-axis reduce
    p2 = jnp.exp(e2 - m2)                            # masked entries -> exactly 0
    s2 = jnp.sum(p2, axis=-1, keepdims=True)         # [N, 1]
    acc2 = jnp.dot(p2, gl2, preferred_element_type=jnp.float32)   # [N, C2] MXU
    o = acc2 / jnp.maximum(s2, 1e-30) + b2_ref[...]  # deferred normalization

    # ============ log_softmax over classes ===================================
    # NOTE: [N, 4] output is a masked partial store; fine at this size.
    mo = jnp.max(o, axis=-1, keepdims=True)
    lse = jnp.log(jnp.sum(jnp.exp(o - mo), axis=-1, keepdims=True)) + mo
    out_ref[...] = o - lse


# ------------------------------- wrapper --------------------------------------

def gat_forward(x, adj, params1, params2, *, negative_slope=0.2, mask_bias=1e9):
    """Fused forward: gat1 -> ELU -> gat2 -> log_softmax, one pallas_call."""
    wl1, bl1, wr1, br1, att1, bm1, b1 = params1
    wl2, bl2, wr2, br2, att2, bm2, b2 = params2
    assert bm2 is None, "second GATv2 layer is single-head in this model"

    N = x.shape[0]
    hc = wl1.shape[1]
    num_classes = wl2.shape[1]

    # ---- host-side packing ----
    wlr1 = jnp.concatenate([wl1, wr1], axis=1)        # [Fin, 2*HC] -> 256-lane matmul
    blr1 = jnp.concatenate([bl1, br1], axis=1)        # [1, 2*HC]
    bm1s = bm1 * jnp.transpose(att1)                  # att folded into block-diag
    adj_bias = (adj - 1.0) * mask_bias                # [N, N]: 0 on edges, -1e9 off
    adj_bias3 = adj_bias.reshape(N, N, 1)             # sublane-aligned copy for layer 1

    args = (x, adj_bias, adj_bias3, wlr1, blr1, bm1s, b1,
            wl2, bl2, wr2, br2, att2, b2)

    def full_spec(a):
        nd = a.ndim
        return pl.BlockSpec(a.shape, lambda i, nd=nd: (0,) * nd)

    kernel = functools.partial(_gat_fused_kernel, negative_slope=negative_slope)

    return pl.pallas_call(
        kernel,
        out_shape=jax.ShapeDtypeStruct((N, num_classes), jnp.float32),
        grid_spec=pltpu.PrefetchScalarGridSpec(
            num_scalar_prefetch=0,
            grid=(1,),
            in_specs=[full_spec(a) for a in args],
            out_specs=pl.BlockSpec((N, num_classes), lambda i: (0, 0)),
        ),
        compiler_params=pltpu.CompilerParams(
            dimension_semantics=("arbitrary",)),
    )(*args)


# ------------------------ pure-JAX reference (checking) -----------------------

def _layer_ref(x, adj, wl, bl, wr, br, att_row, bias, heads, negative_slope=0.2):
    N = x.shape[0]
    hc = wl.shape[1]
    c = hc // heads
    gl = x @ wl + bl
    gr = x @ wr + br
    z = gr[:, None, :] + gl[None, :, :]
    z = jnp.where(z > 0, z, negative_slope * z)
    e = (z * att_row[None]).reshape(N, N, heads, c).sum(-1)        # [N, N, H]
    mask = (adj > 0)[:, :, None]
    e = jnp.where(mask, e, -jnp.inf)
    alpha = jax.nn.softmax(e, axis=1)                              # [N, N, H]
    out = jnp.einsum('ijh,jhc->ihc', alpha, gl.reshape(N, heads, c)).reshape(N, hc)
    return out + bias


def forward_ref(x, adj, params1, params2, heads1, heads2):
    wl1, bl1, wr1, br1, att1, _, b1 = params1
    wl2, bl2, wr2, br2, att2, _, b2 = params2
    h = _layer_ref(x, adj, wl1, bl1, wr1, br1, att1, b1, heads1)
    h = jnp.where(h > 0, h, jnp.expm1(h))                          # ELU
    h = _layer_ref(h, adj, wl2, bl2, wr2, br2, att2, b2, heads2)
    return jax.nn.log_softmax(h, axis=1)


# ----------------------------------- main --------------------------------------

def _init_layer(key, fin, c, heads):
    """Head-concatenated GATv2Conv parameters (lane-dense packing)."""
    ks = jax.random.split(key, 6)
    s = 1.0 / jnp.sqrt(jnp.float32(fin))
    hc = heads * c
    wl = jax.random.uniform(ks[0], (fin, hc), jnp.float32, -s, s)
    wr = jax.random.uniform(ks[1], (fin, hc), jnp.float32, -s, s)
    att = jax.random.uniform(ks[2], (1, hc), jnp.float32, -s, s)
    bl = jax.random.uniform(ks[3], (1, hc), jnp.float32, -0.1, 0.1)
    br = jax.random.uniform(ks[4], (1, hc), jnp.float32, -0.1, 0.1)
    bias = jax.random.uniform(ks[5], (1, hc), jnp.float32, -0.1, 0.1)
    if heads > 1:
        head_id = jnp.arange(hc) // c
        blockmask = (head_id[:, None] == head_id[None, :]).astype(jnp.float32)
    else:
        blockmask = None
    return (wl, bl, wr, br, att, blockmask, bias)


if __name__ == "__main__":
    N, in_dim, hidden, heads, num_classes = 32, 8, 16, 8, 4
    key = jax.random.PRNGKey(0)
    k = jax.random.split(key, 5)

    # data.x
    x = jax.random.normal(k[0], (N, in_dim), jnp.float32)

    # data.edge_index -> dense adjacency, adj[target, source] = 1, + self loops
    n_edges = 96
    src = jax.random.randint(k[1], (n_edges,), 0, N)
    dst = jax.random.randint(k[2], (n_edges,), 0, N)
    adj = jnp.zeros((N, N), jnp.float32).at[dst, src].set(1.0)
    adj = jnp.maximum(adj, jnp.eye(N, dtype=jnp.float32))

    # gat1: GATv2Conv(in_dim, 16, heads=8); gat2: GATv2Conv(16*8, classes, heads=1)
    params1 = _init_layer(k[3], in_dim, hidden, heads)
    params2 = _init_layer(k[4], hidden * heads, num_classes, 1)

    log_probs = gat_forward(x, adj, params1, params2)
    log_probs = jax.block_until_ready(log_probs)

    ref = forward_ref(x, adj, params1, params2, heads1=heads, heads2=1)
    assert log_probs.shape == (N, num_classes)
    assert bool(jnp.all(jnp.isfinite(log_probs)))
    assert bool(jnp.allclose(log_probs, ref, atol=1e-4)), float(
        jnp.max(jnp.abs(log_probs - ref)))

    print("KERNEL_OK")
</pallas_src>

<mosaic_0001>
module attributes {stable_mosaic.version = 11 : i64} {
  func.func @_gat_fused_kernel(%arg0: i32, %arg1: memref<32x8xf32, #tpu.memory_space<vmem>>, %arg2: memref<32x32xf32, #tpu.memory_space<vmem>>, %arg3: memref<32x32x1xf32, #tpu.memory_space<vmem>>, %arg4: memref<8x256xf32, #tpu.memory_space<vmem>>, %arg5: memref<1x256xf32, #tpu.memory_space<vmem>>, %arg6: memref<128x128xf32, #tpu.memory_space<vmem>>, %arg7: memref<1x128xf32, #tpu.memory_space<vmem>>, %arg8: memref<128x4xf32, #tpu.memory_space<vmem>>, %arg9: memref<1x4xf32, #tpu.memory_space<vmem>>, %arg10: memref<128x4xf32, #tpu.memory_space<vmem>>, %arg11: memref<1x4xf32, #tpu.memory_space<vmem>>, %arg12: memref<1x4xf32, #tpu.memory_space<vmem>>, %arg13: memref<1x4xf32, #tpu.memory_space<vmem>>, %arg14: memref<32x4xf32, #tpu.memory_space<vmem>>) attributes {dimension_semantics = [#tpu.dimension_semantics<arbitrary>], iteration_bounds = array<i64: 1>, scalar_prefetch = 0 : i64, scratch_operands = 0 : i64, tpu.core_type = #tpu.core_type<tc>, window_params = [{pipeline_mode = #tpu.pipeline_mode<synchronous>, transform_indices = @transform_0, window_bounds = array<i64: 32, 8>}, {pipeline_mode = #tpu.pipeline_mode<synchronous>, transform_indices = @transform_1, window_bounds = array<i64: 32, 32>}, {pipeline_mode = #tpu.pipeline_mode<synchronous>, transform_indices = @transform_2, window_bounds = array<i64: 32, 32, 1>}, {pipeline_mode = #tpu.pipeline_mode<synchronous>, transform_indices = @transform_3, window_bounds = array<i64: 8, 256>}, {pipeline_mode = #tpu.pipeline_mode<synchronous>, transform_indices = @transform_4, window_bounds = array<i64: 1, 256>}, {pipeline_mode = #tpu.pipeline_mode<synchronous>, transform_indices = @transform_5, window_bounds = array<i64: 128, 128>}, {pipeline_mode = #tpu.pipeline_mode<synchronous>, transform_indices = @transform_6, window_bounds = array<i64: 1, 128>}, {pipeline_mode = #tpu.pipeline_mode<synchronous>, transform_indices = @transform_7, window_bounds = array<i64: 128, 4>}, {pipeline_mode = #tpu.pipeline_mode<synchronous>, transform_indices = @transform_8, window_bounds = array<i64: 1, 4>}, {pipeline_mode = #tpu.pipeline_mode<synchronous>, transform_indices = @transform_9, window_bounds = array<i64: 128, 4>}, {pipeline_mode = #tpu.pipeline_mode<synchronous>, transform_indices = @transform_10, window_bounds = array<i64: 1, 4>}, {pipeline_mode = #tpu.pipeline_mode<synchronous>, transform_indices = @transform_11, window_bounds = array<i64: 1, 4>}, {pipeline_mode = #tpu.pipeline_mode<synchronous>, transform_indices = @transform_12, window_bounds = array<i64: 1, 4>}, {pipeline_mode = #tpu.pipeline_mode<synchronous>, transform_indices = @transform_13, window_bounds = array<i64: 32, 4>}]} {
    %c0 = arith.constant 0 : index
    %c0_0 = arith.constant 0 : index
    %0 = vector.load %arg1[%c0, %c0_0] : memref<32x8xf32, #tpu.memory_space<vmem>>, vector<32x8xf32>
    %c0_1 = arith.constant 0 : index
    %c0_2 = arith.constant 0 : index
    %1 = vector.load %arg4[%c0_1, %c0_2] : memref<8x256xf32, #tpu.memory_space<vmem>>, vector<8x256xf32>
    %cst = arith.constant dense<0.000000e+00> : vector<32x256xf32>
    %2 = tpu.matmul %0, %1, %cst {dimension_numbers = #tpu.dot_dimension_numbers<[1], [0], [0], [1], [0, 0, 1, 1], [], []>} : vector<32x8xf32>, vector<8x256xf32>, vector<32x256xf32> -> vector<32x256xf32>
    %c0_3 = arith.constant 0 : index
    %c0_4 = arith.constant 0 : index
    %3 = vector.load %arg5[%c0_3, %c0_4] : memref<1x256xf32, #tpu.memory_space<vmem>>, vector<1x256xf32>
    %4 = vector.broadcast %3 : vector<1x256xf32> to vector<32x256xf32>
    %5 = arith.addf %2, %4 : vector<32x256xf32>
    %6 = vector.extract_strided_slice %5 {offsets = [0, 0], sizes = [32, 128], strides = [1, 1]} : vector<32x256xf32> to vector<32x128xf32>
    %7 = vector.extract_strided_slice %5 {offsets = [0, 128], sizes = [32, 128], strides = [1, 1]} : vector<32x256xf32> to vector<32x128xf32>
    %8 = vector.shape_cast %7 : vector<32x128xf32> to vector<32x1x128xf32>
    %9 = vector.shape_cast %6 : vector<32x128xf32> to vector<1x32x128xf32>
    %10 = vector.broadcast %8 : vector<32x1x128xf32> to vector<32x32x128xf32>
    %11 = vector.broadcast %9 : vector<1x32x128xf32> to vector<32x32x128xf32>
    %12 = arith.addf %10, %11 : vector<32x32x128xf32>
    %cst_5 = arith.constant 2.000000e-01 : f32
    %13 = vector.broadcast %cst_5 : f32 to vector<32x32x128xf32>
    %14 = arith.mulf %13, %12 : vector<32x32x128xf32>
    %15 = arith.maximumf %12, %14 : vector<32x32x128xf32>
    %16 = vector.shape_cast %15 : vector<32x32x128xf32> to vector<1024x128xf32>
    %c0_6 = arith.constant 0 : index
    %c0_7 = arith.constant 0 : index
    %17 = vector.load %arg6[%c0_6, %c0_7] : memref<128x128xf32, #tpu.memory_space<vmem>>, vector<128x128xf32>
    %cst_8 = arith.constant dense<0.000000e+00> : vector<1024x128xf32>
    %18 = tpu.matmul %16, %17, %cst_8 {dimension_numbers = #tpu.dot_dimension_numbers<[1], [0], [0], [1], [0, 0, 1, 1], [], []>} : vector<1024x128xf32>, vector<128x128xf32>, vector<1024x128xf32> -> vector<1024x128xf32>
    %19 = vector.shape_cast %18 : vector<1024x128xf32> to vector<32x32x128xf32>
    %c0_9 = arith.constant 0 : index
    %c0_10 = arith.constant 0 : index
    %c0_11 = arith.constant 0 : index
    %20 = vector.load %arg3[%c0_9, %c0_10, %c0_11] : memref<32x32x1xf32, #tpu.memory_space<vmem>>, vector<32x32x1xf32>
    %21 = vector.broadcast %20 : vector<32x32x1xf32> to vector<32x32x128xf32>
    %22 = arith.addf %19, %21 : vector<32x32x128xf32>
    %cst_12 = arith.constant dense<0xFF800000> : vector<32x128xf32>
    %23 = vector.multi_reduction <maximumf>, %22, %cst_12 [1] : vector<32x32x128xf32> to vector<32x128xf32>
    %24 = vector.shape_cast %23 : vector<32x128xf32> to vector<32x1x128xf32>
    %25 = vector.broadcast %24 : vector<32x1x128xf32> to vector<32x32x128xf32>
    %26 = arith.subf %22, %25 : vector<32x32x128xf32>
    %27 = math.exp %26 : vector<32x32x128xf32>
    %cst_13 = arith.constant dense<0.000000e+00> : vector<32x128xf32>
    %28 = vector.multi_reduction <add>, %27, %cst_13 [1] : vector<32x32x128xf32> to vector<32x128xf32>
    %29 = vector.shape_cast %6 : vector<32x128xf32> to vector<1x32x128xf32>
    %30 = vector.broadcast %29 : vector<1x32x128xf32> to vector<32x32x128xf32>
    %31 = arith.mulf %27, %30 : vector<32x32x128xf32>
    %cst_14 = arith.constant dense<0.000000e+00> : vector<32x128xf32>
    %32 = vector.multi_reduction <add>, %31, %cst_14 [1] : vector<32x32x128xf32> to vector<32x128xf32>
    %cst_15 = arith.constant 1.000000e-30 : f32
    %33 = vector.broadcast %cst_15 : f32 to vector<32x128xf32>
    %34 = arith.maximumf %28, %33 : vector<32x128xf32>
    %35 = arith.divf %32, %34 : vector<32x128xf32>
    %c0_16 = arith.constant 0 : index
    %c0_17 = arith.constant 0 : index
    %36 = vector.load %arg7[%c0_16, %c0_17] : memref<1x128xf32, #tpu.memory_space<vmem>>, vector<1x128xf32>
    %37 = vector.broadcast %36 : vector<1x128xf32> to vector<32x128xf32>
    %38 = arith.addf %35, %37 : vector<32x128xf32>
    %cst_18 = arith.constant 0.000000e+00 : f32
    %39 = vector.broadcast %cst_18 : f32 to vector<32x128xf32>
    %40 = arith.cmpf ogt, %38, %39 : vector<32x128xf32>
    %cst_19 = arith.constant 0.000000e+00 : f32
    %41 = vector.broadcast %cst_19 : f32 to vector<32x128xf32>
    %42 = arith.minimumf %38, %41 : vector<32x128xf32>
    %43 = math.exp %42 : vector<32x128xf32>
    %cst_20 = arith.constant 1.000000e+00 : f32
    %44 = vector.broadcast %cst_20 : f32 to vector<32x128xf32>
    %45 = arith.subf %43, %44 : vector<32x128xf32>
    %46 = arith.select %40, %38, %45 : vector<32x128xi1>, vector<32x128xf32>
    %c0_21 = arith.constant 0 : index
    %c0_22 = arith.constant 0 : index
    %47 = vector.load %arg8[%c0_21, %c0_22] : memref<128x4xf32, #tpu.memory_space<vmem>>, vector<128x4xf32>
    %cst_23 = arith.constant dense<0.000000e+00> : vector<32x4xf32>
    %48 = tpu.matmul %46, %47, %cst_23 {dimension_numbers = #tpu.dot_dimension_numbers<[1], [0], [0], [1], [0, 0, 1, 1], [], []>} : vector<32x128xf32>, vector<128x4xf32>, vector<32x4xf32> -> vector<32x4xf32>
    %c0_24 = arith.constant 0 : index
    %c0_25 = arith.constant 0 : index
    %49 = vector.load %arg9[%c0_24, %c0_25] : memref<1x4xf32, #tpu.memory_space<vmem>>, vector<1x4xf32>
    %50 = vector.broadcast %49 : vector<1x4xf32> to vector<32x4xf32>
    %51 = arith.addf %48, %50 : vector<32x4xf32>
    %c0_26 = arith.constant 0 : index
    %c0_27 = arith.constant 0 : index
    %52 = vector.load %arg10[%c0_26, %c0_27] : memref<128x4xf32, #tpu.memory_space<vmem>>, vector<128x4xf32>
    %cst_28 = arith.constant dense<0.000000e+00> : vector<32x4xf32>
    %53 = tpu.matmul %46, %52, %cst_28 {dimension_numbers = #tpu.dot_dimension_numbers<[1], [0], [0], [1], [0, 0, 1, 1], [], []>} : vector<32x128xf32>, vector<128x4xf32>, vector<32x4xf32> -> vector<32x4xf32>
    %c0_29 = arith.constant 0 : index
    %c0_30 = arith.constant 0 : index
    %54 = vector.load %arg11[%c0_29, %c0_30] : memref<1x4xf32, #tpu.memory_space<vmem>>, vector<1x4xf32>
    %55 = vector.broadcast %54 : vector<1x4xf32> to vector<32x4xf32>
    %56 = arith.addf %53, %55 : vector<32x4xf32>
    %57 = tpu.transpose %51, [1, 0] : vector<32x4xf32> -> vector<4x32xf32>
    %c0_31 = arith.constant 0 : index
    %c0_32 = arith.constant 0 : index
    %58 = vector.load %arg12[%c0_31, %c0_32] : memref<1x4xf32, #tpu.memory_space<vmem>>, vector<1x4xf32>
    %c0_33 = arith.constant 0 : index
    %c0_34 = arith.constant 0 : index
    %59 = vector.load %arg2[%c0_33, %c0_34] : memref<32x32xf32, #tpu.memory_space<vmem>>, vector<32x32xf32>
    %60 = vector.extract_strided_slice %56 {offsets = [0, 0], sizes = [32, 1], strides = [1, 1]} : vector<32x4xf32> to vector<32x1xf32>
    %61 = vector.extract_strided_slice %57 {offsets = [0, 0], sizes = [1, 32], strides = [1, 1]} : vector<4x32xf32> to vector<1x32xf32>
    %62 = vector.broadcast %60 : vector<32x1xf32> to vector<32x32xf32>
    %63 = vector.broadcast %61 : vector<1x32xf32> to vector<32x32xf32>
    %64 = arith.addf %62, %63 : vector<32x32xf32>
    %cst_35 = arith.constant 2.000000e-01 : f32
    %65 = vector.broadcast %cst_35 : f32 to vector<32x32xf32>
    %66 = arith.mulf %65, %64 : vector<32x32xf32>
    %67 = arith.maximumf %64, %66 : vector<32x32xf32>
    %68 = vector.extract_strided_slice %58 {offsets = [0, 0], sizes = [1, 1], strides = [1, 1]} : vector<1x4xf32> to vector<1x1xf32>
    %69 = vector.broadcast %68 : vector<1x1xf32> to vector<32x32xf32>
    %70 = arith.mulf %69, %67 : vector<32x32xf32>
    %71 = arith.addf %59, %70 : vector<32x32xf32>
    %72 = vector.extract_strided_slice %56 {offsets = [0, 1], sizes = [32, 1], strides = [1, 1]} : vector<32x4xf32> to vector<32x1xf32>
    %73 = vector.extract_strided_slice %57 {offsets = [1, 0], sizes = [1, 32], strides = [1, 1]} : vector<4x32xf32> to vector<1x32xf32>
    %74 = vector.broadcast %72 : vector<32x1xf32> to vector<32x32xf32>
    %75 = vector.broadcast %73 : vector<1x32xf32> to vector<32x32xf32>
    %76 = arith.addf %74, %75 : vector<32x32xf32>
    %cst_36 = arith.constant 2.000000e-01 : f32
    %77 = vector.broadcast %cst_36 : f32 to vector<32x32xf32>
    %78 = arith.mulf %77, %76 : vector<32x32xf32>
    %79 = arith.maximumf %76, %78 : vector<32x32xf32>
    %80 = vector.extract_strided_slice %58 {offsets = [0, 1], sizes = [1, 1], strides = [1, 1]} : vector<1x4xf32> to vector<1x1xf32>
    %81 = vector.broadcast %80 : vector<1x1xf32> to vector<32x32xf32>
    %82 = arith.mulf %81, %79 : vector<32x32xf32>
    %83 = arith.addf %71, %82 : vector<32x32xf32>
    %84 = vector.extract_strided_slice %56 {offsets = [0, 2], sizes = [32, 1], strides = [1, 1]} : vector<32x4xf32> to vector<32x1xf32>
    %85 = vector.extract_strided_slice %57 {offsets = [2, 0], sizes = [1, 32], strides = [1, 1]} : vector<4x32xf32> to vector<1x32xf32>
    %86 = vector.broadcast %84 : vector<32x1xf32> to vector<32x32xf32>
    %87 = vector.broadcast %85 : vector<1x32xf32> to vector<32x32xf32>
    %88 = arith.addf %86, %87 : vector<32x32xf32>
    %cst_37 = arith.constant 2.000000e-01 : f32
    %89 = vector.broadcast %cst_37 : f32 to vector<32x32xf32>
    %90 = arith.mulf %89, %88 : vector<32x32xf32>
    %91 = arith.maximumf %88, %90 : vector<32x32xf32>
    %92 = vector.extract_strided_slice %58 {offsets = [0, 2], sizes = [1, 1], strides = [1, 1]} : vector<1x4xf32> to vector<1x1xf32>
    %93 = vector.broadcast %92 : vector<1x1xf32> to vector<32x32xf32>
    %94 = arith.mulf %93, %91 : vector<32x32xf32>
    %95 = arith.addf %83, %94 : vector<32x32xf32>
    %96 = vector.extract_strided_slice %56 {offsets = [0, 3], sizes = [32, 1], strides = [1, 1]} : vector<32x4xf32> to vector<32x1xf32>
    %97 = vector.extract_strided_slice %57 {offsets = [3, 0], sizes = [1, 32], strides = [1, 1]} : vector<4x32xf32> to vector<1x32xf32>
    %98 = vector.broadcast %96 : vector<32x1xf32> to vector<32x32xf32>
    %99 = vector.broadcast %97 : vector<1x32xf32> to vector<32x32xf32>
    %100 = arith.addf %98, %99 : vector<32x32xf32>
    %cst_38 = arith.constant 2.000000e-01 : f32
    %101 = vector.broadcast %cst_38 : f32 to vector<32x32xf32>
    %102 = arith.mulf %101, %100 : vector<32x32xf32>
    %103 = arith.maximumf %100, %102 : vector<32x32xf32>
    %104 = vector.extract_strided_slice %58 {offsets = [0, 3], sizes = [1, 1], strides = [1, 1]} : vector<1x4xf32> to vector<1x1xf32>
    %105 = vector.broadcast %104 : vector<1x1xf32> to vector<32x32xf32>
    %106 = arith.mulf %105, %103 : vector<32x32xf32>
    %107 = arith.addf %95, %106 : vector<32x32xf32>
    %cst_39 = arith.constant dense<0xFF800000> : vector<32xf32>
    %108 = vector.multi_reduction <maximumf>, %107, %cst_39 [1] : vector<32x32xf32> to vector<32xf32>
    %109 = vector.shape_cast %108 : vector<32xf32> to vector<32x1xf32>
    %110 = vector.broadcast %109 : vector<32x1xf32> to vector<32x32xf32>
    %111 = arith.subf %107, %110 : vector<32x32xf32>
    %112 = math.exp %111 : vector<32x32xf32>
    %cst_40 = arith.constant dense<0.000000e+00> : vector<32xf32>
    %113 = vector.multi_reduction <add>, %112, %cst_40 [1] : vector<32x32xf32> to vector<32xf32>
    %114 = vector.shape_cast %113 : vector<32xf32> to vector<32x1xf32>
    %cst_41 = arith.constant dense<0.000000e+00> : vector<32x4xf32>
    %115 = tpu.matmul %112, %51, %cst_41 {dimension_numbers = #tpu.dot_dimension_numbers<[1], [0], [0], [1], [0, 0, 1, 1], [], []>} : vector<32x32xf32>, vector<32x4xf32>, vector<32x4xf32> -> vector<32x4xf32>
    %cst_42 = arith.constant 1.000000e-30 : f32
    %116 = vector.broadcast %cst_42 : f32 to vector<32x1xf32>
    %117 = arith.maximumf %114, %116 : vector<32x1xf32>
    %118 = vector.broadcast %117 : vector<32x1xf32> to vector<32x4xf32>
    %119 = arith.divf %115, %118 : vector<32x4xf32>
    %c0_43 = arith.constant 0 : index
    %c0_44 = arith.constant 0 : index
    %120 = vector.load %arg13[%c0_43, %c0_44] : memref<1x4xf32, #tpu.memory_space<vmem>>, vector<1x4xf32>
    %121 = vector.broadcast %120 : vector<1x4xf32> to vector<32x4xf32>
    %122 = arith.addf %119, %121 : vector<32x4xf32>
    %cst_45 = arith.constant dense<0xFF800000> : vector<32xf32>
    %123 = vector.multi_reduction <maximumf>, %122, %cst_45 [1] : vector<32x4xf32> to vector<32xf32>
    %124 = vector.shape_cast %123 : vector<32xf32> to vector<32x1xf32>
    %125 = vector.broadcast %124 : vector<32x1xf32> to vector<32x4xf32>
    %126 = arith.subf %122, %125 : vector<32x4xf32>
    %127 = math.exp %126 : vector<32x4xf32>
    %cst_46 = arith.constant dense<0.000000e+00> : vector<32xf32>
    %128 = vector.multi_reduction <add>, %127, %cst_46 [1] : vector<32x4xf32> to vector<32xf32>
    %129 = vector.shape_cast %128 : vector<32xf32> to vector<32x1xf32>
    %130 = math.log %129 : vector<32x1xf32>
    %131 = arith.addf %130, %124 : vector<32x1xf32>
    %132 = vector.broadcast %131 : vector<32x1xf32> to vector<32x4xf32>
    %133 = arith.subf %122, %132 : vector<32x4xf32>
    %c0_47 = arith.constant 0 : index
    %c0_48 = arith.constant 0 : index
    %134 = vector.load %arg14[%c0_47, %c0_48] : memref<32x4xf32, #tpu.memory_space<vmem>>, vector<32x4xf32>
    tpu.vector_store %arg14[%c0_47, %c0_48], %133 {strides = array<i32>} : memref<32x4xf32, #tpu.memory_space<vmem>>, vector<32x4xf32>,
    return
  }
  func.func @transform_0(%arg0: i32) -> (i32, i32) {
    %c0_i32 = arith.constant 0 : i32
    %c0_i32_0 = arith.constant 0 : i32
    %c0_i32_1 = arith.constant 0 : i32
    return %c0_i32, %c0_i32_0 : i32, i32
  }
  func.func @transform_1(%arg0: i32) -> (i32, i32) {
    %c0_i32 = arith.constant 0 : i32
    %c0_i32_0 = arith.constant 0 : i32
    %c0_i32_1 = arith.constant 0 : i32
    return %c0_i32, %c0_i32_0 : i32, i32
  }
  func.func @transform_2(%arg0: i32) -> (i32, i32, i32) {
    %c0_i32 = arith.constant 0 : i32
    %c0_i32_0 = arith.constant 0 : i32
    %c0_i32_1 = arith.constant 0 : i32
    %c0_i32_2 = arith.constant 0 : i32
    return %c0_i32, %c0_i32_0, %c0_i32_1 : i32, i32, i32
  }
  func.func @transform_3(%arg0: i32) -> (i32, i32) {
    %c0_i32 = arith.constant 0 : i32
    %c0_i32_0 = arith.constant 0 : i32
    %c0_i32_1 = arith.constant 0 : i32
    return %c0_i32, %c0_i32_0 : i32, i32
  }
  func.func @transform_4(%arg0: i32) -> (i32, i32) {
    %c0_i32 = arith.constant 0 : i32
    %c0_i32_0 = arith.constant 0 : i32
    %c0_i32_1 = arith.constant 0 : i32
    return %c0_i32, %c0_i32_0 : i32, i32
  }
  func.func @transform_5(%arg0: i32) -> (i32, i32) {
    %c0_i32 = arith.constant 0 : i32
    %c0_i32_0 = arith.constant 0 : i32
    %c0_i32_1 = arith.constant 0 : i32
    return %c0_i32, %c0_i32_0 : i32, i32
  }
  func.func @transform_6(%arg0: i32) -> (i32, i32) {
    %c0_i32 = arith.constant 0 : i32
    %c0_i32_0 = arith.constant 0 : i32
    %c0_i32_1 = arith.constant 0 : i32
    return %c0_i32, %c0_i32_0 : i32, i32
  }
  func.func @transform_7(%arg0: i32) -> (i32, i32) {
    %c0_i32 = arith.constant 0 : i32
    %c0_i32_0 = arith.constant 0 : i32
    %c0_i32_1 = arith.constant 0 : i32
    return %c0_i32, %c0_i32_0 : i32, i32
  }
  func.func @transform_8(%arg0: i32) -> (i32, i32) {
    %c0_i32 = arith.constant 0 : i32
    %c0_i32_0 = arith.constant 0 : i32
    %c0_i32_1 = arith.constant 0 : i32
    return %c0_i32, %c0_i32_0 : i32, i32
  }
  func.func @transform_9(%arg0: i32) -> (i32, i32) {
    %c0_i32 = arith.constant 0 : i32
    %c0_i32_0 = arith.constant 0 : i32
    %c0_i32_1 = arith.constant 0 : i32
    return %c0_i32, %c0_i32_0 : i32, i32
  }
  func.func @transform_10(%arg0: i32) -> (i32, i32) {
    %c0_i32 = arith.constant 0 : i32
    %c0_i32_0 = arith.constant 0 : i32
    %c0_i32_1 = arith.constant 0 : i32
    return %c0_i32, %c0_i32_0 : i32, i32
  }
  func.func @transform_11(%arg0: i32) -> (i32, i32) {
    %c0_i32 = arith.constant 0 : i32
    %c0_i32_0 = arith.constant 0 : i32
    %c0_i32_1 = arith.constant 0 : i32
    return %c0_i32, %c0_i32_0 : i32, i32
  }
  func.func @transform_12(%arg0: i32) -> (i32, i32) {
    %c0_i32 = arith.constant 0 : i32
    %c0_i32_0 = arith.constant 0 : i32
    %c0_i32_1 = arith.constant 0 : i32
    return %c0_i32, %c0_i32_0 : i32, i32
  }
  func.func @transform_13(%arg0: i32) -> (i32, i32) {
    %c0_i32 = arith.constant 0 : i32
    %c0_i32_0 = arith.constant 0 : i32
    %c0_i32_1 = arith.constant 0 : i32
    return %c0_i32, %c0_i32_0 : i32, i32
  }
}

</mosaic_0001>

<llo_original>
// kernel: tpu_custom_call.1
$region0: #{tpu_custom_call.1}
  #allocation0 [shape = 'u32[]', space=smem, size = 0x4, offset = 0x4, fixed_abs, tag = 'smem constant byte address 0x4 - core index']
  #allocation1 [shape = 'u32[72,128]{1,0:T(1,128)}', space=vmem, size = 0x9000, scoped, tag = 'internal scratch']
  %s0 = inlined_call_operand.vmem [shape: f32[32,8], index: 0, kind: input, shape index: {}]
  %s1 = inlined_call_operand.vmem [shape: f32[32,32], index: 1, kind: input, shape index: {}]
  %s2 = inlined_call_operand.vmem [shape: f32[32,32,1], index: 2, kind: input, shape index: {}]
  %s3 = inlined_call_operand.vmem [shape: f32[8,256], index: 3, kind: input, shape index: {}]
  %s4 = inlined_call_operand.vmem [shape: f32[1,256], index: 4, kind: input, shape index: {}]
  %s5 = inlined_call_operand.vmem [shape: f32[128,128], index: 5, kind: input, shape index: {}]
  %s6 = inlined_call_operand.vmem [shape: f32[1,128], index: 6, kind: input, shape index: {}]
  %s7 = inlined_call_operand.vmem [shape: f32[128,4], index: 7, kind: input, shape index: {}]
  %s8 = inlined_call_operand.vmem [shape: f32[1,4], index: 8, kind: input, shape index: {}]
  %s9 = inlined_call_operand.vmem [shape: f32[128,4], index: 9, kind: input, shape index: {}]
  %s10 = inlined_call_operand.vmem [shape: f32[1,4], index: 10, kind: input, shape index: {}]
  %s11 = inlined_call_operand.vmem [shape: f32[1,4], index: 11, kind: input, shape index: {}]
  %s12 = inlined_call_operand.vmem [shape: f32[1,4], index: 12, kind: input, shape index: {}]
  %s13 = inlined_call_operand.vmem [shape: f32[32,4], index: 13, kind: output, shape index: {}]
  %s14 = sld [smem:[#allocation0]]
  $region62: #{tpu_custom_call.1} parent=0
    _
  %s16 = ssub.s32 1, %s14
  %s17 = scalar_select 0, %s16, %s14
  // Predicated region
  $region2: #{tpu_custom_call.1} parent=0 // pred_check
    _
  $region3: #{tpu_custom_call.1} parent=0 // pred_check_branch
    %19 = sbr.rel (0) target = $region5
  $region4: #{tpu_custom_call.1} parent=0 // pred_region
    _
  $region5: #{tpu_custom_call.1} parent=0 // pred_fallthru
    _
  // Predicated region
  $region6: #{tpu_custom_call.1} parent=0 // pred_check
    _
  $region7: #{tpu_custom_call.1} parent=0 // pred_check_branch
    %21 = sbr.rel (0) target = $region9
  $region8: #{tpu_custom_call.1} parent=0 // pred_region
    _
  $region9: #{tpu_custom_call.1} parent=0 // pred_fallthru
    _
  // Predicated region
  $region10: #{tpu_custom_call.1} parent=0 // pred_check
    _
  $region11: #{tpu_custom_call.1} parent=0 // pred_check_branch
    %23 = sbr.rel (0) target = $region13
  $region12: #{tpu_custom_call.1} parent=0 // pred_region
    _
  $region13: #{tpu_custom_call.1} parent=0 // pred_fallthru
    _
  // Predicated region
  $region14: #{tpu_custom_call.1} parent=0 // pred_check
    _
  $region15: #{tpu_custom_call.1} parent=0 // pred_check_branch
    %25 = sbr.rel (0) target = $region17
  $region16: #{tpu_custom_call.1} parent=0 // pred_region
    _
  $region17: #{tpu_custom_call.1} parent=0 // pred_fallthru
    _
  // Predicated region
  $region18: #{tpu_custom_call.1} parent=0 // pred_check
    _
  $region19: #{tpu_custom_call.1} parent=0 // pred_check_branch
    %27 = sbr.rel (0) target = $region21
  $region20: #{tpu_custom_call.1} parent=0 // pred_region
    _
  $region21: #{tpu_custom_call.1} parent=0 // pred_fallthru
    _
  // Predicated region
  $region22: #{tpu_custom_call.1} parent=0 // pred_check
    _
  $region23: #{tpu_custom_call.1} parent=0 // pred_check_branch
    %29 = sbr.rel (0) target = $region25
  $region24: #{tpu_custom_call.1} parent=0 // pred_region
    _
  $region25: #{tpu_custom_call.1} parent=0 // pred_fallthru
    _
  // Predicated region
  $region26: #{tpu_custom_call.1} parent=0 // pred_check
    _
  $region27: #{tpu_custom_call.1} parent=0 // pred_check_branch
    %31 = sbr.rel (0) target = $region29
  $region28: #{tpu_custom_call.1} parent=0 // pred_region
    _
  $region29: #{tpu_custom_call.1} parent=0 // pred_fallthru
    _
  // Predicated region
  $region30: #{tpu_custom_call.1} parent=0 // pred_check
    _
  $region31: #{tpu_custom_call.1} parent=0 // pred_check_branch
    %33 = sbr.rel (0) target = $region33
  $region32: #{tpu_custom_call.1} parent=0 // pred_region
    _
  $region33: #{tpu_custom_call.1} parent=0 // pred_fallthru
    _
  // Predicated region
  $region34: #{tpu_custom_call.1} parent=0 // pred_check
    _
  $region35: #{tpu_custom_call.1} parent=0 // pred_check_branch
    %35 = sbr.rel (0) target = $region37
  $region36: #{tpu_custom_call.1} parent=0 // pred_region
    _
  $region37: #{tpu_custom_call.1} parent=0 // pred_fallthru
    _
  // Predicated region
  $region38: #{tpu_custom_call.1} parent=0 // pred_check
    _
  $region39: #{tpu_custom_call.1} parent=0 // pred_check_branch
    %37 = sbr.rel (0) target = $region41
  $region40: #{tpu_custom_call.1} parent=0 // pred_region
    _
  $region41: #{tpu_custom_call.1} parent=0 // pred_fallthru
    _
  // Predicated region
  $region42: #{tpu_custom_call.1} parent=0 // pred_check
    _
  $region43: #{tpu_custom_call.1} parent=0 // pred_check_branch
    %39 = sbr.rel (0) target = $region45
  $region44: #{tpu_custom_call.1} parent=0 // pred_region
    _
  $region45: #{tpu_custom_call.1} parent=0 // pred_fallthru
    _
  // Predicated region
  $region46: #{tpu_custom_call.1} parent=0 // pred_check
    _
  $region47: #{tpu_custom_call.1} parent=0 // pred_check_branch
    %41 = sbr.rel (0) target = $region49
  $region48: #{tpu_custom_call.1} parent=0 // pred_region
    _
  $region49: #{tpu_custom_call.1} parent=0 // pred_fallthru
    _
  // Predicated region
  $region50: #{tpu_custom_call.1} parent=0 // pred_check
    _
  $region51: #{tpu_custom_call.1} parent=0 // pred_check_branch
    %43 = sbr.rel (0) target = $region53
  $region52: #{tpu_custom_call.1} parent=0 // pred_region
    _
  $region53: #{tpu_custom_call.1} parent=0 // pred_fallthru
    _
  %v44 = vld [vmem:[%s0] sm:$0xff]
  %v45 = vld [vmem:[%s0 + $0x8] sm:$0xff]
  %v46 = vld [vmem:[%s0 + $0x10] sm:$0xff]
  %v47 = vld [vmem:[%s0 + $0x18] sm:$0xff]
  %v48 = vld [vmem:[%s3] sm:$0xff]
  %v49 = vld [vmem:[%s3 + $0x8] sm:$0xff]
  %v50 = vld [vmem:[%s4] sm:$0x3]
  %v52 = vperm.slane %v50, 0
  %v53 = vperm.slane %v50, 1
  %vm56 = vcmask 64512
  %v58 = vsel %vm56, %v44, 0
  %v61 = vsel %vm56, %v45, 0
  %v64 = vsel %vm56, %v46, 0
  %v67 = vsel %vm56, %v47, 0
  %69 = vmatpush.msra.mxu0 0.0
  %70 = vmatpush.msra.mxu0 0.0
  %71 = vmatpush.msra.mxu0 0.0
  %72 = vmatpush.msra.mxu0 0.0
  %73 = vmatpush.msra.mxu0 0.0
  %74 = vmatpush.msra.mxu0 0.0
  %75 = vmatpush.msra.mxu0 0.0
  %76 = vmatpush.msra.mxu0 0.0
  %77 = vmatpush.msra.mxu0 0.0
  %78 = vmatpush.msra.mxu0 0.0
  %79 = vmatpush.msra.mxu0 0.0
  %80 = vmatpush.msra.mxu0 0.0
  %81 = vmatpush.msra.mxu0 0.0
  %82 = vmatpush.msra.mxu0 0.0
  %83 = vmatpush.msra.mxu0 0.0
  %84 = vmatpush.msra.mxu0 %v48
  %85 = vmatmul.f32.gmra.mxu0 %v58
  %v86 = vpop.f32.mrf.mxu0
  %v87 = vadd.f32 %v52, %v86
  %88 = vmatmul.f32.gmra.mxu0 %v61
  %v89 = vpop.f32.mrf.mxu0
  %v90 = vadd.f32 %v52, %v89
  %91 = vmatmul.f32.gmra.mxu0 %v64
  %v92 = vpop.f32.mrf.mxu0
  %v93 = vadd.f32 %v52, %v92
  %94 = vmatmul.f32.gmra.mxu0 %v67
  %v95 = vpop.f32.mrf.mxu0
  %v96 = vadd.f32 %v52, %v95
  %97 = vdwg.mxu0
  %98 = vmatpush.msra.mxu0 0.0
  %99 = vmatpush.msra.mxu0 0.0
  %100 = vmatpush.msra.mxu0 0.0
  %101 = vmatpush.msra.mxu0 0.0
  %102 = vmatpush.msra.mxu0 0.0
  %103 = vmatpush.msra.mxu0 0.0
  %104 = vmatpush.msra.mxu0 0.0
  %105 = vmatpush.msra.mxu0 0.0
  %106 = vmatpush.msra.mxu0 0.0
  %107 = vmatpush.msra.mxu0 0.0
  %108 = vmatpush.msra.mxu0 0.0
  %109 = vmatpush.msra.mxu0 0.0
  %110 = vmatpush.msra.mxu0 0.0
  %111 = vmatpush.msra.mxu0 0.0
  %112 = vmatpush.msra.mxu0 0.0
  %113 = vmatpush.msra.mxu0 %v49
  %114 = vmatmul.f32.gmra.mxu0 %v58
  %v115 = vpop.f32.mrf.mxu0
  %v116 = vadd.f32 %v53, %v115
  %117 = vmatmul.f32.gmra.mxu0 %v61
  %v118 = vpop.f32.mrf.mxu0
  %v119 = vadd.f32 %v53, %v118
  %120 = vmatmul.f32.gmra.mxu0 %v64
  %v121 = vpop.f32.mrf.mxu0
  %v122 = vadd.f32 %v53, %v121
  %123 = vmatmul.f32.gmra.mxu0 %v67
  %v124 = vpop.f32.mrf.mxu0
  %v125 = vadd.f32 %v53, %v124
  %126 = vdwg.mxu0
  %v131 = vrot.slane %v116, 1
  %v132 = vrot.slane %v116, 2
  %v133 = vrot.slane %v116, 3
  %v134 = vrot.slane %v116, 4
  %v135 = vrot.slane %v116, 5
  %v136 = vrot.slane %v116, 6
  %v137 = vrot.slane %v116, 7
  %v138 = vrot.slane %v119, 1
  %v139 = vrot.slane %v119, 2
  %v140 = vrot.slane %v119, 3
  %v141 = vrot.slane %v119, 4
  %v142 = vrot.slane %v119, 5
  %v143 = vrot.slane %v119, 6
  %v144 = vrot.slane %v119, 7
  %v145 = vrot.slane %v122, 1
  %v146 = vrot.slane %v122, 2
  %v147 = vrot.slane %v122, 3
  %v148 = vrot.slane %v122, 4
  %v149 = vrot.slane %v122, 5
  %v150 = vrot.slane %v122, 6
  %v151 = vrot.slane %v122, 7
  %v152 = vrot.slane %v125, 1
  %v153 = vrot.slane %v125, 2
  %v154 = vrot.slane %v125, 3
  %v155 = vrot.slane %v125, 4
  %v156 = vrot.slane %v125, 5
  %v157 = vrot.slane %v125, 6
  %v158 = vrot.slane %v125, 7
  %v159 = vperm.slane %v116, 0
  %v160 = vperm.slane %v131, 0
  %v161 = vperm.slane %v132, 0
  %v162 = vperm.slane %v133, 0
  %v163 = vperm.slane %v134, 0
  %v164 = vperm.slane %v135, 0
  %v165 = vperm.slane %v136, 0
  %v166 = vperm.slane %v137, 0
  %v167 = vperm.slane %v119, 0
  %v168 = vperm.slane %v138, 0
  %v169 = vperm.slane %v139, 0
  %v170 = vperm.slane %v140, 0
  %v171 = vperm.slane %v141, 0
  %v172 = vperm.slane %v142, 0
  %v173 = vperm.slane %v143, 0
  %v174 = vperm.slane %v144, 0
  %v175 = vperm.slane %v122, 0
  %v176 = vperm.slane %v145, 0
  %v177 = vperm.slane %v146, 0
  %v178 = vperm.slane %v147, 0
  %v179 = vperm.slane %v148, 0
  %v180 = vperm.slane %v149, 0
  %v181 = vperm.slane %v150, 0
  %v182 = vperm.slane %v151, 0
  %v183 = vperm.slane %v125, 0
  %v184 = vperm.slane %v152, 0
  %v185 = vperm.slane %v153, 0
  %v186 = vperm.slane %v154, 0
  %v187 = vperm.slane %v155, 0
  %v188 = vperm.slane %v156, 0
  %v189 = vperm.slane %v157, 0
  %v190 = vperm.slane %v158, 0
  %v223 = vadd.f32 %v159, %v87
  %v224 = vadd.f32 %v159, %v90
  %v225 = vadd.f32 %v159, %v93
  %v226 = vadd.f32 %v159, %v96
  %v227 = vadd.f32 %v160, %v87
  %v228 = vadd.f32 %v160, %v90
  %v229 = vadd.f32 %v160, %v93
  %v230 = vadd.f32 %v160, %v96
  %v231 = vadd.f32 %v161, %v87
  %v232 = vadd.f32 %v161, %v90
  %v233 = vadd.f32 %v161, %v93
  %v234 = vadd.f32 %v161, %v96
  %v235 = vadd.f32 %v162, %v87
  %v236 = vadd.f32 %v162, %v90
  %v237 = vadd.f32 %v162, %v93
  %v238 = vadd.f32 %v162, %v96
  %v239 = vadd.f32 %v163, %v87
  %v240 = vadd.f32 %v163, %v90
  %v241 = vadd.f32 %v163, %v93
  %v242 = vadd.f32 %v163, %v96
  %v243 = vadd.f32 %v164, %v87
  %v244 = vadd.f32 %v164, %v90
  %v245 = vadd.f32 %v164, %v93
  %v246 = vadd.f32 %v164, %v96
  %v247 = vadd.f32 %v165, %v87
  %v248 = vadd.f32 %v165, %v90
  %v249 = vadd.f32 %v165, %v93
  %v250 = vadd.f32 %v165, %v96
  %v251 = vadd.f32 %v166, %v87
  %v252 = vadd.f32 %v166, %v90
  %v253 = vadd.f32 %v166, %v93
  %v254 = vadd.f32 %v166, %v96
  %v255 = vadd.f32 %v167, %v87
  %v256 = vadd.f32 %v167, %v90
  %v257 = vadd.f32 %v167, %v93
  %v258 = vadd.f32 %v167, %v96
  %v259 = vadd.f32 %v168, %v87
  %v260 = vadd.f32 %v168, %v90
  %v261 = vadd.f32 %v168, %v93
  %v262 = vadd.f32 %v168, %v96
  %v263 = vadd.f32 %v169, %v87
  %v264 = vadd.f32 %v169, %v90
  %v265 = vadd.f32 %v169, %v93
  %v266 = vadd.f32 %v169, %v96
  %v267 = vadd.f32 %v170, %v87
  %v268 = vadd.f32 %v170, %v90
  %v269 = vadd.f32 %v170, %v93
  %v270 = vadd.f32 %v170, %v96
  %v271 = vadd.f32 %v171, %v87
  %v272 = vadd.f32 %v171, %v90
  %v273 = vadd.f32 %v171, %v93
  %v274 = vadd.f32 %v171, %v96
  %v275 = vadd.f32 %v172, %v87
  %v276 = vadd.f32 %v172, %v90
  %v277 = vadd.f32 %v172, %v93
  %v278 = vadd.f32 %v172, %v96
  %v279 = vadd.f32 %v173, %v87
  %v280 = vadd.f32 %v173, %v90
  %v281 = vadd.f32 %v173, %v93
  %v282 = vadd.f32 %v173, %v96
  %v283 = vadd.f32 %v174, %v87
  %v284 = vadd.f32 %v174, %v90
  %v285 = vadd.f32 %v174, %v93
  %v286 = vadd.f32 %v174, %v96
  %v287 = vadd.f32 %v175, %v87
  %v288 = vadd.f32 %v175, %v90
  %v289 = vadd.f32 %v175, %v93
  %v290 = vadd.f32 %v175, %v96
  %v291 = vadd.f32 %v176, %v87
  %v292 = vadd.f32 %v176, %v90
  %v293 = vadd.f32 %v176, %v93
  %v294 = vadd.f32 %v176, %v96
  %v295 = vadd.f32 %v177, %v87
  %v296 = vadd.f32 %v177, %v90
  %v297 = vadd.f32 %v177, %v93
  %v298 = vadd.f32 %v177, %v96
  %v299 = vadd.f32 %v178, %v87
  %v300 = vadd.f32 %v178, %v90
  %v301 = vadd.f32 %v178, %v93
  %v302 = vadd.f32 %v178, %v96
  %v303 = vadd.f32 %v179, %v87
  %v304 = vadd.f32 %v179, %v90
  %v305 = vadd.f32 %v179, %v93
  %v306 = vadd.f32 %v179, %v96
  %v307 = vadd.f32 %v180, %v87
  %v308 = vadd.f32 %v180, %v90
  %v309 = vadd.f32 %v180, %v93
  %v310 = vadd.f32 %v180, %v96
  %v311 = vadd.f32 %v181, %v87
  %v312 = vadd.f32 %v181, %v90
  %v313 = vadd.f32 %v181, %v93
  %v314 = vadd.f32 %v181, %v96
  %v315 = vadd.f32 %v182, %v87
  %v316 = vadd.f32 %v182, %v90
  %v317 = vadd.f32 %v182, %v93
  %v318 = vadd.f32 %v182, %v96
  %v319 = vadd.f32 %v183, %v87
  %v320 = vadd.f32 %v183, %v90
  %v321 = vadd.f32 %v183, %v93
  %v322 = vadd.f32 %v183, %v96
  %v323 = vadd.f32 %v184, %v87
  %v324 = vadd.f32 %v184, %v90
  %v325 = vadd.f32 %v184, %v93
  %v326 = vadd.f32 %v184, %v96
  %v327 = vadd.f32 %v185, %v87
  %v328 = vadd.f32 %v185, %v90
  %v329 = vadd.f32 %v185, %v93
  %v330 = vadd.f32 %v185, %v96
  %v331 = vadd.f32 %v186, %v87
  %v332 = vadd.f32 %v186, %v90
  %v333 = vadd.f32 %v186, %v93
  %v334 = vadd.f32 %v186, %v96
  %v335 = vadd.f32 %v187, %v87
  %v336 = vadd.f32 %v187, %v90
  %v337 = vadd.f32 %v187, %v93
  %v338 = vadd.f32 %v187, %v96
  %v339 = vadd.f32 %v188, %v87
  %v340 = vadd.f32 %v188, %v90
  %v341 = vadd.f32 %v188, %v93
  %v342 = vadd.f32 %v188, %v96
  %v343 = vadd.f32 %v189, %v87
  %v344 = vadd.f32 %v189, %v90
  %v345 = vadd.f32 %v189, %v93
  %v346 = vadd.f32 %v189, %v96
  %v347 = vadd.f32 %v190, %v87
  %v348 = vadd.f32 %v190, %v90
  %v349 = vadd.f32 %v190, %v93
  %v350 = vadd.f32 %v190, %v96
  %v351 = vmul.f32 %v223, 0.2
  %v352 = vmul.f32 %v224, 0.2
  %v353 = vmul.f32 %v225, 0.2
  %v354 = vmul.f32 %v226, 0.2
  %v355 = vmul.f32 %v227, 0.2
  %v356 = vmul.f32 %v228, 0.2
  %v357 = vmul.f32 %v229, 0.2
  %v358 = vmul.f32 %v230, 0.2
  %v359 = vmul.f32 %v231, 0.2
  %v360 = vmul.f32 %v232, 0.2
  %v361 = vmul.f32 %v233, 0.2
  %v362 = vmul.f32 %v234, 0.2
  %v363 = vmul.f32 %v235, 0.2
  %v364 = vmul.f32 %v236, 0.2
  %v365 = vmul.f32 %v237, 0.2
  %v366 = vmul.f32 %v238, 0.2
  %v367 = vmul.f32 %v239, 0.2
  %v368 = vmul.f32 %v240, 0.2
  %v369 = vmul.f32 %v241, 0.2
  %v370 = vmul.f32 %v242, 0.2
  %v371 = vmul.f32 %v243, 0.2
  %v372 = vmul.f32 %v244, 0.2
  %v373 = vmul.f32 %v245, 0.2
  %v374 = vmul.f32 %v246, 0.2
  %v375 = vmul.f32 %v247, 0.2
  %v376 = vmul.f32 %v248, 0.2
  %v377 = vmul.f32 %v249, 0.2
  %v378 = vmul.f32 %v250, 0.2
  %v379 = vmul.f32 %v251, 0.2
  %v380 = vmul.f32 %v252, 0.2
  %v381 = vmul.f32 %v253, 0.2
  %v382 = vmul.f32 %v254, 0.2
  %v383 = vmul.f32 %v255, 0.2
  %v384 = vmul.f32 %v256, 0.2
  %v385 = vmul.f32 %v257, 0.2
  %v386 = vmul.f32 %v258, 0.2
  %v387 = vmul.f32 %v259, 0.2
  %v388 = vmul.f32 %v260, 0.2
  %v389 = vmul.f32 %v261, 0.2
  %v390 = vmul.f32 %v262, 0.2
  %v391 = vmul.f32 %v263, 0.2
  %v392 = vmul.f32 %v264, 0.2
  %v393 = vmul.f32 %v265, 0.2
  %v394 = vmul.f32 %v266, 0.2
  %v395 = vmul.f32 %v267, 0.2
  %v396 = vmul.f32 %v268, 0.2
  %v397 = vmul.f32 %v269, 0.2
  %v398 = vmul.f32 %v270, 0.2
  %v399 = vmul.f32 %v271, 0.2
  %v400 = vmul.f32 %v272, 0.2
  %v401 = vmul.f32 %v273, 0.2
  %v402 = vmul.f32 %v274, 0.2
  %v403 = vmul.f32 %v275, 0.2
  %v404 = vmul.f32 %v276, 0.2
  %v405 = vmul.f32 %v277, 0.2
  %v406 = vmul.f32 %v278, 0.2
  %v407 = vmul.f32 %v279, 0.2
  %v408 = vmul.f32 %v280, 0.2
  %v409 = vmul.f32 %v281, 0.2
  %v410 = vmul.f32 %v282, 0.2
  %v411 = vmul.f32 %v283, 0.2
  %v412 = vmul.f32 %v284, 0.2
  %v413 = vmul.f32 %v285, 0.2
  %v414 = vmul.f32 %v286, 0.2
  %v415 = vmul.f32 %v287, 0.2
  %v416 = vmul.f32 %v288, 0.2
  %v417 = vmul.f32 %v289, 0.2
  %v418 = vmul.f32 %v290, 0.2
  %v419 = vmul.f32 %v291, 0.2
  %v420 = vmul.f32 %v292, 0.2
  %v421 = vmul.f32 %v293, 0.2
  %v422 = vmul.f32 %v294, 0.2
  %v423 = vmul.f32 %v295, 0.2
  %v424 = vmul.f32 %v296, 0.2
  %v425 = vmul.f32 %v297, 0.2
  %v426 = vmul.f32 %v298, 0.2
  %v427 = vmul.f32 %v299, 0.2
  %v428 = vmul.f32 %v300, 0.2
  %v429 = vmul.f32 %v301, 0.2
  %v430 = vmul.f32 %v302, 0.2
  %v431 = vmul.f32 %v303, 0.2
  %v432 = vmul.f32 %v304, 0.2
  %v433 = vmul.f32 %v305, 0.2
  %v434 = vmul.f32 %v306, 0.2
  %v435 = vmul.f32 %v307, 0.2
  %v436 = vmul.f32 %v308, 0.2
  %v437 = vmul.f32 %v309, 0.2
  %v438 = vmul.f32 %v310, 0.2
  %v439 = vmul.f32 %v311, 0.2
  %v440 = vmul.f32 %v312, 0.2
  %v441 = vmul.f32 %v313, 0.2
  %v442 = vmul.f32 %v314, 0.2
  %v443 = vmul.f32 %v315, 0.2
  %v444 = vmul.f32 %v316, 0.2
  %v445 = vmul.f32 %v317, 0.2
  %v446 = vmul.f32 %v318, 0.2
  %v447 = vmul.f32 %v319, 0.2
  %v448 = vmul.f32 %v320, 0.2
  %v449 = vmul.f32 %v321, 0.2
  %v450 = vmul.f32 %v322, 0.2
  %v451 = vmul.f32 %v323, 0.2
  %v452 = vmul.f32 %v324, 0.2
  %v453 = vmul.f32 %v325, 0.2
  %v454 = vmul.f32 %v326, 0.2
  %v455 = vmul.f32 %v327, 0.2
  %v456 = vmul.f32 %v328, 0.2
  %v457 = vmul.f32 %v329, 0.2
  %v458 = vmul.f32 %v330, 0.2
  %v459 = vmul.f32 %v331, 0.2
  %v460 = vmul.f32 %v332, 0.2
  %v461 = vmul.f32 %v333, 0.2
  %v462 = vmul.f32 %v334, 0.2
  %v463 = vmul.f32 %v335, 0.2
  %v464 = vmul.f32 %v336, 0.2
  %v465 = vmul.f32 %v337, 0.2
  %v466 = vmul.f32 %v338, 0.2
  %v467 = vmul.f32 %v339, 0.2
  %v468 = vmul.f32 %v340, 0.2
  %v469 = vmul.f32 %v341, 0.2
  %v470 = vmul.f32 %v342, 0.2
  %v471 = vmul.f32 %v343, 0.2
  %v472 = vmul.f32 %v344, 0.2
  %v473 = vmul.f32 %v345, 0.2
  %v474 = vmul.f32 %v346, 0.2
  %v475 = vmul.f32 %v347, 0.2
  %v476 = vmul.f32 %v348, 0.2
  %v477 = vmul.f32 %v349, 0.2
  %v478 = vmul.f32 %v350, 0.2
  %v479 = vmax.f32 %v223, %v351
  %v480 = vmax.f32 %v224, %v352
  %v481 = vmax.f32 %v225, %v353
  %v482 = vmax.f32 %v226, %v354
  %v483 = vmax.f32 %v227, %v355
  %v484 = vmax.f32 %v228, %v356
  %v485 = vmax.f32 %v229, %v357
  %v486 = vmax.f32 %v230, %v358
  %v487 = vmax.f32 %v231, %v359
  %v488 = vmax.f32 %v232, %v360
  %v489 = vmax.f32 %v233, %v361
  %v490 = vmax.f32 %v234, %v362
  %v491 = vmax.f32 %v235, %v363
  %v492 = vmax.f32 %v236, %v364
  %v493 = vmax.f32 %v237, %v365
  %v494 = vmax.f32 %v238, %v366
  %v495 = vmax.f32 %v239, %v367
  %v496 = vmax.f32 %v240, %v368
  %v497 = vmax.f32 %v241, %v369
  %v498 = vmax.f32 %v242, %v370
  %v499 = vmax.f32 %v243, %v371
  %v500 = vmax.f32 %v244, %v372
  %v501 = vmax.f32 %v245, %v373
  %v502 = vmax.f32 %v246, %v374
  %v503 = vmax.f32 %v247, %v375
  %v504 = vmax.f32 %v248, %v376
  %v505 = vmax.f32 %v249, %v377
  %v506 = vmax.f32 %v250, %v378
  %v507 = vmax.f32 %v251, %v379
  %v508 = vmax.f32 %v252, %v380
  %v509 = vmax.f32 %v253, %v381
  %v510 = vmax.f32 %v254, %v382
  %v511 = vmax.f32 %v255, %v383
  %v512 = vmax.f32 %v256, %v384
  %v513 = vmax.f32 %v257, %v385
  %v514 = vmax.f32 %v258, %v386
  %v515 = vmax.f32 %v259, %v387
  %v516 = vmax.f32 %v260, %v388
  %v517 = vmax.f32 %v261, %v389
  %v518 = vmax.f32 %v262, %v390
  %v519 = vmax.f32 %v263, %v391
  %v520 = vmax.f32 %v264, %v392
  %v521 = vmax.f32 %v265, %v393
  %v522 = vmax.f32 %v266, %v394
  %v523 = vmax.f32 %v267, %v395
  %v524 = vmax.f32 %v268, %v396
  %v525 = vmax.f32 %v269, %v397
  %v526 = vmax.f32 %v270, %v398
  %v527 = vmax.f32 %v271, %v399
  %v528 = vmax.f32 %v272, %v400
  %v529 = vmax.f32 %v273, %v401
  %v530 = vmax.f32 %v274, %v402
  %v531 = vmax.f32 %v275, %v403
  %v532 = vmax.f32 %v276, %v404
  %v533 = vmax.f32 %v277, %v405
  %v534 = vmax.f32 %v278, %v406
  %v535 = vmax.f32 %v279, %v407
  %v536 = vmax.f32 %v280, %v408
  %v537 = vmax.f32 %v281, %v409
  %v538 = vmax.f32 %v282, %v410
  %v539 = vmax.f32 %v283, %v411
  %v540 = vmax.f32 %v284, %v412
  %v541 = vmax.f32 %v285, %v413
  %v542 = vmax.f32 %v286, %v414
  %v543 = vmax.f32 %v287, %v415
  %v544 = vmax.f32 %v288, %v416
  %v545 = vmax.f32 %v289, %v417
  %v546 = vmax.f32 %v290, %v418
  %v547 = vmax.f32 %v291, %v419
  %v548 = vmax.f32 %v292, %v420
  %v549 = vmax.f32 %v293, %v421
  %v550 = vmax.f32 %v294, %v422
  %v551 = vmax.f32 %v295, %v423
  %v552 = vmax.f32 %v296, %v424
  %v553 = vmax.f32 %v297, %v425
  %v554 = vmax.f32 %v298, %v426
  %v555 = vmax.f32 %v299, %v427
  %v556 = vmax.f32 %v300, %v428
  %v557 = vmax.f32 %v301, %v429
  %v558 = vmax.f32 %v302, %v430
  %v559 = vmax.f32 %v303, %v431
  %v560 = vmax.f32 %v304, %v432
  %v561 = vmax.f32 %v305, %v433
  %v562 = vmax.f32 %v306, %v434
  %v563 = vmax.f32 %v307, %v435
  %v564 = vmax.f32 %v308, %v436
  %v565 = vmax.f32 %v309, %v437
  %v566 = vmax.f32 %v310, %v438
  %v567 = vmax.f32 %v311, %v439
  %v568 = vmax.f32 %v312, %v440
  %v569 = vmax.f32 %v313, %v441
  %v570 = vmax.f32 %v314, %v442
  %v571 = vmax.f32 %v315, %v443
  %v572 = vmax.f32 %v316, %v444
  %v573 = vmax.f32 %v317, %v445
  %v574 = vmax.f32 %v318, %v446
  %v575 = vmax.f32 %v319, %v447
  %v576 = vmax.f32 %v320, %v448
  %v577 = vmax.f32 %v321, %v449
  %v578 = vmax.f32 %v322, %v450
  %v579 = vmax.f32 %v323, %v451
  %v580 = vmax.f32 %v324, %v452
  %v581 = vmax.f32 %v325, %v453
  %v582 = vmax.f32 %v326, %v454
  %v583 = vmax.f32 %v327, %v455
  %v584 = vmax.f32 %v328, %v456
  %v585 = vmax.f32 %v329, %v457
  %v586 = vmax.f32 %v330, %v458
  %v587 = vmax.f32 %v331, %v459
  %v588 = vmax.f32 %v332, %v460
  %v589 = vmax.f32 %v333, %v461
  %v590 = vmax.f32 %v334, %v462
  %v591 = vmax.f32 %v335, %v463
  %v592 = vmax.f32 %v336, %v464
  %v593 = vmax.f32 %v337, %v465
  %v594 = vmax.f32 %v338, %v466
  %v595 = vmax.f32 %v339, %v467
  %v596 = vmax.f32 %v340, %v468
  %v597 = vmax.f32 %v341, %v469
  %v598 = vmax.f32 %v342, %v470
  %v599 = vmax.f32 %v343, %v471
  %v600 = vmax.f32 %v344, %v472
  %v601 = vmax.f32 %v345, %v473
  %v602 = vmax.f32 %v346, %v474
  %v603 = vmax.f32 %v347, %v475
  %v604 = vmax.f32 %v348, %v476
  %v605 = vmax.f32 %v349, %v477
  %v606 = vmax.f32 %v350, %v478
  %v607 = vld [vmem:[%s5] sm:$0xff]
  %v608 = vld [vmem:[%s5 + $0x8] sm:$0xff]
  %v609 = vld [vmem:[%s5 + $0x10] sm:$0xff]
  %v610 = vld [vmem:[%s5 + $0x18] sm:$0xff]
  %v611 = vld [vmem:[%s5 + $0x20] sm:$0xff]
  %v612 = vld [vmem:[%s5 + $0x28] sm:$0xff]
  %v613 = vld [vmem:[%s5 + $0x30] sm:$0xff]
  %v614 = vld [vmem:[%s5 + $0x38] sm:$0xff]
  %v615 = vld [vmem:[%s5 + $0x40] sm:$0xff]
  %v616 = vld [vmem:[%s5 + $0x48] sm:$0xff]
  %v617 = vld [vmem:[%s5 + $0x50] sm:$0xff]
  %v618 = vld [vmem:[%s5 + $0x58] sm:$0xff]
  %v619 = vld [vmem:[%s5 + $0x60] sm:$0xff]
  %v620 = vld [vmem:[%s5 + $0x68] sm:$0xff]
  %v621 = vld [vmem:[%s5 + $0x70] sm:$0xff]
  %v622 = vld [vmem:[%s5 + $0x78] sm:$0xff]
  %623 = vmatpush.msra.mxu0 %v622
  %624 = vmatpush.msra.mxu0 %v621
  %625 = vmatpush.msra.mxu0 %v620
  %626 = vmatpush.msra.mxu0 %v619
  %627 = vmatpush.msra.mxu0 %v618
  %628 = vmatpush.msra.mxu0 %v617
  %629 = vmatpush.msra.mxu0 %v616
  %630 = vmatpush.msra.mxu0 %v615
  %631 = vmatpush.msra.mxu0 %v614
  %632 = vmatpush.msra.mxu0 %v613
  %633 = vmatpush.msra.mxu0 %v612
  %634 = vmatpush.msra.mxu0 %v611
  %635 = vmatpush.msra.mxu0 %v610
  %636 = vmatpush.msra.mxu0 %v609
  %637 = vmatpush.msra.mxu0 %v608
  %638 = vmatpush.msra.mxu0 %v607
  %639 = vmatmul.f32.gmra.mxu0 %v479
  %v640 = vpop.f32.mrf.mxu0
  %v641 = vadd.f32 0.0, %v640
  %642 = vmatmul.f32.gmra.mxu0 %v480
  %v643 = vpop.f32.mrf.mxu0
  %v644 = vadd.f32 0.0, %v643
  %645 = vmatmul.f32.gmra.mxu0 %v481
  %v646 = vpop.f32.mrf.mxu0
  %v647 = vadd.f32 0.0, %v646
  %648 = vmatmul.f32.gmra.mxu0 %v482
  %v649 = vpop.f32.mrf.mxu0
  %v650 = vadd.f32 0.0, %v649
  %651 = vmatmul.f32.gmra.mxu0 %v483
  %v652 = vpop.f32.mrf.mxu0
  %v653 = vadd.f32 0.0, %v652
  %654 = vmatmul.f32.gmra.mxu0 %v484
  %v655 = vpop.f32.mrf.mxu0
  %v656 = vadd.f32 0.0, %v655
  %657 = vmatmul.f32.gmra.mxu0 %v485
  %v658 = vpop.f32.mrf.mxu0
  %v659 = vadd.f32 0.0, %v658
  %660 = vmatmul.f32.gmra.mxu0 %v486
  %v661 = vpop.f32.mrf.mxu0
  %v662 = vadd.f32 0.0, %v661
  %663 = vmatmul.f32.gmra.mxu0 %v487
  %v664 = vpop.f32.mrf.mxu0
  %v665 = vadd.f32 0.0, %v664
  %666 = vmatmul.f32.gmra.mxu0 %v488
  %v667 = vpop.f32.mrf.mxu0
  %v668 = vadd.f32 0.0, %v667
  %669 = vmatmul.f32.gmra.mxu0 %v489
  %v670 = vpop.f32.mrf.mxu0
  %v671 = vadd.f32 0.0, %v670
  %672 = vmatmul.f32.gmra.mxu0 %v490
  %v673 = vpop.f32.mrf.mxu0
  %v674 = vadd.f32 0.0, %v673
  %675 = vmatmul.f32.gmra.mxu0 %v491
  %v676 = vpop.f32.mrf.mxu0
  %v677 = vadd.f32 0.0, %v676
  %678 = vmatmul.f32.gmra.mxu0 %v492
  %v679 = vpop.f32.mrf.mxu0
  %v680 = vadd.f32 0.0, %v679
  %681 = vmatmul.f32.gmra.mxu0 %v493
  %v682 = vpop.f32.mrf.mxu0
  %v683 = vadd.f32 0.0, %v682
  %684 = vmatmul.f32.gmra.mxu0 %v494
  %v685 = vpop.f32.mrf.mxu0
  %v686 = vadd.f32 0.0, %v685
  %687 = vmatmul.f32.gmra.mxu0 %v495
  %v688 = vpop.f32.mrf.mxu0
  %v689 = vadd.f32 0.0, %v688
  %690 = vmatmul.f32.gmra.mxu0 %v496
  %v691 = vpop.f32.mrf.mxu0
  %v692 = vadd.f32 0.0, %v691
  %693 = vmatmul.f32.gmra.mxu0 %v497
  %v694 = vpop.f32.mrf.mxu0
  %v695 = vadd.f32 0.0, %v694
  %696 = vmatmul.f32.gmra.mxu0 %v498
  %v697 = vpop.f32.mrf.mxu0
  %v698 = vadd.f32 0.0, %v697
  %699 = vmatmul.f32.gmra.mxu0 %v499
  %v700 = vpop.f32.mrf.mxu0
  %v701 = vadd.f32 0.0, %v700
  %702 = vmatmul.f32.gmra.mxu0 %v500
  %v703 = vpop.f32.mrf.mxu0
  %v704 = vadd.f32 0.0, %v703
  %705 = vmatmul.f32.gmra.mxu0 %v501
  %v706 = vpop.f32.mrf.mxu0
  %v707 = vadd.f32 0.0, %v706
  %708 = vmatmul.f32.gmra.mxu0 %v502
  %v709 = vpop.f32.mrf.mxu0
  %v710 = vadd.f32 0.0, %v709
  %711 = vmatmul.f32.gmra.mxu0 %v503
  %v712 = vpop.f32.mrf.mxu0
  %v713 = vadd.f32 0.0, %v712
  %714 = vmatmul.f32.gmra.mxu0 %v504
  %v715 = vpop.f32.mrf.mxu0
  %v716 = vadd.f32 0.0, %v715
  %717 = vmatmul.f32.gmra.mxu0 %v505
  %v718 = vpop.f32.mrf.mxu0
  %v719 = vadd.f32 0.0, %v718
  %720 = vmatmul.f32.gmra.mxu0 %v506
  %v721 = vpop.f32.mrf.mxu0
  %v722 = vadd.f32 0.0, %v721
  %723 = vmatmul.f32.gmra.mxu0 %v507
  %v724 = vpop.f32.mrf.mxu0
  %v725 = vadd.f32 0.0, %v724
  %726 = vmatmul.f32.gmra.mxu0 %v508
  %v727 = vpop.f32.mrf.mxu0
  %v728 = vadd.f32 0.0, %v727
  %729 = vmatmul.f32.gmra.mxu0 %v509
  %v730 = vpop.f32.mrf.mxu0
  %v731 = vadd.f32 0.0, %v730
  %732 = vmatmul.f32.gmra.mxu0 %v510
  %v733 = vpop.f32.mrf.mxu0
  %v734 = vadd.f32 0.0, %v733
  %735 = vmatmul.f32.gmra.mxu0 %v511
  %v736 = vpop.f32.mrf.mxu0
  %v737 = vadd.f32 0.0, %v736
  %738 = vmatmul.f32.gmra.mxu0 %v512
  %v739 = vpop.f32.mrf.mxu0
  %v740 = vadd.f32 0.0, %v739
  %741 = vmatmul.f32.gmra.mxu0 %v513
  %v742 = vpop.f32.mrf.mxu0
  %v743 = vadd.f32 0.0, %v742
  %744 = vmatmul.f32.gmra.mxu0 %v514
  %v745 = vpop.f32.mrf.mxu0
  %v746 = vadd.f32 0.0, %v745
  %747 = vmatmul.f32.gmra.mxu0 %v515
  %v748 = vpop.f32.mrf.mxu0
  %v749 = vadd.f32 0.0, %v748
  %750 = vmatmul.f32.gmra.mxu0 %v516
  %v751 = vpop.f32.mrf.mxu0
  %v752 = vadd.f32 0.0, %v751
  %753 = vmatmul.f32.gmra.mxu0 %v517
  %v754 = vpop.f32.mrf.mxu0
  %v755 = vadd.f32 0.0, %v754
  %756 = vmatmul.f32.gmra.mxu0 %v518
  %v757 = vpop.f32.mrf.mxu0
  %v758 = vadd.f32 0.0, %v757
  %759 = vmatmul.f32.gmra.mxu0 %v519
  %v760 = vpop.f32.mrf.mxu0
  %v761 = vadd.f32 0.0, %v760
  %762 = vmatmul.f32.gmra.mxu0 %v520
  %v763 = vpop.f32.mrf.mxu0
  %v764 = vadd.f32 0.0, %v763
  %765 = vmatmul.f32.gmra.mxu0 %v521
  %v766 = vpop.f32.mrf.mxu0
  %v767 = vadd.f32 0.0, %v766
  %768 = vmatmul.f32.gmra.mxu0 %v522
  %v769 = vpop.f32.mrf.mxu0
  %v770 = vadd.f32 0.0, %v769
  %771 = vmatmul.f32.gmra.mxu0 %v523
  %v772 = vpop.f32.mrf.mxu0
  %v773 = vadd.f32 0.0, %v772
  %774 = vmatmul.f32.gmra.mxu0 %v524
  %v775 = vpop.f32.mrf.mxu0
  %v776 = vadd.f32 0.0, %v775
  %777 = vmatmul.f32.gmra.mxu0 %v525
  %v778 = vpop.f32.mrf.mxu0
  %v779 = vadd.f32 0.0, %v778
  %780 = vmatmul.f32.gmra.mxu0 %v526
  %v781 = vpop.f32.mrf.mxu0
  %v782 = vadd.f32 0.0, %v781
  %783 = vmatmul.f32.gmra.mxu0 %v527
  %v784 = vpop.f32.mrf.mxu0
  %v785 = vadd.f32 0.0, %v784
  %786 = vmatmul.f32.gmra.mxu0 %v528
  %v787 = vpop.f32.mrf.mxu0
  %v788 = vadd.f32 0.0, %v787
  %789 = vmatmul.f32.gmra.mxu0 %v529
  %v790 = vpop.f32.mrf.mxu0
  %v791 = vadd.f32 0.0, %v790
  %792 = vmatmul.f32.gmra.mxu0 %v530
  %v793 = vpop.f32.mrf.mxu0
  %v794 = vadd.f32 0.0, %v793
  %795 = vmatmul.f32.gmra.mxu0 %v531
  %v796 = vpop.f32.mrf.mxu0
  %v797 = vadd.f32 0.0, %v796
  %798 = vmatmul.f32.gmra.mxu0 %v532
  %v799 = vpop.f32.mrf.mxu0
  %v800 = vadd.f32 0.0, %v799
  %801 = vmatmul.f32.gmra.mxu0 %v533
  %v802 = vpop.f32.mrf.mxu0
  %v803 = vadd.f32 0.0, %v802
  %804 = vmatmul.f32.gmra.mxu0 %v534
  %v805 = vpop.f32.mrf.mxu0
  %v806 = vadd.f32 0.0, %v805
  %807 = vmatmul.f32.gmra.mxu0 %v535
  %v808 = vpop.f32.mrf.mxu0
  %v809 = vadd.f32 0.0, %v808
  %810 = vmatmul.f32.gmra.mxu0 %v536
  %v811 = vpop.f32.mrf.mxu0
  %v812 = vadd.f32 0.0, %v811
  %813 = vmatmul.f32.gmra.mxu0 %v537
  %v814 = vpop.f32.mrf.mxu0
  %v815 = vadd.f32 0.0, %v814
  %816 = vmatmul.f32.gmra.mxu0 %v538
  %v817 = vpop.f32.mrf.mxu0
  %v818 = vadd.f32 0.0, %v817
  %819 = vmatmul.f32.gmra.mxu0 %v539
  %v820 = vpop.f32.mrf.mxu0
  %v821 = vadd.f32 0.0, %v820
  %822 = vmatmul.f32.gmra.mxu0 %v540
  %v823 = vpop.f32.mrf.mxu0
  %v824 = vadd.f32 0.0, %v823
  %825 = vmatmul.f32.gmra.mxu0 %v541
  %v826 = vpop.f32.mrf.mxu0
  %v827 = vadd.f32 0.0, %v826
  %828 = vmatmul.f32.gmra.mxu0 %v542
  %v829 = vpop.f32.mrf.mxu0
  %v830 = vadd.f32 0.0, %v829
  %831 = vmatmul.f32.gmra.mxu0 %v543
  %v832 = vpop.f32.mrf.mxu0
  %v833 = vadd.f32 0.0, %v832
  %834 = vmatmul.f32.gmra.mxu0 %v544
  %v835 = vpop.f32.mrf.mxu0
  %v836 = vadd.f32 0.0, %v835
  %837 = vmatmul.f32.gmra.mxu0 %v545
  %v838 = vpop.f32.mrf.mxu0
  %v839 = vadd.f32 0.0, %v838
  %840 = vmatmul.f32.gmra.mxu0 %v546
  %v841 = vpop.f32.mrf.mxu0
  %v842 = vadd.f32 0.0, %v841
  %843 = vmatmul.f32.gmra.mxu0 %v547
  %v844 = vpop.f32.mrf.mxu0
  %v845 = vadd.f32 0.0, %v844
  %846 = vmatmul.f32.gmra.mxu0 %v548
  %v847 = vpop.f32.mrf.mxu0
  %v848 = vadd.f32 0.0, %v847
  %849 = vmatmul.f32.gmra.mxu0 %v549
  %v850 = vpop.f32.mrf.mxu0
  %v851 = vadd.f32 0.0, %v850
  %852 = vmatmul.f32.gmra.mxu0 %v550
  %v853 = vpop.f32.mrf.mxu0
  %v854 = vadd.f32 0.0, %v853
  %855 = vmatmul.f32.gmra.mxu0 %v551
  %v856 = vpop.f32.mrf.mxu0
  %v857 = vadd.f32 0.0, %v856
  %858 = vmatmul.f32.gmra.mxu0 %v552
  %v859 = vpop.f32.mrf.mxu0
  %v860 = vadd.f32 0.0, %v859
  %861 = vmatmul.f32.gmra.mxu0 %v553
  %v862 = vpop.f32.mrf.mxu0
  %v863 = vadd.f32 0.0, %v862
  %864 = vmatmul.f32.gmra.mxu0 %v554
  %v865 = vpop.f32.mrf.mxu0
  %v866 = vadd.f32 0.0, %v865
  %867 = vmatmul.f32.gmra.mxu0 %v555
  %v868 = vpop.f32.mrf.mxu0
  %v869 = vadd.f32 0.0, %v868
  %870 = vmatmul.f32.gmra.mxu0 %v556
  %v871 = vpop.f32.mrf.mxu0
  %v872 = vadd.f32 0.0, %v871
  %873 = vmatmul.f32.gmra.mxu0 %v557
  %v874 = vpop.f32.mrf.mxu0
  %v875 = vadd.f32 0.0, %v874
  %876 = vmatmul.f32.gmra.mxu0 %v558
  %v877 = vpop.f32.mrf.mxu0
  %v878 = vadd.f32 0.0, %v877
  %879 = vmatmul.f32.gmra.mxu0 %v559
  %v880 = vpop.f32.mrf.mxu0
  %v881 = vadd.f32 0.0, %v880
  %882 = vmatmul.f32.gmra.mxu0 %v560
  %v883 = vpop.f32.mrf.mxu0
  %v884 = vadd.f32 0.0, %v883
  %885 = vmatmul.f32.gmra.mxu0 %v561
  %v886 = vpop.f32.mrf.mxu0
  %v887 = vadd.f32 0.0, %v886
  %888 = vmatmul.f32.gmra.mxu0 %v562
  %v889 = vpop.f32.mrf.mxu0
  %v890 = vadd.f32 0.0, %v889
  %891 = vmatmul.f32.gmra.mxu0 %v563
  %v892 = vpop.f32.mrf.mxu0
  %v893 = vadd.f32 0.0, %v892
  %894 = vmatmul.f32.gmra.mxu0 %v564
  %v895 = vpop.f32.mrf.mxu0
  %v896 = vadd.f32 0.0, %v895
  %897 = vmatmul.f32.gmra.mxu0 %v565
  %v898 = vpop.f32.mrf.mxu0
  %v899 = vadd.f32 0.0, %v898
  %900 = vmatmul.f32.gmra.mxu0 %v566
  %v901 = vpop.f32.mrf.mxu0
  %v902 = vadd.f32 0.0, %v901
  %903 = vmatmul.f32.gmra.mxu0 %v567
  %v904 = vpop.f32.mrf.mxu0
  %v905 = vadd.f32 0.0, %v904
  %906 = vmatmul.f32.gmra.mxu0 %v568
  %v907 = vpop.f32.mrf.mxu0
  %v908 = vadd.f32 0.0, %v907
  %909 = vmatmul.f32.gmra.mxu0 %v569
  %v910 = vpop.f32.mrf.mxu0
  %v911 = vadd.f32 0.0, %v910
  %912 = vmatmul.f32.gmra.mxu0 %v570
  %v913 = vpop.f32.mrf.mxu0
  %v914 = vadd.f32 0.0, %v913
  %915 = vmatmul.f32.gmra.mxu0 %v571
  %v916 = vpop.f32.mrf.mxu0
  %v917 = vadd.f32 0.0, %v916
  %918 = vmatmul.f32.gmra.mxu0 %v572
  %v919 = vpop.f32.mrf.mxu0
  %v920 = vadd.f32 0.0, %v919
  %921 = vmatmul.f32.gmra.mxu0 %v573
  %v922 = vpop.f32.mrf.mxu0
  %v923 = vadd.f32 0.0, %v922
  %924 = vmatmul.f32.gmra.mxu0 %v574
  %v925 = vpop.f32.mrf.mxu0
  %v926 = vadd.f32 0.0, %v925
  %927 = vmatmul.f32.gmra.mxu0 %v575
  %v928 = vpop.f32.mrf.mxu0
  %v929 = vadd.f32 0.0, %v928
  %930 = vmatmul.f32.gmra.mxu0 %v576
  %v931 = vpop.f32.mrf.mxu0
  %v932 = vadd.f32 0.0, %v931
  %933 = vmatmul.f32.gmra.mxu0 %v577
  %v934 = vpop.f32.mrf.mxu0
  %v935 = vadd.f32 0.0, %v934
  %936 = vmatmul.f32.gmra.mxu0 %v578
  %v937 = vpop.f32.mrf.mxu0
  %v938 = vadd.f32 0.0, %v937
  %939 = vmatmul.f32.gmra.mxu0 %v579
  %v940 = vpop.f32.mrf.mxu0
  %v941 = vadd.f32 0.0, %v940
  %942 = vmatmul.f32.gmra.mxu0 %v580
  %v943 = vpop.f32.mrf.mxu0
  %v944 = vadd.f32 0.0, %v943
  %945 = vmatmul.f32.gmra.mxu0 %v581
  %v946 = vpop.f32.mrf.mxu0
  %v947 = vadd.f32 0.0, %v946
  %948 = vmatmul.f32.gmra.mxu0 %v582
  %v949 = vpop.f32.mrf.mxu0
  %v950 = vadd.f32 0.0, %v949
  %951 = vmatmul.f32.gmra.mxu0 %v583
  %v952 = vpop.f32.mrf.mxu0
  %v953 = vadd.f32 0.0, %v952
  %954 = vmatmul.f32.gmra.mxu0 %v584
  %v955 = vpop.f32.mrf.mxu0
  %v956 = vadd.f32 0.0, %v955
  %957 = vmatmul.f32.gmra.mxu0 %v585
  %v958 = vpop.f32.mrf.mxu0
  %v959 = vadd.f32 0.0, %v958
  %960 = vmatmul.f32.gmra.mxu0 %v586
  %v961 = vpop.f32.mrf.mxu0
  %v962 = vadd.f32 0.0, %v961
  %963 = vmatmul.f32.gmra.mxu0 %v587
  %v964 = vpop.f32.mrf.mxu0
  %v965 = vadd.f32 0.0, %v964
  %966 = vmatmul.f32.gmra.mxu0 %v588
  %v967 = vpop.f32.mrf.mxu0
  %v968 = vadd.f32 0.0, %v967
  %969 = vmatmul.f32.gmra.mxu0 %v589
  %v970 = vpop.f32.mrf.mxu0
  %v971 = vadd.f32 0.0, %v970
  %972 = vmatmul.f32.gmra.mxu0 %v590
  %v973 = vpop.f32.mrf.mxu0
  %v974 = vadd.f32 0.0, %v973
  %975 = vmatmul.f32.gmra.mxu0 %v591
  %v976 = vpop.f32.mrf.mxu0
  %v977 = vadd.f32 0.0, %v976
  %978 = vmatmul.f32.gmra.mxu0 %v592
  %v979 = vpop.f32.mrf.mxu0
  %v980 = vadd.f32 0.0, %v979
  %981 = vmatmul.f32.gmra.mxu0 %v593
  %v982 = vpop.f32.mrf.mxu0
  %v983 = vadd.f32 0.0, %v982
  %984 = vmatmul.f32.gmra.mxu0 %v594
  %v985 = vpop.f32.mrf.mxu0
  %v986 = vadd.f32 0.0, %v985
  %987 = vmatmul.f32.gmra.mxu0 %v595
  %v988 = vpop.f32.mrf.mxu0
  %v989 = vadd.f32 0.0, %v988
  %990 = vmatmul.f32.gmra.mxu0 %v596
  %v991 = vpop.f32.mrf.mxu0
  %v992 = vadd.f32 0.0, %v991
  %993 = vmatmul.f32.gmra.mxu0 %v597
  %v994 = vpop.f32.mrf.mxu0
  %v995 = vadd.f32 0.0, %v994
  %996 = vmatmul.f32.gmra.mxu0 %v598
  %v997 = vpop.f32.mrf.mxu0
  %v998 = vadd.f32 0.0, %v997
  %999 = vmatmul.f32.gmra.mxu0 %v599
  %v1000 = vpop.f32.mrf.mxu0
  %v1001 = vadd.f32 0.0, %v1000
  %1002 = vmatmul.f32.gmra.mxu0 %v600
  %v1003 = vpop.f32.mrf.mxu0
  %v1004 = vadd.f32 0.0, %v1003
  %1005 = vmatmul.f32.gmra.mxu0 %v601
  %v1006 = vpop.f32.mrf.mxu0
  %v1007 = vadd.f32 0.0, %v1006
  %1008 = vmatmul.f32.gmra.mxu0 %v602
  %v1009 = vpop.f32.mrf.mxu0
  %v1010 = vadd.f32 0.0, %v1009
  %1011 = vmatmul.f32.gmra.mxu0 %v603
  %v1012 = vpop.f32.mrf.mxu0
  %v1013 = vadd.f32 0.0, %v1012
  %1014 = vmatmul.f32.gmra.mxu0 %v604
  %v1015 = vpop.f32.mrf.mxu0
  %v1016 = vadd.f32 0.0, %v1015
  %1017 = vmatmul.f32.gmra.mxu0 %v605
  %v1018 = vpop.f32.mrf.mxu0
  %v1019 = vadd.f32 0.0, %v1018
  %1020 = vmatmul.f32.gmra.mxu0 %v606
  %v1021 = vpop.f32.mrf.mxu0
  %v1022 = vadd.f32 0.0, %v1021
  %1023 = vdwg.mxu0
  %v1024 = vld [vmem:[%s2] sm:$0xff]
  %v1025 = vld [vmem:[%s2 + $0x8] sm:$0xff]
  %v1026 = vld [vmem:[%s2 + $0x10] sm:$0xff]
  %v1027 = vld [vmem:[%s2 + $0x18] sm:$0xff]
  %v1028 = vld [vmem:[%s2 + $0x20] sm:$0xff]
  %v1029 = vld [vmem:[%s2 + $0x28] sm:$0xff]
  %v1030 = vld [vmem:[%s2 + $0x30] sm:$0xff]
  %v1031 = vld [vmem:[%s2 + $0x38] sm:$0xff]
  %v1032 = vld [vmem:[%s2 + $0x40] sm:$0xff]
  %v1033 = vld [vmem:[%s2 + $0x48] sm:$0xff]
  %v1034 = vld [vmem:[%s2 + $0x50] sm:$0xff]
  %v1035 = vld [vmem:[%s2 + $0x58] sm:$0xff]
  %v1036 = vld [vmem:[%s2 + $0x60] sm:$0xff]
  %v1037 = vld [vmem:[%s2 + $0x68] sm:$0xff]
  %v1038 = vld [vmem:[%s2 + $0x70] sm:$0xff]
  %v1039 = vld [vmem:[%s2 + $0x78] sm:$0xff]
  %v1040 = vld [vmem:[%s2 + $0x80] sm:$0xff]
  %v1041 = vld [vmem:[%s2 + $0x88] sm:$0xff]
  %v1042 = vld [vmem:[%s2 + $0x90] sm:$0xff]
  %v1043 = vld [vmem:[%s2 + $0x98] sm:$0xff]
  %v1044 = vld [vmem:[%s2 + $0xa0] sm:$0xff]
  %v1045 = vld [vmem:[%s2 + $0xa8] sm:$0xff]
  %v1046 = vld [vmem:[%s2 + $0xb0] sm:$0xff]
  %v1047 = vld [vmem:[%s2 + $0xb8] sm:$0xff]
  %v1048 = vld [vmem:[%s2 + $0xc0] sm:$0xff]
  %v1049 = vld [vmem:[%s2 + $0xc8] sm:$0xff]
  %v1050 = vld [vmem:[%s2 + $0xd0] sm:$0xff]
  %v1051 = vld [vmem:[%s2 + $0xd8] sm:$0xff]
  %v1052 = vld [vmem:[%s2 + $0xe0] sm:$0xff]
  %v1053 = vld [vmem:[%s2 + $0xe8] sm:$0xff]
  %v1054 = vld [vmem:[%s2 + $0xf0] sm:$0xff]
  %v1055 = vld [vmem:[%s2 + $0xf8] sm:$0xff]
  %v1056 = vld [vmem:[%s2 + $0x100] sm:$0xff]
  %v1057 = vld [vmem:[%s2 + $0x108] sm:$0xff]
  %v1058 = vld [vmem:[%s2 + $0x110] sm:$0xff]
  %v1059 = vld [vmem:[%s2 + $0x118] sm:$0xff]
  %v1060 = vld [vmem:[%s2 + $0x120] sm:$0xff]
  %v1061 = vld [vmem:[%s2 + $0x128] sm:$0xff]
  %v1062 = vld [vmem:[%s2 + $0x130] sm:$0xff]
  %v1063 = vld [vmem:[%s2 + $0x138] sm:$0xff]
  %v1064 = vld [vmem:[%s2 + $0x140] sm:$0xff]
  %v1065 = vld [vmem:[%s2 + $0x148] sm:$0xff]
  %v1066 = vld [vmem:[%s2 + $0x150] sm:$0xff]
  %v1067 = vld [vmem:[%s2 + $0x158] sm:$0xff]
  %v1068 = vld [vmem:[%s2 + $0x160] sm:$0xff]
  %v1069 = vld [vmem:[%s2 + $0x168] sm:$0xff]
  %v1070 = vld [vmem:[%s2 + $0x170] sm:$0xff]
  %v1071 = vld [vmem:[%s2 + $0x178] sm:$0xff]
  %v1072 = vld [vmem:[%s2 + $0x180] sm:$0xff]
  %v1073 = vld [vmem:[%s2 + $0x188] sm:$0xff]
  %v1074 = vld [vmem:[%s2 + $0x190] sm:$0xff]
  %v1075 = vld [vmem:[%s2 + $0x198] sm:$0xff]
  %v1076 = vld [vmem:[%s2 + $0x1a0] sm:$0xff]
  %v1077 = vld [vmem:[%s2 + $0x1a8] sm:$0xff]
  %v1078 = vld [vmem:[%s2 + $0x1b0] sm:$0xff]
  %v1079 = vld [vmem:[%s2 + $0x1b8] sm:$0xff]
  %v1080 = vld [vmem:[%s2 + $0x1c0] sm:$0xff]
  %v1081 = vld [vmem:[%s2 + $0x1c8] sm:$0xff]
  %v1082 = vld [vmem:[%s2 + $0x1d0] sm:$0xff]
  %v1083 = vld [vmem:[%s2 + $0x1d8] sm:$0xff]
  %v1084 = vld [vmem:[%s2 + $0x1e0] sm:$0xff]
  %v1085 = vld [vmem:[%s2 + $0x1e8] sm:$0xff]
  %v1086 = vld [vmem:[%s2 + $0x1f0] sm:$0xff]
  %v1087 = vld [vmem:[%s2 + $0x1f8] sm:$0xff]
  %v1088 = vld [vmem:[%s2 + $0x200] sm:$0xff]
  %v1089 = vld [vmem:[%s2 + $0x208] sm:$0xff]
  %v1090 = vld [vmem:[%s2 + $0x210] sm:$0xff]
  %v1091 = vld [vmem:[%s2 + $0x218] sm:$0xff]
  %v1092 = vld [vmem:[%s2 + $0x220] sm:$0xff]
  %v1093 = vld [vmem:[%s2 + $0x228] sm:$0xff]
  %v1094 = vld [vmem:[%s2 + $0x230] sm:$0xff]
  %v1095 = vld [vmem:[%s2 + $0x238] sm:$0xff]
  %v1096 = vld [vmem:[%s2 + $0x240] sm:$0xff]
  %v1097 = vld [vmem:[%s2 + $0x248] sm:$0xff]
  %v1098 = vld [vmem:[%s2 + $0x250] sm:$0xff]
  %v1099 = vld [vmem:[%s2 + $0x258] sm:$0xff]
  %v1100 = vld [vmem:[%s2 + $0x260] sm:$0xff]
  %v1101 = vld [vmem:[%s2 + $0x268] sm:$0xff]
  %v1102 = vld [vmem:[%s2 + $0x270] sm:$0xff]
  %v1103 = vld [vmem:[%s2 + $0x278] sm:$0xff]
  %v1104 = vld [vmem:[%s2 + $0x280] sm:$0xff]
  %v1105 = vld [vmem:[%s2 + $0x288] sm:$0xff]
  %v1106 = vld [vmem:[%s2 + $0x290] sm:$0xff]
  %v1107 = vld [vmem:[%s2 + $0x298] sm:$0xff]
  %v1108 = vld [vmem:[%s2 + $0x2a0] sm:$0xff]
  %v1109 = vld [vmem:[%s2 + $0x2a8] sm:$0xff]
  %v1110 = vld [vmem:[%s2 + $0x2b0] sm:$0xff]
  %v1111 = vld [vmem:[%s2 + $0x2b8] sm:$0xff]
  %v1112 = vld [vmem:[%s2 + $0x2c0] sm:$0xff]
  %v1113 = vld [vmem:[%s2 + $0x2c8] sm:$0xff]
  %v1114 = vld [vmem:[%s2 + $0x2d0] sm:$0xff]
  %v1115 = vld [vmem:[%s2 + $0x2d8] sm:$0xff]
  %v1116 = vld [vmem:[%s2 + $0x2e0] sm:$0xff]
  %v1117 = vld [vmem:[%s2 + $0x2e8] sm:$0xff]
  %v1118 = vld [vmem:[%s2 + $0x2f0] sm:$0xff]
  %v1119 = vld [vmem:[%s2 + $0x2f8] sm:$0xff]
  %v1120 = vld [vmem:[%s2 + $0x300] sm:$0xff]
  %v1121 = vld [vmem:[%s2 + $0x308] sm:$0xff]
  %v1122 = vld [vmem:[%s2 + $0x310] sm:$0xff]
  %v1123 = vld [vmem:[%s2 + $0x318] sm:$0xff]
  %v1124 = vld [vmem:[%s2 + $0x320] sm:$0xff]
  %v1125 = vld [vmem:[%s2 + $0x328] sm:$0xff]
  %v1126 = vld [vmem:[%s2 + $0x330] sm:$0xff]
  %v1127 = vld [vmem:[%s2 + $0x338] sm:$0xff]
  %v1128 = vld [vmem:[%s2 + $0x340] sm:$0xff]
  %v1129 = vld [vmem:[%s2 + $0x348] sm:$0xff]
  %v1130 = vld [vmem:[%s2 + $0x350] sm:$0xff]
  %v1131 = vld [vmem:[%s2 + $0x358] sm:$0xff]
  %v1132 = vld [vmem:[%s2 + $0x360] sm:$0xff]
  %v1133 = vld [vmem:[%s2 + $0x368] sm:$0xff]
  %v1134 = vld [vmem:[%s2 + $0x370] sm:$0xff]
  %v1135 = vld [vmem:[%s2 + $0x378] sm:$0xff]
  %v1136 = vld [vmem:[%s2 + $0x380] sm:$0xff]
  %v1137 = vld [vmem:[%s2 + $0x388] sm:$0xff]
  %v1138 = vld [vmem:[%s2 + $0x390] sm:$0xff]
  %v1139 = vld [vmem:[%s2 + $0x398] sm:$0xff]
  %v1140 = vld [vmem:[%s2 + $0x3a0] sm:$0xff]
  %v1141 = vld [vmem:[%s2 + $0x3a8] sm:$0xff]
  %v1142 = vld [vmem:[%s2 + $0x3b0] sm:$0xff]
  %v1143 = vld [vmem:[%s2 + $0x3b8] sm:$0xff]
  %v1144 = vld [vmem:[%s2 + $0x3c0] sm:$0xff]
  %v1145 = vld [vmem:[%s2 + $0x3c8] sm:$0xff]
  %v1146 = vld [vmem:[%s2 + $0x3d0] sm:$0xff]
  %v1147 = vld [vmem:[%s2 + $0x3d8] sm:$0xff]
  %v1148 = vld [vmem:[%s2 + $0x3e0] sm:$0xff]
  %v1149 = vld [vmem:[%s2 + $0x3e8] sm:$0xff]
  %v1150 = vld [vmem:[%s2 + $0x3f0] sm:$0xff]
  %v1151 = vld [vmem:[%s2 + $0x3f8] sm:$0xff]
  %1153 = vset.pattern.permute.xlu0 0
  %1154 = vperm.xlu0 %1153, %v1024
  %v1155 = vpop.permute.xlu0 %1154
  %1158 = vset.pattern.permute.xlu0 0
  %1159 = vperm.xlu0 %1158, %v1025
  %v1160 = vpop.permute.xlu0 %1159
  %1163 = vset.pattern.permute.xlu0 0
  %1164 = vperm.xlu0 %1163, %v1026
  %v1165 = vpop.permute.xlu0 %1164
  %1168 = vset.pattern.permute.xlu0 0
  %1169 = vperm.xlu0 %1168, %v1027
  %v1170 = vpop.permute.xlu0 %1169
  %1173 = vset.pattern.permute.xlu0 0
  %1174 = vperm.xlu0 %1173, %v1028
  %v1175 = vpop.permute.xlu0 %1174
  %1178 = vset.pattern.permute.xlu0 0
  %1179 = vperm.xlu0 %1178, %v1029
  %v1180 = vpop.permute.xlu0 %1179
  %1183 = vset.pattern.permute.xlu0 0
  %1184 = vperm.xlu0 %1183, %v1030
  %v1185 = vpop.permute.xlu0 %1184
  %1188 = vset.pattern.permute.xlu0 0
  %1189 = vperm.xlu0 %1188, %v1031
  %v1190 = vpop.permute.xlu0 %1189
  %1193 = vset.pattern.permute.xlu0 0
  %1194 = vperm.xlu0 %1193, %v1032
  %v1195 = vpop.permute.xlu0 %1194
  %1198 = vset.pattern.permute.xlu0 0
  %1199 = vperm.xlu0 %1198, %v1033
  %v1200 = vpop.permute.xlu0 %1199
  %1203 = vset.pattern.permute.xlu0 0
  %1204 = vperm.xlu0 %1203, %v1034
  %v1205 = vpop.permute.xlu0 %1204
  %1208 = vset.pattern.permute.xlu0 0
  %1209 = vperm.xlu0 %1208, %v1035
  %v1210 = vpop.permute.xlu0 %1209
  %1213 = vset.pattern.permute.xlu0 0
  %1214 = vperm.xlu0 %1213, %v1036
  %v1215 = vpop.permute.xlu0 %1214
  %1218 = vset.pattern.permute.xlu0 0
  %1219 = vperm.xlu0 %1218, %v1037
  %v1220 = vpop.permute.xlu0 %1219
  %1223 = vset.pattern.permute.xlu0 0
  %1224 = vperm.xlu0 %1223, %v1038
  %v1225 = vpop.permute.xlu0 %1224
  %1228 = vset.pattern.permute.xlu0 0
  %1229 = vperm.xlu0 %1228, %v1039
  %v1230 = vpop.permute.xlu0 %1229
  %1233 = vset.pattern.permute.xlu0 0
  %1234 = vperm.xlu0 %1233, %v1040
  %v1235 = vpop.permute.xlu0 %1234
  %1238 = vset.pattern.permute.xlu0 0
  %1239 = vperm.xlu0 %1238, %v1041
  %v1240 = vpop.permute.xlu0 %1239
  %1243 = vset.pattern.permute.xlu0 0
  %1244 = vperm.xlu0 %1243, %v1042
  %v1245 = vpop.permute.xlu0 %1244
  %1248 = vset.pattern.permute.xlu0 0
  %1249 = vperm.xlu0 %1248, %v1043
  %v1250 = vpop.permute.xlu0 %1249
  %1253 = vset.pattern.permute.xlu0 0
  %1254 = vperm.xlu0 %1253, %v1044
  %v1255 = vpop.permute.xlu0 %1254
  %1258 = vset.pattern.permute.xlu0 0
  %1259 = vperm.xlu0 %1258, %v1045
  %v1260 = vpop.permute.xlu0 %1259
  %1263 = vset.pattern.permute.xlu0 0
  %1264 = vperm.xlu0 %1263, %v1046
  %v1265 = vpop.permute.xlu0 %1264
  %1268 = vset.pattern.permute.xlu0 0
  %1269 = vperm.xlu0 %1268, %v1047
  %v1270 = vpop.permute.xlu0 %1269
  %1273 = vset.pattern.permute.xlu0 0
  %1274 = vperm.xlu0 %1273, %v1048
  %v1275 = vpop.permute.xlu0 %1274
  %1278 = vset.pattern.permute.xlu0 0
  %1279 = vperm.xlu0 %1278, %v1049
  %v1280 = vpop.permute.xlu0 %1279
  %1283 = vset.pattern.permute.xlu0 0
  %1284 = vperm.xlu0 %1283, %v1050
  %v1285 = vpop.permute.xlu0 %1284
  %1288 = vset.pattern.permute.xlu0 0
  %1289 = vperm.xlu0 %1288, %v1051
  %v1290 = vpop.permute.xlu0 %1289
  %1293 = vset.pattern.permute.xlu0 0
  %1294 = vperm.xlu0 %1293, %v1052
  %v1295 = vpop.permute.xlu0 %1294
  %1298 = vset.pattern.permute.xlu0 0
  %1299 = vperm.xlu0 %1298, %v1053
  %v1300 = vpop.permute.xlu0 %1299
  %1303 = vset.pattern.permute.xlu0 0
  %1304 = vperm.xlu0 %1303, %v1054
  %v1305 = vpop.permute.xlu0 %1304
  %1308 = vset.pattern.permute.xlu0 0
  %1309 = vperm.xlu0 %1308, %v1055
  %v1310 = vpop.permute.xlu0 %1309
  %1313 = vset.pattern.permute.xlu0 0
  %1314 = vperm.xlu0 %1313, %v1056
  %v1315 = vpop.permute.xlu0 %1314
  %1318 = vset.pattern.permute.xlu0 0
  %1319 = vperm.xlu0 %1318, %v1057
  %v1320 = vpop.permute.xlu0 %1319
  %1323 = vset.pattern.permute.xlu0 0
  %1324 = vperm.xlu0 %1323, %v1058
  %v1325 = vpop.permute.xlu0 %1324
  %1328 = vset.pattern.permute.xlu0 0
  %1329 = vperm.xlu0 %1328, %v1059
  %v1330 = vpop.permute.xlu0 %1329
  %1333 = vset.pattern.permute.xlu0 0
  %1334 = vperm.xlu0 %1333, %v1060
  %v1335 = vpop.permute.xlu0 %1334
  %1338 = vset.pattern.permute.xlu0 0
  %1339 = vperm.xlu0 %1338, %v1061
  %v1340 = vpop.permute.xlu0 %1339
  %1343 = vset.pattern.permute.xlu0 0
  %1344 = vperm.xlu0 %1343, %v1062
  %v1345 = vpop.permute.xlu0 %1344
  %1348 = vset.pattern.permute.xlu0 0
  %1349 = vperm.xlu0 %1348, %v1063
  %v1350 = vpop.permute.xlu0 %1349
  %1353 = vset.pattern.permute.xlu0 0
  %1354 = vperm.xlu0 %1353, %v1064
  %v1355 = vpop.permute.xlu0 %1354
  %1358 = vset.pattern.permute.xlu0 0
  %1359 = vperm.xlu0 %1358, %v1065
  %v1360 = vpop.permute.xlu0 %1359
  %1363 = vset.pattern.permute.xlu0 0
  %1364 = vperm.xlu0 %1363, %v1066
  %v1365 = vpop.permute.xlu0 %1364
  %1368 = vset.pattern.permute.xlu0 0
  %1369 = vperm.xlu0 %1368, %v1067
  %v1370 = vpop.permute.xlu0 %1369
  %1373 = vset.pattern.permute.xlu0 0
  %1374 = vperm.xlu0 %1373, %v1068
  %v1375 = vpop.permute.xlu0 %1374
  %1378 = vset.pattern.permute.xlu0 0
  %1379 = vperm.xlu0 %1378, %v1069
  %v1380 = vpop.permute.xlu0 %1379
  %1383 = vset.pattern.permute.xlu0 0
  %1384 = vperm.xlu0 %1383, %v1070
  %v1385 = vpop.permute.xlu0 %1384
  %1388 = vset.pattern.permute.xlu0 0
  %1389 = vperm.xlu0 %1388, %v1071
  %v1390 = vpop.permute.xlu0 %1389
  %1393 = vset.pattern.permute.xlu0 0
  %1394 = vperm.xlu0 %1393, %v1072
  %v1395 = vpop.permute.xlu0 %1394
  %1398 = vset.pattern.permute.xlu0 0
  %1399 = vperm.xlu0 %1398, %v1073
  %v1400 = vpop.permute.xlu0 %1399
  %1403 = vset.pattern.permute.xlu0 0
  %1404 = vperm.xlu0 %1403, %v1074
  %v1405 = vpop.permute.xlu0 %1404
  %1408 = vset.pattern.permute.xlu0 0
  %1409 = vperm.xlu0 %1408, %v1075
  %v1410 = vpop.permute.xlu0 %1409
  %1413 = vset.pattern.permute.xlu0 0
  %1414 = vperm.xlu0 %1413, %v1076
  %v1415 = vpop.permute.xlu0 %1414
  %1418 = vset.pattern.permute.xlu0 0
  %1419 = vperm.xlu0 %1418, %v1077
  %v1420 = vpop.permute.xlu0 %1419
  %1423 = vset.pattern.permute.xlu0 0
  %1424 = vperm.xlu0 %1423, %v1078
  %v1425 = vpop.permute.xlu0 %1424
  %1428 = vset.pattern.permute.xlu0 0
  %1429 = vperm.xlu0 %1428, %v1079
  %v1430 = vpop.permute.xlu0 %1429
  %1433 = vset.pattern.permute.xlu0 0
  %1434 = vperm.xlu0 %1433, %v1080
  %v1435 = vpop.permute.xlu0 %1434
  %1438 = vset.pattern.permute.xlu0 0
  %1439 = vperm.xlu0 %1438, %v1081
  %v1440 = vpop.permute.xlu0 %1439
  %1443 = vset.pattern.permute.xlu0 0
  %1444 = vperm.xlu0 %1443, %v1082
  %v1445 = vpop.permute.xlu0 %1444
  %1448 = vset.pattern.permute.xlu0 0
  %1449 = vperm.xlu0 %1448, %v1083
  %v1450 = vpop.permute.xlu0 %1449
  %1453 = vset.pattern.permute.xlu0 0
  %1454 = vperm.xlu0 %1453, %v1084
  %v1455 = vpop.permute.xlu0 %1454
  %1458 = vset.pattern.permute.xlu0 0
  %1459 = vperm.xlu0 %1458, %v1085
  %v1460 = vpop.permute.xlu0 %1459
  %1463 = vset.pattern.permute.xlu0 0
  %1464 = vperm.xlu0 %1463, %v1086
  %v1465 = vpop.permute.xlu0 %1464
  %1468 = vset.pattern.permute.xlu0 0
  %1469 = vperm.xlu0 %1468, %v1087
  %v1470 = vpop.permute.xlu0 %1469
  %1473 = vset.pattern.permute.xlu0 0
  %1474 = vperm.xlu0 %1473, %v1088
  %v1475 = vpop.permute.xlu0 %1474
  %1478 = vset.pattern.permute.xlu0 0
  %1479 = vperm.xlu0 %1478, %v1089
  %v1480 = vpop.permute.xlu0 %1479
  %1483 = vset.pattern.permute.xlu0 0
  %1484 = vperm.xlu0 %1483, %v1090
  %v1485 = vpop.permute.xlu0 %1484
  %1488 = vset.pattern.permute.xlu0 0
  %1489 = vperm.xlu0 %1488, %v1091
  %v1490 = vpop.permute.xlu0 %1489
  %1493 = vset.pattern.permute.xlu0 0
  %1494 = vperm.xlu0 %1493, %v1092
  %v1495 = vpop.permute.xlu0 %1494
  %1498 = vset.pattern.permute.xlu0 0
  %1499 = vperm.xlu0 %1498, %v1093
  %v1500 = vpop.permute.xlu0 %1499
  %1503 = vset.pattern.permute.xlu0 0
  %1504 = vperm.xlu0 %1503, %v1094
  %v1505 = vpop.permute.xlu0 %1504
  %1508 = vset.pattern.permute.xlu0 0
  %1509 = vperm.xlu0 %1508, %v1095
  %v1510 = vpop.permute.xlu0 %1509
  %1513 = vset.pattern.permute.xlu0 0
  %1514 = vperm.xlu0 %1513, %v1096
  %v1515 = vpop.permute.xlu0 %1514
  %1518 = vset.pattern.permute.xlu0 0
  %1519 = vperm.xlu0 %1518, %v1097
  %v1520 = vpop.permute.xlu0 %1519
  %1523 = vset.pattern.permute.xlu0 0
  %1524 = vperm.xlu0 %1523, %v1098
  %v1525 = vpop.permute.xlu0 %1524
  %1528 = vset.pattern.permute.xlu0 0
  %1529 = vperm.xlu0 %1528, %v1099
  %v1530 = vpop.permute.xlu0 %1529
  %1533 = vset.pattern.permute.xlu0 0
  %1534 = vperm.xlu0 %1533, %v1100
  %v1535 = vpop.permute.xlu0 %1534
  %1538 = vset.pattern.permute.xlu0 0
  %1539 = vperm.xlu0 %1538, %v1101
  %v1540 = vpop.permute.xlu0 %1539
  %1543 = vset.pattern.permute.xlu0 0
  %1544 = vperm.xlu0 %1543, %v1102
  %v1545 = vpop.permute.xlu0 %1544
  %1548 = vset.pattern.permute.xlu0 0
  %1549 = vperm.xlu0 %1548, %v1103
  %v1550 = vpop.permute.xlu0 %1549
  %1553 = vset.pattern.permute.xlu0 0
  %1554 = vperm.xlu0 %1553, %v1104
  %v1555 = vpop.permute.xlu0 %1554
  %1558 = vset.pattern.permute.xlu0 0
  %1559 = vperm.xlu0 %1558, %v1105
  %v1560 = vpop.permute.xlu0 %1559
  %1563 = vset.pattern.permute.xlu0 0
  %1564 = vperm.xlu0 %1563, %v1106
  %v1565 = vpop.permute.xlu0 %1564
  %1568 = vset.pattern.permute.xlu0 0
  %1569 = vperm.xlu0 %1568, %v1107
  %v1570 = vpop.permute.xlu0 %1569
  %1573 = vset.pattern.permute.xlu0 0
  %1574 = vperm.xlu0 %1573, %v1108
  %v1575 = vpop.permute.xlu0 %1574
  %1578 = vset.pattern.permute.xlu0 0
  %1579 = vperm.xlu0 %1578, %v1109
  %v1580 = vpop.permute.xlu0 %1579
  %1583 = vset.pattern.permute.xlu0 0
  %1584 = vperm.xlu0 %1583, %v1110
  %v1585 = vpop.permute.xlu0 %1584
  %1588 = vset.pattern.permute.xlu0 0
  %1589 = vperm.xlu0 %1588, %v1111
  %v1590 = vpop.permute.xlu0 %1589
  %1593 = vset.pattern.permute.xlu0 0
  %1594 = vperm.xlu0 %1593, %v1112
  %v1595 = vpop.permute.xlu0 %1594
  %1598 = vset.pattern.permute.xlu0 0
  %1599 = vperm.xlu0 %1598, %v1113
  %v1600 = vpop.permute.xlu0 %1599
  %1603 = vset.pattern.permute.xlu0 0
  %1604 = vperm.xlu0 %1603, %v1114
  %v1605 = vpop.permute.xlu0 %1604
  %1608 = vset.pattern.permute.xlu0 0
  %1609 = vperm.xlu0 %1608, %v1115
  %v1610 = vpop.permute.xlu0 %1609
  %1613 = vset.pattern.permute.xlu0 0
  %1614 = vperm.xlu0 %1613, %v1116
  %v1615 = vpop.permute.xlu0 %1614
  %1618 = vset.pattern.permute.xlu0 0
  %1619 = vperm.xlu0 %1618, %v1117
  %v1620 = vpop.permute.xlu0 %1619
  %1623 = vset.pattern.permute.xlu0 0
  %1624 = vperm.xlu0 %1623, %v1118
  %v1625 = vpop.permute.xlu0 %1624
  %1628 = vset.pattern.permute.xlu0 0
  %1629 = vperm.xlu0 %1628, %v1119
  %v1630 = vpop.permute.xlu0 %1629
  %1633 = vset.pattern.permute.xlu0 0
  %1634 = vperm.xlu0 %1633, %v1120
  %v1635 = vpop.permute.xlu0 %1634
  %1638 = vset.pattern.permute.xlu0 0
  %1639 = vperm.xlu0 %1638, %v1121
  %v1640 = vpop.permute.xlu0 %1639
  %1643 = vset.pattern.permute.xlu0 0
  %1644 = vperm.xlu0 %1643, %v1122
  %v1645 = vpop.permute.xlu0 %1644
  %1648 = vset.pattern.permute.xlu0 0
  %1649 = vperm.xlu0 %1648, %v1123
  %v1650 = vpop.permute.xlu0 %1649
  %1653 = vset.pattern.permute.xlu0 0
  %1654 = vperm.xlu0 %1653, %v1124
  %v1655 = vpop.permute.xlu0 %1654
  %1658 = vset.pattern.permute.xlu0 0
  %1659 = vperm.xlu0 %1658, %v1125
  %v1660 = vpop.permute.xlu0 %1659
  %1663 = vset.pattern.permute.xlu0 0
  %1664 = vperm.xlu0 %1663, %v1126
  %v1665 = vpop.permute.xlu0 %1664
  %1668 = vset.pattern.permute.xlu0 0
  %1669 = vperm.xlu0 %1668, %v1127
  %v1670 = vpop.permute.xlu0 %1669
  %1673 = vset.pattern.permute.xlu0 0
  %1674 = vperm.xlu0 %1673, %v1128
  %v1675 = vpop.permute.xlu0 %1674
  %1678 = vset.pattern.permute.xlu0 0
  %1679 = vperm.xlu0 %1678, %v1129
  %v1680 = vpop.permute.xlu0 %1679
  %1683 = vset.pattern.permute.xlu0 0
  %1684 = vperm.xlu0 %1683, %v1130
  %v1685 = vpop.permute.xlu0 %1684
  %1688 = vset.pattern.permute.xlu0 0
  %1689 = vperm.xlu0 %1688, %v1131
  %v1690 = vpop.permute.xlu0 %1689
  %1693 = vset.pattern.permute.xlu0 0
  %1694 = vperm.xlu0 %1693, %v1132
  %v1695 = vpop.permute.xlu0 %1694
  %1698 = vset.pattern.permute.xlu0 0
  %1699 = vperm.xlu0 %1698, %v1133
  %v1700 = vpop.permute.xlu0 %1699
  %1703 = vset.pattern.permute.xlu0 0
  %1704 = vperm.xlu0 %1703, %v1134
  %v1705 = vpop.permute.xlu0 %1704
  %1708 = vset.pattern.permute.xlu0 0
  %1709 = vperm.xlu0 %1708, %v1135
  %v1710 = vpop.permute.xlu0 %1709
  %1713 = vset.pattern.permute.xlu0 0
  %1714 = vperm.xlu0 %1713, %v1136
  %v1715 = vpop.permute.xlu0 %1714
  %1718 = vset.pattern.permute.xlu0 0
  %1719 = vperm.xlu0 %1718, %v1137
  %v1720 = vpop.permute.xlu0 %1719
  %1723 = vset.pattern.permute.xlu0 0
  %1724 = vperm.xlu0 %1723, %v1138
  %v1725 = vpop.permute.xlu0 %1724
  %1728 = vset.pattern.permute.xlu0 0
  %1729 = vperm.xlu0 %1728, %v1139
  %v1730 = vpop.permute.xlu0 %1729
  %1733 = vset.pattern.permute.xlu0 0
  %1734 = vperm.xlu0 %1733, %v1140
  %v1735 = vpop.permute.xlu0 %1734
  %1738 = vset.pattern.permute.xlu0 0
  %1739 = vperm.xlu0 %1738, %v1141
  %v1740 = vpop.permute.xlu0 %1739
  %1743 = vset.pattern.permute.xlu0 0
  %1744 = vperm.xlu0 %1743, %v1142
  %v1745 = vpop.permute.xlu0 %1744
  %1748 = vset.pattern.permute.xlu0 0
  %1749 = vperm.xlu0 %1748, %v1143
  %v1750 = vpop.permute.xlu0 %1749
  %1753 = vset.pattern.permute.xlu0 0
  %1754 = vperm.xlu0 %1753, %v1144
  %v1755 = vpop.permute.xlu0 %1754
  %1758 = vset.pattern.permute.xlu0 0
  %1759 = vperm.xlu0 %1758, %v1145
  %v1760 = vpop.permute.xlu0 %1759
  %1763 = vset.pattern.permute.xlu0 0
  %1764 = vperm.xlu0 %1763, %v1146
  %v1765 = vpop.permute.xlu0 %1764
  %1768 = vset.pattern.permute.xlu0 0
  %1769 = vperm.xlu0 %1768, %v1147
  %v1770 = vpop.permute.xlu0 %1769
  %1773 = vset.pattern.permute.xlu0 0
  %1774 = vperm.xlu0 %1773, %v1148
  %v1775 = vpop.permute.xlu0 %1774
  %1778 = vset.pattern.permute.xlu0 0
  %1779 = vperm.xlu0 %1778, %v1149
  %v1780 = vpop.permute.xlu0 %1779
  %1783 = vset.pattern.permute.xlu0 0
  %1784 = vperm.xlu0 %1783, %v1150
  %v1785 = vpop.permute.xlu0 %1784
  %1788 = vset.pattern.permute.xlu0 0
  %1789 = vperm.xlu0 %1788, %v1151
  %v1790 = vpop.permute.xlu0 %1789
  %v1792 = vadd.f32 %v641, %v1155
  %v1793 = vadd.f32 %v644, %v1160
  %v1794 = vadd.f32 %v647, %v1165
  %v1795 = vadd.f32 %v650, %v1170
  %v1796 = vadd.f32 %v653, %v1175
  %v1797 = vadd.f32 %v656, %v1180
  %v1798 = vadd.f32 %v659, %v1185
  %v1799 = vadd.f32 %v662, %v1190
  %v1800 = vadd.f32 %v665, %v1195
  %v1801 = vadd.f32 %v668, %v1200
  %v1802 = vadd.f32 %v671, %v1205
  %v1803 = vadd.f32 %v674, %v1210
  %v1804 = vadd.f32 %v677, %v1215
  %v1805 = vadd.f32 %v680, %v1220
  %v1806 = vadd.f32 %v683, %v1225
  %v1807 = vadd.f32 %v686, %v1230
  %v1808 = vadd.f32 %v689, %v1235
  %v1809 = vadd.f32 %v692, %v1240
  %v1810 = vadd.f32 %v695, %v1245
  %v1811 = vadd.f32 %v698, %v1250
  %v1812 = vadd.f32 %v701, %v1255
  %v1813 = vadd.f32 %v704, %v1260
  %v1814 = vadd.f32 %v707, %v1265
  %v1815 = vadd.f32 %v710, %v1270
  %v1816 = vadd.f32 %v713, %v1275
  %v1817 = vadd.f32 %v716, %v1280
  %v1818 = vadd.f32 %v719, %v1285
  %v1819 = vadd.f32 %v722, %v1290
  %v1820 = vadd.f32 %v725, %v1295
  %v1821 = vadd.f32 %v728, %v1300
  %v1822 = vadd.f32 %v731, %v1305
  %v1823 = vadd.f32 %v734, %v1310
  %v1824 = vadd.f32 %v737, %v1315
  %v1825 = vadd.f32 %v740, %v1320
  %v1826 = vadd.f32 %v743, %v1325
  %v1827 = vadd.f32 %v746, %v1330
  %v1828 = vadd.f32 %v749, %v1335
  %v1829 = vadd.f32 %v752, %v1340
  %v1830 = vadd.f32 %v755, %v1345
  %v1831 = vadd.f32 %v758, %v1350
  %v1832 = vadd.f32 %v761, %v1355
  %v1833 = vadd.f32 %v764, %v1360
  %v1834 = vadd.f32 %v767, %v1365
  %v1835 = vadd.f32 %v770, %v1370
  %v1836 = vadd.f32 %v773, %v1375
  %v1837 = vadd.f32 %v776, %v1380
  %v1838 = vadd.f32 %v779, %v1385
  %v1839 = vadd.f32 %v782, %v1390
  %v1840 = vadd.f32 %v785, %v1395
  %v1841 = vadd.f32 %v788, %v1400
  %v1842 = vadd.f32 %v791, %v1405
  %v1843 = vadd.f32 %v794, %v1410
  %v1844 = vadd.f32 %v797, %v1415
  %v1845 = vadd.f32 %v800, %v1420
  %v1846 = vadd.f32 %v803, %v1425
  %v1847 = vadd.f32 %v806, %v1430
  %v1848 = vadd.f32 %v809, %v1435
  %v1849 = vadd.f32 %v812, %v1440
  %v1850 = vadd.f32 %v815, %v1445
  %v1851 = vadd.f32 %v818, %v1450
  %v1852 = vadd.f32 %v821, %v1455
  %v1853 = vadd.f32 %v824, %v1460
  %v1854 = vadd.f32 %v827, %v1465
  %v1855 = vadd.f32 %v830, %v1470
  %v1856 = vadd.f32 %v833, %v1475
  %v1857 = vadd.f32 %v836, %v1480
  %v1858 = vadd.f32 %v839, %v1485
  %v1859 = vadd.f32 %v842, %v1490
  %v1860 = vadd.f32 %v845, %v1495
  %v1861 = vadd.f32 %v848, %v1500
  %v1862 = vadd.f32 %v851, %v1505
  %v1863 = vadd.f32 %v854, %v1510
  %v1864 = vadd.f32 %v857, %v1515
  %v1865 = vadd.f32 %v860, %v1520
  %v1866 = vadd.f32 %v863, %v1525
  %v1867 = vadd.f32 %v866, %v1530
  %v1868 = vadd.f32 %v869, %v1535
  %v1869 = vadd.f32 %v872, %v1540
  %v1870 = vadd.f32 %v875, %v1545
  %v1871 = vadd.f32 %v878, %v1550
  %v1872 = vadd.f32 %v881, %v1555
  %v1873 = vadd.f32 %v884, %v1560
  %v1874 = vadd.f32 %v887, %v1565
  %v1875 = vadd.f32 %v890, %v1570
  %v1876 = vadd.f32 %v893, %v1575
  %v1877 = vadd.f32 %v896, %v1580
  %v1878 = vadd.f32 %v899, %v1585
  %v1879 = vadd.f32 %v902, %v1590
  %v1880 = vadd.f32 %v905, %v1595
  %v1881 = vadd.f32 %v908, %v1600
  %v1882 = vadd.f32 %v911, %v1605
  %v1883 = vadd.f32 %v914, %v1610
  %v1884 = vadd.f32 %v917, %v1615
  %v1885 = vadd.f32 %v920, %v1620
  %v1886 = vadd.f32 %v923, %v1625
  %v1887 = vadd.f32 %v926, %v1630
  %v1888 = vadd.f32 %v929, %v1635
  %v1889 = vadd.f32 %v932, %v1640
  %v1890 = vadd.f32 %v935, %v1645
  %v1891 = vadd.f32 %v938, %v1650
  %v1892 = vadd.f32 %v941, %v1655
  %v1893 = vadd.f32 %v944, %v1660
  %v1894 = vadd.f32 %v947, %v1665
  %v1895 = vadd.f32 %v950, %v1670
  %v1896 = vadd.f32 %v953, %v1675
  %v1897 = vadd.f32 %v956, %v1680
  %v1898 = vadd.f32 %v959, %v1685
  %v1899 = vadd.f32 %v962, %v1690
  %v1900 = vadd.f32 %v965, %v1695
  %v1901 = vadd.f32 %v968, %v1700
  %v1902 = vadd.f32 %v971, %v1705
  %v1903 = vadd.f32 %v974, %v1710
  %v1904 = vadd.f32 %v977, %v1715
  %v1905 = vadd.f32 %v980, %v1720
  %v1906 = vadd.f32 %v983, %v1725
  %v1907 = vadd.f32 %v986, %v1730
  %v1908 = vadd.f32 %v989, %v1735
  %v1909 = vadd.f32 %v992, %v1740
  %v1910 = vadd.f32 %v995, %v1745
  %v1911 = vadd.f32 %v998, %v1750
  %v1912 = vadd.f32 %v1001, %v1755
  %v1913 = vadd.f32 %v1004, %v1760
  %v1914 = vadd.f32 %v1007, %v1765
  %v1915 = vadd.f32 %v1010, %v1770
  %v1916 = vadd.f32 %v1013, %v1775
  %v1917 = vadd.f32 %v1016, %v1780
  %v1918 = vadd.f32 %v1019, %v1785
  %v1919 = vadd.f32 %v1022, %v1790
  %v1920 = vmax.f32 %v1792, %v1793
  %v1921 = vmax.f32 %v1920, %v1794
  %v1922 = vmax.f32 %v1921, %v1795
  %v1923 = vrot.slane %v1922, 4
  %v1924 = vmax.f32 %v1922, %v1923
  %v1925 = vrot.slane %v1924, 2
  %v1926 = vmax.f32 %v1924, %v1925
  %v1927 = vrot.slane %v1926, 1
  %v1928 = vmax.f32 %v1926, %v1927
  %v1929 = vmax.f32 %v1796, %v1797
  %v1930 = vmax.f32 %v1929, %v1798
  %v1931 = vmax.f32 %v1930, %v1799
  %v1932 = vrot.slane %v1931, 4
  %v1933 = vmax.f32 %v1931, %v1932
  %v1934 = vrot.slane %v1933, 2
  %v1935 = vmax.f32 %v1933, %v1934
  %v1936 = vrot.slane %v1935, 1
  %v1937 = vmax.f32 %v1935, %v1936
  %v1938 = vmax.f32 %v1800, %v1801
  %v1939 = vmax.f32 %v1938, %v1802
  %v1940 = vmax.f32 %v1939, %v1803
  %v1941 = vrot.slane %v1940, 4
  %v1942 = vmax.f32 %v1940, %v1941
  %v1943 = vrot.slane %v1942, 2
  %v1944 = vmax.f32 %v1942, %v1943
  %v1945 = vrot.slane %v1944, 1
  %v1946 = vmax.f32 %v1944, %v1945
  %v1947 = vmax.f32 %v1804, %v1805
  %v1948 = vmax.f32 %v1947, %v1806
  %v1949 = vmax.f32 %v1948, %v1807
  %v1950 = vrot.slane %v1949, 4
  %v1951 = vmax.f32 %v1949, %v1950
  %v1952 = vrot.slane %v1951, 2
  %v1953 = vmax.f32 %v1951, %v1952
  %v1954 = vrot.slane %v1953, 1
  %v1955 = vmax.f32 %v1953, %v1954
  %v1956 = vmax.f32 %v1808, %v1809
  %v1957 = vmax.f32 %v1956, %v1810
  %v1958 = vmax.f32 %v1957, %v1811
  %v1959 = vrot.slane %v1958, 4
  %v1960 = vmax.f32 %v1958, %v1959
  %v1961 = vrot.slane %v1960, 2
  %v1962 = vmax.f32 %v1960, %v1961
  %v1963 = vrot.slane %v1962, 1
  %v1964 = vmax.f32 %v1962, %v1963
  %v1965 = vmax.f32 %v1812, %v1813
  %v1966 = vmax.f32 %v1965, %v1814
  %v1967 = vmax.f32 %v1966, %v1815
  %v1968 = vrot.slane %v1967, 4
  %v1969 = vmax.f32 %v1967, %v1968
  %v1970 = vrot.slane %v1969, 2
  %v1971 = vmax.f32 %v1969, %v1970
  %v1972 = vrot.slane %v1971, 1
  %v1973 = vmax.f32 %v1971, %v1972
  %v1974 = vmax.f32 %v1816, %v1817
  %v1975 = vmax.f32 %v1974, %v1818
  %v1976 = vmax.f32 %v1975, %v1819
  %v1977 = vrot.slane %v1976, 4
  %v1978 = vmax.f32 %v1976, %v1977
  %v1979 = vrot.slane %v1978, 2
  %v1980 = vmax.f32 %v1978, %v1979
  %v1981 = vrot.slane %v1980, 1
  %v1982 = vmax.f32 %v1980, %v1981
  %v1983 = vmax.f32 %v1820, %v1821
  %v1984 = vmax.f32 %v1983, %v1822
  %v1985 = vmax.f32 %v1984, %v1823
  %v1986 = vrot.slane %v1985, 4
  %v1987 = vmax.f32 %v1985, %v1986
  %v1988 = vrot.slane %v1987, 2
  %v1989 = vmax.f32 %v1987, %v1988
  %v1990 = vrot.slane %v1989, 1
  %v1991 = vmax.f32 %v1989, %v1990
  %v1992 = vmax.f32 %v1824, %v1825
  %v1993 = vmax.f32 %v1992, %v1826
  %v1994 = vmax.f32 %v1993, %v1827
  %v1995 = vrot.slane %v1994, 4
  %v1996 = vmax.f32 %v1994, %v1995
  %v1997 = vrot.slane %v1996, 2
  %v1998 = vmax.f32 %v1996, %v1997
  %v1999 = vrot.slane %v1998, 1
  %v2000 = vmax.f32 %v1998, %v1999
  %v2001 = vmax.f32 %v1828, %v1829
  %v2002 = vmax.f32 %v2001, %v1830
  %v2003 = vmax.f32 %v2002, %v1831
  %v2004 = vrot.slane %v2003, 4
  %v2005 = vmax.f32 %v2003, %v2004
  %v2006 = vrot.slane %v2005, 2
  %v2007 = vmax.f32 %v2005, %v2006
  %v2008 = vrot.slane %v2007, 1
  %v2009 = vmax.f32 %v2007, %v2008
  %v2010 = vmax.f32 %v1832, %v1833
  %v2011 = vmax.f32 %v2010, %v1834
  %v2012 = vmax.f32 %v2011, %v1835
  %v2013 = vrot.slane %v2012, 4
  %v2014 = vmax.f32 %v2012, %v2013
  %v2015 = vrot.slane %v2014, 2
  %v2016 = vmax.f32 %v2014, %v2015
  %v2017 = vrot.slane %v2016, 1
  %v2018 = vmax.f32 %v2016, %v2017
  %v2019 = vmax.f32 %v1836, %v1837
  %v2020 = vmax.f32 %v2019, %v1838
  %v2021 = vmax.f32 %v2020, %v1839
  %v2022 = vrot.slane %v2021, 4
  %v2023 = vmax.f32 %v2021, %v2022
  %v2024 = vrot.slane %v2023, 2
  %v2025 = vmax.f32 %v2023, %v2024
  %v2026 = vrot.slane %v2025, 1
  %v2027 = vmax.f32 %v2025, %v2026
  %v2028 = vmax.f32 %v1840, %v1841
  %v2029 = vmax.f32 %v2028, %v1842
  %v2030 = vmax.f32 %v2029, %v1843
  %v2031 = vrot.slane %v2030, 4
  %v2032 = vmax.f32 %v2030, %v2031
  %v2033 = vrot.slane %v2032, 2
  %v2034 = vmax.f32 %v2032, %v2033
  %v2035 = vrot.slane %v2034, 1
  %v2036 = vmax.f32 %v2034, %v2035
  %v2037 = vmax.f32 %v1844, %v1845
  %v2038 = vmax.f32 %v2037, %v1846
  %v2039 = vmax.f32 %v2038, %v1847
  %v2040 = vrot.slane %v2039, 4
  %v2041 = vmax.f32 %v2039, %v2040
  %v2042 = vrot.slane %v2041, 2
  %v2043 = vmax.f32 %v2041, %v2042
  %v2044 = vrot.slane %v2043, 1
  %v2045 = vmax.f32 %v2043, %v2044
  %v2046 = vmax.f32 %v1848, %v1849
  %v2047 = vmax.f32 %v2046, %v1850
  %v2048 = vmax.f32 %v2047, %v1851
  %v2049 = vrot.slane %v2048, 4
  %v2050 = vmax.f32 %v2048, %v2049
  %v2051 = vrot.slane %v2050, 2
  %v2052 = vmax.f32 %v2050, %v2051
  %v2053 = vrot.slane %v2052, 1
  %v2054 = vmax.f32 %v2052, %v2053
  %v2055 = vmax.f32 %v1852, %v1853
  %v2056 = vmax.f32 %v2055, %v1854
  %v2057 = vmax.f32 %v2056, %v1855
  %v2058 = vrot.slane %v2057, 4
  %v2059 = vmax.f32 %v2057, %v2058
  %v2060 = vrot.slane %v2059, 2
  %v2061 = vmax.f32 %v2059, %v2060
  %v2062 = vrot.slane %v2061, 1
  %v2063 = vmax.f32 %v2061, %v2062
  %v2064 = vmax.f32 %v1856, %v1857
  %v2065 = vmax.f32 %v2064, %v1858
  %v2066 = vmax.f32 %v2065, %v1859
  %v2067 = vrot.slane %v2066, 4
  %v2068 = vmax.f32 %v2066, %v2067
  %v2069 = vrot.slane %v2068, 2
  %v2070 = vmax.f32 %v2068, %v2069
  %v2071 = vrot.slane %v2070, 1
  %v2072 = vmax.f32 %v2070, %v2071
  %v2073 = vmax.f32 %v1860, %v1861
  %v2074 = vmax.f32 %v2073, %v1862
  %v2075 = vmax.f32 %v2074, %v1863
  %v2076 = vrot.slane %v2075, 4
  %v2077 = vmax.f32 %v2075, %v2076
  %v2078 = vrot.slane %v2077, 2
  %v2079 = vmax.f32 %v2077, %v2078
  %v2080 = vrot.slane %v2079, 1
  %v2081 = vmax.f32 %v2079, %v2080
  %v2082 = vmax.f32 %v1864, %v1865
  %v2083 = vmax.f32 %v2082, %v1866
  %v2084 = vmax.f32 %v2083, %v1867
  %v2085 = vrot.slane %v2084, 4
  %v2086 = vmax.f32 %v2084, %v2085
  %v2087 = vrot.slane %v2086, 2
  %v2088 = vmax.f32 %v2086, %v2087
  %v2089 = vrot.slane %v2088, 1
  %v2090 = vmax.f32 %v2088, %v2089
  %v2091 = vmax.f32 %v1868, %v1869
  %v2092 = vmax.f32 %v2091, %v1870
  %v2093 = vmax.f32 %v2092, %v1871
  %v2094 = vrot.slane %v2093, 4
  %v2095 = vmax.f32 %v2093, %v2094
  %v2096 = vrot.slane %v2095, 2
  %v2097 = vmax.f32 %v2095, %v2096
  %v2098 = vrot.slane %v2097, 1
  %v2099 = vmax.f32 %v2097, %v2098
  %v2100 = vmax.f32 %v1872, %v1873
  %v2101 = vmax.f32 %v2100, %v1874
  %v2102 = vmax.f32 %v2101, %v1875
  %v2103 = vrot.slane %v2102, 4
  %v2104 = vmax.f32 %v2102, %v2103
  %v2105 = vrot.slane %v2104, 2
  %v2106 = vmax.f32 %v2104, %v2105
  %v2107 = vrot.slane %v2106, 1
  %v2108 = vmax.f32 %v2106, %v2107
  %v2109 = vmax.f32 %v1876, %v1877
  %v2110 = vmax.f32 %v2109, %v1878
  %v2111 = vmax.f32 %v2110, %v1879
  %v2112 = vrot.slane %v2111, 4
  %v2113 = vmax.f32 %v2111, %v2112
  %v2114 = vrot.slane %v2113, 2
  %v2115 = vmax.f32 %v2113, %v2114
  %v2116 = vrot.slane %v2115, 1
  %v2117 = vmax.f32 %v2115, %v2116
  %v2118 = vmax.f32 %v1880, %v1881
  %v2119 = vmax.f32 %v2118, %v1882
  %v2120 = vmax.f32 %v2119, %v1883
  %v2121 = vrot.slane %v2120, 4
  %v2122 = vmax.f32 %v2120, %v2121
  %v2123 = vrot.slane %v2122, 2
  %v2124 = vmax.f32 %v2122, %v2123
  %v2125 = vrot.slane %v2124, 1
  %v2126 = vmax.f32 %v2124, %v2125
  %v2127 = vmax.f32 %v1884, %v1885
  %v2128 = vmax.f32 %v2127, %v1886
  %v2129 = vmax.f32 %v2128, %v1887
  %v2130 = vrot.slane %v2129, 4
  %v2131 = vmax.f32 %v2129, %v2130
  %v2132 = vrot.slane %v2131, 2
  %v2133 = vmax.f32 %v2131, %v2132
  %v2134 = vrot.slane %v2133, 1
  %v2135 = vmax.f32 %v2133, %v2134
  %v2136 = vmax.f32 %v1888, %v1889
  %v2137 = vmax.f32 %v2136, %v1890
  %v2138 = vmax.f32 %v2137, %v1891
  %v2139 = vrot.slane %v2138, 4
  %v2140 = vmax.f32 %v2138, %v2139
  %v2141 = vrot.slane %v2140, 2
  %v2142 = vmax.f32 %v2140, %v2141
  %v2143 = vrot.slane %v2142, 1
  %v2144 = vmax.f32 %v2142, %v2143
  %v2145 = vmax.f32 %v1892, %v1893
  %v2146 = vmax.f32 %v2145, %v1894
  %v2147 = vmax.f32 %v2146, %v1895
  %v2148 = vrot.slane %v2147, 4
  %v2149 = vmax.f32 %v2147, %v2148
  %v2150 = vrot.slane %v2149, 2
  %v2151 = vmax.f32 %v2149, %v2150
  %v2152 = vrot.slane %v2151, 1
  %v2153 = vmax.f32 %v2151, %v2152
  %v2154 = vmax.f32 %v1896, %v1897
  %v2155 = vmax.f32 %v2154, %v1898
  %v2156 = vmax.f32 %v2155, %v1899
  %v2157 = vrot.slane %v2156, 4
  %v2158 = vmax.f32 %v2156, %v2157
  %v2159 = vrot.slane %v2158, 2
  %v2160 = vmax.f32 %v2158, %v2159
  %v2161 = vrot.slane %v2160, 1
  %v2162 = vmax.f32 %v2160, %v2161
  %v2163 = vmax.f32 %v1900, %v1901
  %v2164 = vmax.f32 %v2163, %v1902
  %v2165 = vmax.f32 %v2164, %v1903
  %v2166 = vrot.slane %v2165, 4
  %v2167 = vmax.f32 %v2165, %v2166
  %v2168 = vrot.slane %v2167, 2
  %v2169 = vmax.f32 %v2167, %v2168
  %v2170 = vrot.slane %v2169, 1
  %v2171 = vmax.f32 %v2169, %v2170
  %v2172 = vmax.f32 %v1904, %v1905
  %v2173 = vmax.f32 %v2172, %v1906
  %v2174 = vmax.f32 %v2173, %v1907
  %v2175 = vrot.slane %v2174, 4
  %v2176 = vmax.f32 %v2174, %v2175
  %v2177 = vrot.slane %v2176, 2
  %v2178 = vmax.f32 %v2176, %v2177
  %v2179 = vrot.slane %v2178, 1
  %v2180 = vmax.f32 %v2178, %v2179
  %v2181 = vmax.f32 %v1908, %v1909
  %v2182 = vmax.f32 %v2181, %v1910
  %v2183 = vmax.f32 %v2182, %v1911
  %v2184 = vrot.slane %v2183, 4
  %v2185 = vmax.f32 %v2183, %v2184
  %v2186 = vrot.slane %v2185, 2
  %v2187 = vmax.f32 %v2185, %v2186
  %v2188 = vrot.slane %v2187, 1
  %v2189 = vmax.f32 %v2187, %v2188
  %v2190 = vmax.f32 %v1912, %v1913
  %v2191 = vmax.f32 %v2190, %v1914
  %v2192 = vmax.f32 %v2191, %v1915
  %v2193 = vrot.slane %v2192, 4
  %v2194 = vmax.f32 %v2192, %v2193
  %v2195 = vrot.slane %v2194, 2
  %v2196 = vmax.f32 %v2194, %v2195
  %v2197 = vrot.slane %v2196, 1
  %v2198 = vmax.f32 %v2196, %v2197
  %v2199 = vmax.f32 %v1916, %v1917
  %v2200 = vmax.f32 %v2199, %v1918
  %v2201 = vmax.f32 %v2200, %v1919
  %v2202 = vrot.slane %v2201, 4
  %v2203 = vmax.f32 %v2201, %v2202
  %v2204 = vrot.slane %v2203, 2
  %v2205 = vmax.f32 %v2203, %v2204
  %v2206 = vrot.slane %v2205, 1
  %v2207 = vmax.f32 %v2205, %v2206
  %v2208 = vsub.f32 %v1792, %v1928
  %v2209 = vsub.f32 %v1793, %v1928
  %v2210 = vsub.f32 %v1794, %v1928
  %v2211 = vsub.f32 %v1795, %v1928
  %v2212 = vsub.f32 %v1796, %v1937
  %v2213 = vsub.f32 %v1797, %v1937
  %v2214 = vsub.f32 %v1798, %v1937
  %v2215 = vsub.f32 %v1799, %v1937
  %v2216 = vsub.f32 %v1800, %v1946
  %v2217 = vsub.f32 %v1801, %v1946
  %v2218 = vsub.f32 %v1802, %v1946
  %v2219 = vsub.f32 %v1803, %v1946
  %v2220 = vsub.f32 %v1804, %v1955
  %v2221 = vsub.f32 %v1805, %v1955
  %v2222 = vsub.f32 %v1806, %v1955
  %v2223 = vsub.f32 %v1807, %v1955
  %v2224 = vsub.f32 %v1808, %v1964
  %v2225 = vsub.f32 %v1809, %v1964
  %v2226 = vsub.f32 %v1810, %v1964
  %v2227 = vsub.f32 %v1811, %v1964
  %v2228 = vsub.f32 %v1812, %v1973
  %v2229 = vsub.f32 %v1813, %v1973
  %v2230 = vsub.f32 %v1814, %v1973
  %v2231 = vsub.f32 %v1815, %v1973
  %v2232 = vsub.f32 %v1816, %v1982
  %v2233 = vsub.f32 %v1817, %v1982
  %v2234 = vsub.f32 %v1818, %v1982
  %v2235 = vsub.f32 %v1819, %v1982
  %v2236 = vsub.f32 %v1820, %v1991
  %v2237 = vsub.f32 %v1821, %v1991
  %v2238 = vsub.f32 %v1822, %v1991
  %v2239 = vsub.f32 %v1823, %v1991
  %v2240 = vsub.f32 %v1824, %v2000
  %v2241 = vsub.f32 %v1825, %v2000
  %v2242 = vsub.f32 %v1826, %v2000
  %v2243 = vsub.f32 %v1827, %v2000
  %v2244 = vsub.f32 %v1828, %v2009
  %v2245 = vsub.f32 %v1829, %v2009
  %v2246 = vsub.f32 %v1830, %v2009
  %v2247 = vsub.f32 %v1831, %v2009
  %v2248 = vsub.f32 %v1832, %v2018
  %v2249 = vsub.f32 %v1833, %v2018
  %v2250 = vsub.f32 %v1834, %v2018
  %v2251 = vsub.f32 %v1835, %v2018
  %v2252 = vsub.f32 %v1836, %v2027
  %v2253 = vsub.f32 %v1837, %v2027
  %v2254 = vsub.f32 %v1838, %v2027
  %v2255 = vsub.f32 %v1839, %v2027
  %v2256 = vsub.f32 %v1840, %v2036
  %v2257 = vsub.f32 %v1841, %v2036
  %v2258 = vsub.f32 %v1842, %v2036
  %v2259 = vsub.f32 %v1843, %v2036
  %v2260 = vsub.f32 %v1844, %v2045
  %v2261 = vsub.f32 %v1845, %v2045
  %v2262 = vsub.f32 %v1846, %v2045
  %v2263 = vsub.f32 %v1847, %v2045
  %v2264 = vsub.f32 %v1848, %v2054
  %v2265 = vsub.f32 %v1849, %v2054
  %v2266 = vsub.f32 %v1850, %v2054
  %v2267 = vsub.f32 %v1851, %v2054
  %v2268 = vsub.f32 %v1852, %v2063
  %v2269 = vsub.f32 %v1853, %v2063
  %v2270 = vsub.f32 %v1854, %v2063
  %v2271 = vsub.f32 %v1855, %v2063
  %v2272 = vsub.f32 %v1856, %v2072
  %v2273 = vsub.f32 %v1857, %v2072
  %v2274 = vsub.f32 %v1858, %v2072
  %v2275 = vsub.f32 %v1859, %v2072
  %v2276 = vsub.f32 %v1860, %v2081
  %v2277 = vsub.f32 %v1861, %v2081
  %v2278 = vsub.f32 %v1862, %v2081
  %v2279 = vsub.f32 %v1863, %v2081
  %v2280 = vsub.f32 %v1864, %v2090
  %v2281 = vsub.f32 %v1865, %v2090
  %v2282 = vsub.f32 %v1866, %v2090
  %v2283 = vsub.f32 %v1867, %v2090
  %v2284 = vsub.f32 %v1868, %v2099
  %v2285 = vsub.f32 %v1869, %v2099
  %v2286 = vsub.f32 %v1870, %v2099
  %v2287 = vsub.f32 %v1871, %v2099
  %v2288 = vsub.f32 %v1872, %v2108
  %v2289 = vsub.f32 %v1873, %v2108
  %v2290 = vsub.f32 %v1874, %v2108
  %v2291 = vsub.f32 %v1875, %v2108
  %v2292 = vsub.f32 %v1876, %v2117
  %v2293 = vsub.f32 %v1877, %v2117
  %v2294 = vsub.f32 %v1878, %v2117
  %v2295 = vsub.f32 %v1879, %v2117
  %v2296 = vsub.f32 %v1880, %v2126
  %v2297 = vsub.f32 %v1881, %v2126
  %v2298 = vsub.f32 %v1882, %v2126
  %v2299 = vsub.f32 %v1883, %v2126
  %v2300 = vsub.f32 %v1884, %v2135
  %v2301 = vsub.f32 %v1885, %v2135
  %v2302 = vsub.f32 %v1886, %v2135
  %v2303 = vsub.f32 %v1887, %v2135
  %v2304 = vsub.f32 %v1888, %v2144
  %v2305 = vsub.f32 %v1889, %v2144
  %v2306 = vsub.f32 %v1890, %v2144
  %v2307 = vsub.f32 %v1891, %v2144
  %v2308 = vsub.f32 %v1892, %v2153
  %v2309 = vsub.f32 %v1893, %v2153
  %v2310 = vsub.f32 %v1894, %v2153
  %v2311 = vsub.f32 %v1895, %v2153
  %v2312 = vsub.f32 %v1896, %v2162
  %v2313 = vsub.f32 %v1897, %v2162
  %v2314 = vsub.f32 %v1898, %v2162
  %v2315 = vsub.f32 %v1899, %v2162
  %v2316 = vsub.f32 %v1900, %v2171
  %v2317 = vsub.f32 %v1901, %v2171
  %v2318 = vsub.f32 %v1902, %v2171
  %v2319 = vsub.f32 %v1903, %v2171
  %v2320 = vsub.f32 %v1904, %v2180
  %v2321 = vsub.f32 %v1905, %v2180
  %v2322 = vsub.f32 %v1906, %v2180
  %v2323 = vsub.f32 %v1907, %v2180
  %v2324 = vsub.f32 %v1908, %v2189
  %v2325 = vsub.f32 %v1909, %v2189
  %v2326 = vsub.f32 %v1910, %v2189
  %v2327 = vsub.f32 %v1911, %v2189
  %v2328 = vsub.f32 %v1912, %v2198
  %v2329 = vsub.f32 %v1913, %v2198
  %v2330 = vsub.f32 %v1914, %v2198
  %v2331 = vsub.f32 %v1915, %v2198
  %v2332 = vsub.f32 %v1916, %v2207
  %v2333 = vsub.f32 %v1917, %v2207
  %v2334 = vsub.f32 %v1918, %v2207
  %v2335 = vsub.f32 %v1919, %v2207
  %v2336 = vmul.f32 %v2208, 1.442695
  %v2337 = vpow.pop %v2336
  %v2338 = vmul.f32 %v2209, 1.442695
  %v2339 = vpow.pop %v2338
  %v2340 = vmul.f32 %v2210, 1.442695
  %v2341 = vpow.pop %v2340
  %v2342 = vmul.f32 %v2211, 1.442695
  %v2343 = vpow.pop %v2342
  %v2344 = vmul.f32 %v2212, 1.442695
  %v2345 = vpow.pop %v2344
  %v2346 = vmul.f32 %v2213, 1.442695
  %v2347 = vpow.pop %v2346
  %v2348 = vmul.f32 %v2214, 1.442695
  %v2349 = vpow.pop %v2348
  %v2350 = vmul.f32 %v2215, 1.442695
  %v2351 = vpow.pop %v2350
  %v2352 = vmul.f32 %v2216, 1.442695
  %v2353 = vpow.pop %v2352
  %v2354 = vmul.f32 %v2217, 1.442695
  %v2355 = vpow.pop %v2354
  %v2356 = vmul.f32 %v2218, 1.442695
  %v2357 = vpow.pop %v2356
  %v2358 = vmul.f32 %v2219, 1.442695
  %v2359 = vpow.pop %v2358
  %v2360 = vmul.f32 %v2220, 1.442695
  %v2361 = vpow.pop %v2360
  %v2362 = vmul.f32 %v2221, 1.442695
  %v2363 = vpow.pop %v2362
  %v2364 = vmul.f32 %v2222, 1.442695
  %v2365 = vpow.pop %v2364
  %v2366 = vmul.f32 %v2223, 1.442695
  %v2367 = vpow.pop %v2366
  %v2368 = vmul.f32 %v2224, 1.442695
  %v2369 = vpow.pop %v2368
  %v2370 = vmul.f32 %v2225, 1.442695
  %v2371 = vpow.pop %v2370
  %v2372 = vmul.f32 %v2226, 1.442695
  %v2373 = vpow.pop %v2372
  %v2374 = vmul.f32 %v2227, 1.442695
  %v2375 = vpow.pop %v2374
  %v2376 = vmul.f32 %v2228, 1.442695
  %v2377 = vpow.pop %v2376
  %v2378 = vmul.f32 %v2229, 1.442695
  %v2379 = vpow.pop %v2378
  %v2380 = vmul.f32 %v2230, 1.442695
  %v2381 = vpow.pop %v2380
  %v2382 = vmul.f32 %v2231, 1.442695
  %v2383 = vpow.pop %v2382
  %v2384 = vmul.f32 %v2232, 1.442695
  %v2385 = vpow.pop %v2384
  %v2386 = vmul.f32 %v2233, 1.442695
  %v2387 = vpow.pop %v2386
  %v2388 = vmul.f32 %v2234, 1.442695
  %v2389 = vpow.pop %v2388
  %v2390 = vmul.f32 %v2235, 1.442695
  %v2391 = vpow.pop %v2390
  %v2392 = vmul.f32 %v2236, 1.442695
  %v2393 = vpow.pop %v2392
  %v2394 = vmul.f32 %v2237, 1.442695
  %v2395 = vpow.pop %v2394
  %v2396 = vmul.f32 %v2238, 1.442695
  %v2397 = vpow.pop %v2396
  %v2398 = vmul.f32 %v2239, 1.442695
  %v2399 = vpow.pop %v2398
  %v2400 = vmul.f32 %v2240, 1.442695
  %v2401 = vpow.pop %v2400
  %v2402 = vmul.f32 %v2241, 1.442695
  %v2403 = vpow.pop %v2402
  %v2404 = vmul.f32 %v2242, 1.442695
  %v2405 = vpow.pop %v2404
  %v2406 = vmul.f32 %v2243, 1.442695
  %v2407 = vpow.pop %v2406
  %v2408 = vmul.f32 %v2244, 1.442695
  %v2409 = vpow.pop %v2408
  %v2410 = vmul.f32 %v2245, 1.442695
  %v2411 = vpow.pop %v2410
  %v2412 = vmul.f32 %v2246, 1.442695
  %v2413 = vpow.pop %v2412
  %v2414 = vmul.f32 %v2247, 1.442695
  %v2415 = vpow.pop %v2414
  %v2416 = vmul.f32 %v2248, 1.442695
  %v2417 = vpow.pop %v2416
  %v2418 = vmul.f32 %v2249, 1.442695
  %v2419 = vpow.pop %v2418
  %v2420 = vmul.f32 %v2250, 1.442695
  %v2421 = vpow.pop %v2420
  %v2422 = vmul.f32 %v2251, 1.442695
  %v2423 = vpow.pop %v2422
  %v2424 = vmul.f32 %v2252, 1.442695
  %v2425 = vpow.pop %v2424
  %v2426 = vmul.f32 %v2253, 1.442695
  %v2427 = vpow.pop %v2426
  %v2428 = vmul.f32 %v2254, 1.442695
  %v2429 = vpow.pop %v2428
  %v2430 = vmul.f32 %v2255, 1.442695
  %v2431 = vpow.pop %v2430
  %v2432 = vmul.f32 %v2256, 1.442695
  %v2433 = vpow.pop %v2432
  %v2434 = vmul.f32 %v2257, 1.442695
  %v2435 = vpow.pop %v2434
  %v2436 = vmul.f32 %v2258, 1.442695
  %v2437 = vpow.pop %v2436
  %v2438 = vmul.f32 %v2259, 1.442695
  %v2439 = vpow.pop %v2438
  %v2440 = vmul.f32 %v2260, 1.442695
  %v2441 = vpow.pop %v2440
  %v2442 = vmul.f32 %v2261, 1.442695
  %v2443 = vpow.pop %v2442
  %v2444 = vmul.f32 %v2262, 1.442695
  %v2445 = vpow.pop %v2444
  %v2446 = vmul.f32 %v2263, 1.442695
  %v2447 = vpow.pop %v2446
  %v2448 = vmul.f32 %v2264, 1.442695
  %v2449 = vpow.pop %v2448
  %v2450 = vmul.f32 %v2265, 1.442695
  %v2451 = vpow.pop %v2450
  %v2452 = vmul.f32 %v2266, 1.442695
  %v2453 = vpow.pop %v2452
  %v2454 = vmul.f32 %v2267, 1.442695
  %v2455 = vpow.pop %v2454
  %v2456 = vmul.f32 %v2268, 1.442695
  %v2457 = vpow.pop %v2456
  %v2458 = vmul.f32 %v2269, 1.442695
  %v2459 = vpow.pop %v2458
  %v2460 = vmul.f32 %v2270, 1.442695
  %v2461 = vpow.pop %v2460
  %v2462 = vmul.f32 %v2271, 1.442695
  %v2463 = vpow.pop %v2462
  %v2464 = vmul.f32 %v2272, 1.442695
  %v2465 = vpow.pop %v2464
  %v2466 = vmul.f32 %v2273, 1.442695
  %v2467 = vpow.pop %v2466
  %v2468 = vmul.f32 %v2274, 1.442695
  %v2469 = vpow.pop %v2468
  %v2470 = vmul.f32 %v2275, 1.442695
  %v2471 = vpow.pop %v2470
  %v2472 = vmul.f32 %v2276, 1.442695
  %v2473 = vpow.pop %v2472
  %v2474 = vmul.f32 %v2277, 1.442695
  %v2475 = vpow.pop %v2474
  %v2476 = vmul.f32 %v2278, 1.442695
  %v2477 = vpow.pop %v2476
  %v2478 = vmul.f32 %v2279, 1.442695
  %v2479 = vpow.pop %v2478
  %v2480 = vmul.f32 %v2280, 1.442695
  %v2481 = vpow.pop %v2480
  %v2482 = vmul.f32 %v2281, 1.442695
  %v2483 = vpow.pop %v2482
  %v2484 = vmul.f32 %v2282, 1.442695
  %v2485 = vpow.pop %v2484
  %v2486 = vmul.f32 %v2283, 1.442695
  %v2487 = vpow.pop %v2486
  %v2488 = vmul.f32 %v2284, 1.442695
  %v2489 = vpow.pop %v2488
  %v2490 = vmul.f32 %v2285, 1.442695
  %v2491 = vpow.pop %v2490
  %v2492 = vmul.f32 %v2286, 1.442695
  %v2493 = vpow.pop %v2492
  %v2494 = vmul.f32 %v2287, 1.442695
  %v2495 = vpow.pop %v2494
  %v2496 = vmul.f32 %v2288, 1.442695
  %v2497 = vpow.pop %v2496
  %v2498 = vmul.f32 %v2289, 1.442695
  %v2499 = vpow.pop %v2498
  %v2500 = vmul.f32 %v2290, 1.442695
  %v2501 = vpow.pop %v2500
  %v2502 = vmul.f32 %v2291, 1.442695
  %v2503 = vpow.pop %v2502
  %v2504 = vmul.f32 %v2292, 1.442695
  %v2505 = vpow.pop %v2504
  %v2506 = vmul.f32 %v2293, 1.442695
  %v2507 = vpow.pop %v2506
  %v2508 = vmul.f32 %v2294, 1.442695
  %v2509 = vpow.pop %v2508
  %v2510 = vmul.f32 %v2295, 1.442695
  %v2511 = vpow.pop %v2510
  %v2512 = vmul.f32 %v2296, 1.442695
  %v2513 = vpow.pop %v2512
  %v2514 = vmul.f32 %v2297, 1.442695
  %v2515 = vpow.pop %v2514
  %v2516 = vmul.f32 %v2298, 1.442695
  %v2517 = vpow.pop %v2516
  %v2518 = vmul.f32 %v2299, 1.442695
  %v2519 = vpow.pop %v2518
  %v2520 = vmul.f32 %v2300, 1.442695
  %v2521 = vpow.pop %v2520
  %v2522 = vmul.f32 %v2301, 1.442695
  %v2523 = vpow.pop %v2522
  %v2524 = vmul.f32 %v2302, 1.442695
  %v2525 = vpow.pop %v2524
  %v2526 = vmul.f32 %v2303, 1.442695
  %v2527 = vpow.pop %v2526
  %v2528 = vmul.f32 %v2304, 1.442695
  %v2529 = vpow.pop %v2528
  %v2530 = vmul.f32 %v2305, 1.442695
  %v2531 = vpow.pop %v2530
  %v2532 = vmul.f32 %v2306, 1.442695
  %v2533 = vpow.pop %v2532
  %v2534 = vmul.f32 %v2307, 1.442695
  %v2535 = vpow.pop %v2534
  %v2536 = vmul.f32 %v2308, 1.442695
  %v2537 = vpow.pop %v2536
  %v2538 = vmul.f32 %v2309, 1.442695
  %v2539 = vpow.pop %v2538
  %v2540 = vmul.f32 %v2310, 1.442695
  %v2541 = vpow.pop %v2540
  %v2542 = vmul.f32 %v2311, 1.442695
  %v2543 = vpow.pop %v2542
  %v2544 = vmul.f32 %v2312, 1.442695
  %v2545 = vpow.pop %v2544
  %v2546 = vmul.f32 %v2313, 1.442695
  %v2547 = vpow.pop %v2546
  %v2548 = vmul.f32 %v2314, 1.442695
  %v2549 = vpow.pop %v2548
  %v2550 = vmul.f32 %v2315, 1.442695
  %v2551 = vpow.pop %v2550
  %v2552 = vmul.f32 %v2316, 1.442695
  %v2553 = vpow.pop %v2552
  %v2554 = vmul.f32 %v2317, 1.442695
  %v2555 = vpow.pop %v2554
  %v2556 = vmul.f32 %v2318, 1.442695
  %v2557 = vpow.pop %v2556
  %v2558 = vmul.f32 %v2319, 1.442695
  %v2559 = vpow.pop %v2558
  %v2560 = vmul.f32 %v2320, 1.442695
  %v2561 = vpow.pop %v2560
  %v2562 = vmul.f32 %v2321, 1.442695
  %v2563 = vpow.pop %v2562
  %v2564 = vmul.f32 %v2322, 1.442695
  %v2565 = vpow.pop %v2564
  %v2566 = vmul.f32 %v2323, 1.442695
  %v2567 = vpow.pop %v2566
  %v2568 = vmul.f32 %v2324, 1.442695
  %v2569 = vpow.pop %v2568
  %v2570 = vmul.f32 %v2325, 1.442695
  %v2571 = vpow.pop %v2570
  %v2572 = vmul.f32 %v2326, 1.442695
  %v2573 = vpow.pop %v2572
  %v2574 = vmul.f32 %v2327, 1.442695
  %v2575 = vpow.pop %v2574
  %v2576 = vmul.f32 %v2328, 1.442695
  %v2577 = vpow.pop %v2576
  %v2578 = vmul.f32 %v2329, 1.442695
  %v2579 = vpow.pop %v2578
  %v2580 = vmul.f32 %v2330, 1.442695
  %v2581 = vpow.pop %v2580
  %v2582 = vmul.f32 %v2331, 1.442695
  %v2583 = vpow.pop %v2582
  %v2584 = vmul.f32 %v2332, 1.442695
  %v2585 = vpow.pop %v2584
  %v2586 = vmul.f32 %v2333, 1.442695
  %v2587 = vpow.pop %v2586
  %v2588 = vmul.f32 %v2334, 1.442695
  %v2589 = vpow.pop %v2588
  %v2590 = vmul.f32 %v2335, 1.442695
  %v2591 = vpow.pop %v2590
  %v2592 = vadd.f32 %v2337, %v2339
  %v2593 = vadd.f32 %v2592, %v2341
  %v2594 = vadd.f32 %v2593, %v2343
  %v2595 = vrot.slane %v2594, 4
  %v2596 = vadd.f32 %v2594, %v2595
  %v2597 = vrot.slane %v2596, 2
  %v2598 = vadd.f32 %v2596, %v2597
  %v2599 = vrot.slane %v2598, 1
  %v2600 = vadd.f32 %v2598, %v2599
  %v2601 = vadd.f32 %v2345, %v2347
  %v2602 = vadd.f32 %v2601, %v2349
  %v2603 = vadd.f32 %v2602, %v2351
  %v2604 = vrot.slane %v2603, 4
  %v2605 = vadd.f32 %v2603, %v2604
  %v2606 = vrot.slane %v2605, 2
  %v2607 = vadd.f32 %v2605, %v2606
  %v2608 = vrot.slane %v2607, 1
  %v2609 = vadd.f32 %v2607, %v2608
  %v2610 = vadd.f32 %v2353, %v2355
  %v2611 = vadd.f32 %v2610, %v2357
  %v2612 = vadd.f32 %v2611, %v2359
  %v2613 = vrot.slane %v2612, 4
  %v2614 = vadd.f32 %v2612, %v2613
  %v2615 = vrot.slane %v2614, 2
  %v2616 = vadd.f32 %v2614, %v2615
  %v2617 = vrot.slane %v2616, 1
  %v2618 = vadd.f32 %v2616, %v2617
  %v2619 = vadd.f32 %v2361, %v2363
  %v2620 = vadd.f32 %v2619, %v2365
  %v2621 = vadd.f32 %v2620, %v2367
  %v2622 = vrot.slane %v2621, 4
  %v2623 = vadd.f32 %v2621, %v2622
  %v2624 = vrot.slane %v2623, 2
  %v2625 = vadd.f32 %v2623, %v2624
  %v2626 = vrot.slane %v2625, 1
  %v2627 = vadd.f32 %v2625, %v2626
  %v2628 = vadd.f32 %v2369, %v2371
  %v2629 = vadd.f32 %v2628, %v2373
  %v2630 = vadd.f32 %v2629, %v2375
  %v2631 = vrot.slane %v2630, 4
  %v2632 = vadd.f32 %v2630, %v2631
  %v2633 = vrot.slane %v2632, 2
  %v2634 = vadd.f32 %v2632, %v2633
  %v2635 = vrot.slane %v2634, 1
  %v2636 = vadd.f32 %v2634, %v2635
  %v2637 = vadd.f32 %v2377, %v2379
  %v2638 = vadd.f32 %v2637, %v2381
  %v2639 = vadd.f32 %v2638, %v2383
  %v2640 = vrot.slane %v2639, 4
  %v2641 = vadd.f32 %v2639, %v2640
  %v2642 = vrot.slane %v2641, 2
  %v2643 = vadd.f32 %v2641, %v2642
  %v2644 = vrot.slane %v2643, 1
  %v2645 = vadd.f32 %v2643, %v2644
  %v2646 = vadd.f32 %v2385, %v2387
  %v2647 = vadd.f32 %v2646, %v2389
  %v2648 = vadd.f32 %v2647, %v2391
  %v2649 = vrot.slane %v2648, 4
  %v2650 = vadd.f32 %v2648, %v2649
  %v2651 = vrot.slane %v2650, 2
  %v2652 = vadd.f32 %v2650, %v2651
  %v2653 = vrot.slane %v2652, 1
  %v2654 = vadd.f32 %v2652, %v2653
  %v2655 = vadd.f32 %v2393, %v2395
  %v2656 = vadd.f32 %v2655, %v2397
  %v2657 = vadd.f32 %v2656, %v2399
  %v2658 = vrot.slane %v2657, 4
  %v2659 = vadd.f32 %v2657, %v2658
  %v2660 = vrot.slane %v2659, 2
  %v2661 = vadd.f32 %v2659, %v2660
  %v2662 = vrot.slane %v2661, 1
  %v2663 = vadd.f32 %v2661, %v2662
  %v2664 = vadd.f32 %v2401, %v2403
  %v2665 = vadd.f32 %v2664, %v2405
  %v2666 = vadd.f32 %v2665, %v2407
  %v2667 = vrot.slane %v2666, 4
  %v2668 = vadd.f32 %v2666, %v2667
  %v2669 = vrot.slane %v2668, 2
  %v2670 = vadd.f32 %v2668, %v2669
  %v2671 = vrot.slane %v2670, 1
  %v2672 = vadd.f32 %v2670, %v2671
  %v2673 = vadd.f32 %v2409, %v2411
  %v2674 = vadd.f32 %v2673, %v2413
  %v2675 = vadd.f32 %v2674, %v2415
  %v2676 = vrot.slane %v2675, 4
  %v2677 = vadd.f32 %v2675, %v2676
  %v2678 = vrot.slane %v2677, 2
  %v2679 = vadd.f32 %v2677, %v2678
  %v2680 = vrot.slane %v2679, 1
  %v2681 = vadd.f32 %v2679, %v2680
  %v2682 = vadd.f32 %v2417, %v2419
  %v2683 = vadd.f32 %v2682, %v2421
  %v2684 = vadd.f32 %v2683, %v2423
  %v2685 = vrot.slane %v2684, 4
  %v2686 = vadd.f32 %v2684, %v2685
  %v2687 = vrot.slane %v2686, 2
  %v2688 = vadd.f32 %v2686, %v2687
  %v2689 = vrot.slane %v2688, 1
  %v2690 = vadd.f32 %v2688, %v2689
  %v2691 = vadd.f32 %v2425, %v2427
  %v2692 = vadd.f32 %v2691, %v2429
  %v2693 = vadd.f32 %v2692, %v2431
  %v2694 = vrot.slane %v2693, 4
  %v2695 = vadd.f32 %v2693, %v2694
  %v2696 = vrot.slane %v2695, 2
  %v2697 = vadd.f32 %v2695, %v2696
  %v2698 = vrot.slane %v2697, 1
  %v2699 = vadd.f32 %v2697, %v2698
  %v2700 = vadd.f32 %v2433, %v2435
  %v2701 = vadd.f32 %v2700, %v2437
  %v2702 = vadd.f32 %v2701, %v2439
  %v2703 = vrot.slane %v2702, 4
  %v2704 = vadd.f32 %v2702, %v2703
  %v2705 = vrot.slane %v2704, 2
  %v2706 = vadd.f32 %v2704, %v2705
  %v2707 = vrot.slane %v2706, 1
  %v2708 = vadd.f32 %v2706, %v2707
  %v2709 = vadd.f32 %v2441, %v2443
  %v2710 = vadd.f32 %v2709, %v2445
  %v2711 = vadd.f32 %v2710, %v2447
  %v2712 = vrot.slane %v2711, 4
  %v2713 = vadd.f32 %v2711, %v2712
  %v2714 = vrot.slane %v2713, 2
  %v2715 = vadd.f32 %v2713, %v2714
  %v2716 = vrot.slane %v2715, 1
  %v2717 = vadd.f32 %v2715, %v2716
  %v2718 = vadd.f32 %v2449, %v2451
  %v2719 = vadd.f32 %v2718, %v2453
  %v2720 = vadd.f32 %v2719, %v2455
  %v2721 = vrot.slane %v2720, 4
  %v2722 = vadd.f32 %v2720, %v2721
  %v2723 = vrot.slane %v2722, 2
  %v2724 = vadd.f32 %v2722, %v2723
  %v2725 = vrot.slane %v2724, 1
  %v2726 = vadd.f32 %v2724, %v2725
  %v2727 = vadd.f32 %v2457, %v2459
  %v2728 = vadd.f32 %v2727, %v2461
  %v2729 = vadd.f32 %v2728, %v2463
  %v2730 = vrot.slane %v2729, 4
  %v2731 = vadd.f32 %v2729, %v2730
  %v2732 = vrot.slane %v2731, 2
  %v2733 = vadd.f32 %v2731, %v2732
  %v2734 = vrot.slane %v2733, 1
  %v2735 = vadd.f32 %v2733, %v2734
  %v2736 = vadd.f32 %v2465, %v2467
  %v2737 = vadd.f32 %v2736, %v2469
  %v2738 = vadd.f32 %v2737, %v2471
  %v2739 = vrot.slane %v2738, 4
  %v2740 = vadd.f32 %v2738, %v2739
  %v2741 = vrot.slane %v2740, 2
  %v2742 = vadd.f32 %v2740, %v2741
  %v2743 = vrot.slane %v2742, 1
  %v2744 = vadd.f32 %v2742, %v2743
  %v2745 = vadd.f32 %v2473, %v2475
  %v2746 = vadd.f32 %v2745, %v2477
  %v2747 = vadd.f32 %v2746, %v2479
  %v2748 = vrot.slane %v2747, 4
  %v2749 = vadd.f32 %v2747, %v2748
  %v2750 = vrot.slane %v2749, 2
  %v2751 = vadd.f32 %v2749, %v2750
  %v2752 = vrot.slane %v2751, 1
  %v2753 = vadd.f32 %v2751, %v2752
  %v2754 = vadd.f32 %v2481, %v2483
  %v2755 = vadd.f32 %v2754, %v2485
  %v2756 = vadd.f32 %v2755, %v2487
  %v2757 = vrot.slane %v2756, 4
  %v2758 = vadd.f32 %v2756, %v2757
  %v2759 = vrot.slane %v2758, 2
  %v2760 = vadd.f32 %v2758, %v2759
  %v2761 = vrot.slane %v2760, 1
  %v2762 = vadd.f32 %v2760, %v2761
  %v2763 = vadd.f32 %v2489, %v2491
  %v2764 = vadd.f32 %v2763, %v2493
  %v2765 = vadd.f32 %v2764, %v2495
  %v2766 = vrot.slane %v2765, 4
  %v2767 = vadd.f32 %v2765, %v2766
  %v2768 = vrot.slane %v2767, 2
  %v2769 = vadd.f32 %v2767, %v2768
  %v2770 = vrot.slane %v2769, 1
  %v2771 = vadd.f32 %v2769, %v2770
  %v2772 = vadd.f32 %v2497, %v2499
  %v2773 = vadd.f32 %v2772, %v2501
  %v2774 = vadd.f32 %v2773, %v2503
  %v2775 = vrot.slane %v2774, 4
  %v2776 = vadd.f32 %v2774, %v2775
  %v2777 = vrot.slane %v2776, 2
  %v2778 = vadd.f32 %v2776, %v2777
  %v2779 = vrot.slane %v2778, 1
  %v2780 = vadd.f32 %v2778, %v2779
  %v2781 = vadd.f32 %v2505, %v2507
  %v2782 = vadd.f32 %v2781, %v2509
  %v2783 = vadd.f32 %v2782, %v2511
  %v2784 = vrot.slane %v2783, 4
  %v2785 = vadd.f32 %v2783, %v2784
  %v2786 = vrot.slane %v2785, 2
  %v2787 = vadd.f32 %v2785, %v2786
  %v2788 = vrot.slane %v2787, 1
  %v2789 = vadd.f32 %v2787, %v2788
  %v2790 = vadd.f32 %v2513, %v2515
  %v2791 = vadd.f32 %v2790, %v2517
  %v2792 = vadd.f32 %v2791, %v2519
  %v2793 = vrot.slane %v2792, 4
  %v2794 = vadd.f32 %v2792, %v2793
  %v2795 = vrot.slane %v2794, 2
  %v2796 = vadd.f32 %v2794, %v2795
  %v2797 = vrot.slane %v2796, 1
  %v2798 = vadd.f32 %v2796, %v2797
  %v2799 = vadd.f32 %v2521, %v2523
  %v2800 = vadd.f32 %v2799, %v2525
  %v2801 = vadd.f32 %v2800, %v2527
  %v2802 = vrot.slane %v2801, 4
  %v2803 = vadd.f32 %v2801, %v2802
  %v2804 = vrot.slane %v2803, 2
  %v2805 = vadd.f32 %v2803, %v2804
  %v2806 = vrot.slane %v2805, 1
  %v2807 = vadd.f32 %v2805, %v2806
  %v2808 = vadd.f32 %v2529, %v2531
  %v2809 = vadd.f32 %v2808, %v2533
  %v2810 = vadd.f32 %v2809, %v2535
  %v2811 = vrot.slane %v2810, 4
  %v2812 = vadd.f32 %v2810, %v2811
  %v2813 = vrot.slane %v2812, 2
  %v2814 = vadd.f32 %v2812, %v2813
  %v2815 = vrot.slane %v2814, 1
  %v2816 = vadd.f32 %v2814, %v2815
  %v2817 = vadd.f32 %v2537, %v2539
  %v2818 = vadd.f32 %v2817, %v2541
  %v2819 = vadd.f32 %v2818, %v2543
  %v2820 = vrot.slane %v2819, 4
  %v2821 = vadd.f32 %v2819, %v2820
  %v2822 = vrot.slane %v2821, 2
  %v2823 = vadd.f32 %v2821, %v2822
  %v2824 = vrot.slane %v2823, 1
  %v2825 = vadd.f32 %v2823, %v2824
  %v2826 = vadd.f32 %v2545, %v2547
  %v2827 = vadd.f32 %v2826, %v2549
  %v2828 = vadd.f32 %v2827, %v2551
  %v2829 = vrot.slane %v2828, 4
  %v2830 = vadd.f32 %v2828, %v2829
  %v2831 = vrot.slane %v2830, 2
  %v2832 = vadd.f32 %v2830, %v2831
  %v2833 = vrot.slane %v2832, 1
  %v2834 = vadd.f32 %v2832, %v2833
  %v2835 = vadd.f32 %v2553, %v2555
  %v2836 = vadd.f32 %v2835, %v2557
  %v2837 = vadd.f32 %v2836, %v2559
  %v2838 = vrot.slane %v2837, 4
  %v2839 = vadd.f32 %v2837, %v2838
  %v2840 = vrot.slane %v2839, 2
  %v2841 = vadd.f32 %v2839, %v2840
  %v2842 = vrot.slane %v2841, 1
  %v2843 = vadd.f32 %v2841, %v2842
  %v2844 = vadd.f32 %v2561, %v2563
  %v2845 = vadd.f32 %v2844, %v2565
  %v2846 = vadd.f32 %v2845, %v2567
  %v2847 = vrot.slane %v2846, 4
  %v2848 = vadd.f32 %v2846, %v2847
  %v2849 = vrot.slane %v2848, 2
  %v2850 = vadd.f32 %v2848, %v2849
  %v2851 = vrot.slane %v2850, 1
  %v2852 = vadd.f32 %v2850, %v2851
  %v2853 = vadd.f32 %v2569, %v2571
  %v2854 = vadd.f32 %v2853, %v2573
  %v2855 = vadd.f32 %v2854, %v2575
  %v2856 = vrot.slane %v2855, 4
  %v2857 = vadd.f32 %v2855, %v2856
  %v2858 = vrot.slane %v2857, 2
  %v2859 = vadd.f32 %v2857, %v2858
  %v2860 = vrot.slane %v2859, 1
  %v2861 = vadd.f32 %v2859, %v2860
  %v2862 = vadd.f32 %v2577, %v2579
  %v2863 = vadd.f32 %v2862, %v2581
  %v2864 = vadd.f32 %v2863, %v2583
  %v2865 = vrot.slane %v2864, 4
  %v2866 = vadd.f32 %v2864, %v2865
  %v2867 = vrot.slane %v2866, 2
  %v2868 = vadd.f32 %v2866, %v2867
  %v2869 = vrot.slane %v2868, 1
  %v2870 = vadd.f32 %v2868, %v2869
  %v2871 = vadd.f32 %v2585, %v2587
  %v2872 = vadd.f32 %v2871, %v2589
  %v2873 = vadd.f32 %v2872, %v2591
  %v2874 = vrot.slane %v2873, 4
  %v2875 = vadd.f32 %v2873, %v2874
  %v2876 = vrot.slane %v2875, 2
  %v2877 = vadd.f32 %v2875, %v2876
  %v2878 = vrot.slane %v2877, 1
  %v2879 = vadd.f32 %v2877, %v2878
  %v2880 = vmul.f32 %v2337, %v87
  %v2881 = vmul.f32 %v2339, %v90
  %v2882 = vmul.f32 %v2341, %v93
  %v2883 = vmul.f32 %v2343, %v96
  %v2884 = vmul.f32 %v2345, %v87
  %v2885 = vmul.f32 %v2347, %v90
  %v2886 = vmul.f32 %v2349, %v93
  %v2887 = vmul.f32 %v2351, %v96
  %v2888 = vmul.f32 %v2353, %v87
  %v2889 = vmul.f32 %v2355, %v90
  %v2890 = vmul.f32 %v2357, %v93
  %v2891 = vmul.f32 %v2359, %v96
  %v2892 = vmul.f32 %v2361, %v87
  %v2893 = vmul.f32 %v2363, %v90
  %v2894 = vmul.f32 %v2365, %v93
  %v2895 = vmul.f32 %v2367, %v96
  %v2896 = vmul.f32 %v2369, %v87
  %v2897 = vmul.f32 %v2371, %v90
  %v2898 = vmul.f32 %v2373, %v93
  %v2899 = vmul.f32 %v2375, %v96
  %v2900 = vmul.f32 %v2377, %v87
  %v2901 = vmul.f32 %v2379, %v90
  %v2902 = vmul.f32 %v2381, %v93
  %v2903 = vmul.f32 %v2383, %v96
  %v2904 = vmul.f32 %v2385, %v87
  %v2905 = vmul.f32 %v2387, %v90
  %v2906 = vmul.f32 %v2389, %v93
  %v2907 = vmul.f32 %v2391, %v96
  %v2908 = vmul.f32 %v2393, %v87
  %v2909 = vmul.f32 %v2395, %v90
  %v2910 = vmul.f32 %v2397, %v93
  %v2911 = vmul.f32 %v2399, %v96
  %v2912 = vmul.f32 %v2401, %v87
  %v2913 = vmul.f32 %v2403, %v90
  %v2914 = vmul.f32 %v2405, %v93
  %v2915 = vmul.f32 %v2407, %v96
  %v2916 = vmul.f32 %v2409, %v87
  %v2917 = vmul.f32 %v2411, %v90
  %v2918 = vmul.f32 %v2413, %v93
  %v2919 = vmul.f32 %v2415, %v96
  %v2920 = vmul.f32 %v2417, %v87
  %v2921 = vmul.f32 %v2419, %v90
  %v2922 = vmul.f32 %v2421, %v93
  %v2923 = vmul.f32 %v2423, %v96
  %v2924 = vmul.f32 %v2425, %v87
  %v2925 = vmul.f32 %v2427, %v90
  %v2926 = vmul.f32 %v2429, %v93
  %v2927 = vmul.f32 %v2431, %v96
  %v2928 = vmul.f32 %v2433, %v87
  %v2929 = vmul.f32 %v2435, %v90
  %v2930 = vmul.f32 %v2437, %v93
  %v2931 = vmul.f32 %v2439, %v96
  %v2932 = vmul.f32 %v2441, %v87
  %v2933 = vmul.f32 %v2443, %v90
  %v2934 = vmul.f32 %v2445, %v93
  %v2935 = vmul.f32 %v2447, %v96
  %v2936 = vmul.f32 %v2449, %v87
  %v2937 = vmul.f32 %v2451, %v90
  %v2938 = vmul.f32 %v2453, %v93
  %v2939 = vmul.f32 %v2455, %v96
  %v2940 = vmul.f32 %v2457, %v87
  %v2941 = vmul.f32 %v2459, %v90
  %v2942 = vmul.f32 %v2461, %v93
  %v2943 = vmul.f32 %v2463, %v96
  %v2944 = vmul.f32 %v2465, %v87
  %v2945 = vmul.f32 %v2467, %v90
  %v2946 = vmul.f32 %v2469, %v93
  %v2947 = vmul.f32 %v2471, %v96
  %v2948 = vmul.f32 %v2473, %v87
  %v2949 = vmul.f32 %v2475, %v90
  %v2950 = vmul.f32 %v2477, %v93
  %v2951 = vmul.f32 %v2479, %v96
  %v2952 = vmul.f32 %v2481, %v87
  %v2953 = vmul.f32 %v2483, %v90
  %v2954 = vmul.f32 %v2485, %v93
  %v2955 = vmul.f32 %v2487, %v96
  %v2956 = vmul.f32 %v2489, %v87
  %v2957 = vmul.f32 %v2491, %v90
  %v2958 = vmul.f32 %v2493, %v93
  %v2959 = vmul.f32 %v2495, %v96
  %v2960 = vmul.f32 %v2497, %v87
  %v2961 = vmul.f32 %v2499, %v90
  %v2962 = vmul.f32 %v2501, %v93
  %v2963 = vmul.f32 %v2503, %v96
  %v2964 = vmul.f32 %v2505, %v87
  %v2965 = vmul.f32 %v2507, %v90
  %v2966 = vmul.f32 %v2509, %v93
  %v2967 = vmul.f32 %v2511, %v96
  %v2968 = vmul.f32 %v2513, %v87
  %v2969 = vmul.f32 %v2515, %v90
  %v2970 = vmul.f32 %v2517, %v93
  %v2971 = vmul.f32 %v2519, %v96
  %v2972 = vmul.f32 %v2521, %v87
  %v2973 = vmul.f32 %v2523, %v90
  %v2974 = vmul.f32 %v2525, %v93
  %v2975 = vmul.f32 %v2527, %v96
  %v2976 = vmul.f32 %v2529, %v87
  %v2977 = vmul.f32 %v2531, %v90
  %v2978 = vmul.f32 %v2533, %v93
  %v2979 = vmul.f32 %v2535, %v96
  %v2980 = vmul.f32 %v2537, %v87
  %v2981 = vmul.f32 %v2539, %v90
  %v2982 = vmul.f32 %v2541, %v93
  %v2983 = vmul.f32 %v2543, %v96
  %v2984 = vmul.f32 %v2545, %v87
  %v2985 = vmul.f32 %v2547, %v90
  %v2986 = vmul.f32 %v2549, %v93
  %v2987 = vmul.f32 %v2551, %v96
  %v2988 = vmul.f32 %v2553, %v87
  %v2989 = vmul.f32 %v2555, %v90
  %v2990 = vmul.f32 %v2557, %v93
  %v2991 = vmul.f32 %v2559, %v96
  %v2992 = vmul.f32 %v2561, %v87
  %v2993 = vmul.f32 %v2563, %v90
  %v2994 = vmul.f32 %v2565, %v93
  %v2995 = vmul.f32 %v2567, %v96
  %v2996 = vmul.f32 %v2569, %v87
  %v2997 = vmul.f32 %v2571, %v90
  %v2998 = vmul.f32 %v2573, %v93
  %v2999 = vmul.f32 %v2575, %v96
  %v3000 = vmul.f32 %v2577, %v87
  %v3001 = vmul.f32 %v2579, %v90
  %v3002 = vmul.f32 %v2581, %v93
  %v3003 = vmul.f32 %v2583, %v96
  %v3004 = vmul.f32 %v2585, %v87
  %v3005 = vmul.f32 %v2587, %v90
  %v3006 = vmul.f32 %v2589, %v93
  %v3007 = vmul.f32 %v2591, %v96
  %v3008 = vadd.f32 %v2880, %v2881
  %v3009 = vadd.f32 %v3008, %v2882
  %v3010 = vadd.f32 %v3009, %v2883
  %v3011 = vrot.slane %v3010, 4
  %v3012 = vadd.f32 %v3010, %v3011
  %v3013 = vrot.slane %v3012, 2
  %v3014 = vadd.f32 %v3012, %v3013
  %v3015 = vrot.slane %v3014, 1
  %v3016 = vadd.f32 %v3014, %v3015
  %v3017 = vadd.f32 %v2884, %v2885
  %v3018 = vadd.f32 %v3017, %v2886
  %v3019 = vadd.f32 %v3018, %v2887
  %v3020 = vrot.slane %v3019, 4
  %v3021 = vadd.f32 %v3019, %v3020
  %v3022 = vrot.slane %v3021, 2
  %v3023 = vadd.f32 %v3021, %v3022
  %v3024 = vrot.slane %v3023, 1
  %v3025 = vadd.f32 %v3023, %v3024
  %v3026 = vadd.f32 %v2888, %v2889
  %v3027 = vadd.f32 %v3026, %v2890
  %v3028 = vadd.f32 %v3027, %v2891
  %v3029 = vrot.slane %v3028, 4
  %v3030 = vadd.f32 %v3028, %v3029
  %v3031 = vrot.slane %v3030, 2
  %v3032 = vadd.f32 %v3030, %v3031
  %v3033 = vrot.slane %v3032, 1
  %v3034 = vadd.f32 %v3032, %v3033
  %v3035 = vadd.f32 %v2892, %v2893
  %v3036 = vadd.f32 %v3035, %v2894
  %v3037 = vadd.f32 %v3036, %v2895
  %v3038 = vrot.slane %v3037, 4
  %v3039 = vadd.f32 %v3037, %v3038
  %v3040 = vrot.slane %v3039, 2
  %v3041 = vadd.f32 %v3039, %v3040
  %v3042 = vrot.slane %v3041, 1
  %v3043 = vadd.f32 %v3041, %v3042
  %v3044 = vadd.f32 %v2896, %v2897
  %v3045 = vadd.f32 %v3044, %v2898
  %v3046 = vadd.f32 %v3045, %v2899
  %v3047 = vrot.slane %v3046, 4
  %v3048 = vadd.f32 %v3046, %v3047
  %v3049 = vrot.slane %v3048, 2
  %v3050 = vadd.f32 %v3048, %v3049
  %v3051 = vrot.slane %v3050, 1
  %v3052 = vadd.f32 %v3050, %v3051
  %v3053 = vadd.f32 %v2900, %v2901
  %v3054 = vadd.f32 %v3053, %v2902
  %v3055 = vadd.f32 %v3054, %v2903
  %v3056 = vrot.slane %v3055, 4
  %v3057 = vadd.f32 %v3055, %v3056
  %v3058 = vrot.slane %v3057, 2
  %v3059 = vadd.f32 %v3057, %v3058
  %v3060 = vrot.slane %v3059, 1
  %v3061 = vadd.f32 %v3059, %v3060
  %v3062 = vadd.f32 %v2904, %v2905
  %v3063 = vadd.f32 %v3062, %v2906
  %v3064 = vadd.f32 %v3063, %v2907
  %v3065 = vrot.slane %v3064, 4
  %v3066 = vadd.f32 %v3064, %v3065
  %v3067 = vrot.slane %v3066, 2
  %v3068 = vadd.f32 %v3066, %v3067
  %v3069 = vrot.slane %v3068, 1
  %v3070 = vadd.f32 %v3068, %v3069
  %v3071 = vadd.f32 %v2908, %v2909
  %v3072 = vadd.f32 %v3071, %v2910
  %v3073 = vadd.f32 %v3072, %v2911
  %v3074 = vrot.slane %v3073, 4
  %v3075 = vadd.f32 %v3073, %v3074
  %v3076 = vrot.slane %v3075, 2
  %v3077 = vadd.f32 %v3075, %v3076
  %v3078 = vrot.slane %v3077, 1
  %v3079 = vadd.f32 %v3077, %v3078
  %v3080 = vadd.f32 %v2912, %v2913
  %v3081 = vadd.f32 %v3080, %v2914
  %v3082 = vadd.f32 %v3081, %v2915
  %v3083 = vrot.slane %v3082, 4
  %v3084 = vadd.f32 %v3082, %v3083
  %v3085 = vrot.slane %v3084, 2
  %v3086 = vadd.f32 %v3084, %v3085
  %v3087 = vrot.slane %v3086, 1
  %v3088 = vadd.f32 %v3086, %v3087
  %v3089 = vadd.f32 %v2916, %v2917
  %v3090 = vadd.f32 %v3089, %v2918
  %v3091 = vadd.f32 %v3090, %v2919
  %v3092 = vrot.slane %v3091, 4
  %v3093 = vadd.f32 %v3091, %v3092
  %v3094 = vrot.slane %v3093, 2
  %v3095 = vadd.f32 %v3093, %v3094
  %v3096 = vrot.slane %v3095, 1
  %v3097 = vadd.f32 %v3095, %v3096
  %v3098 = vadd.f32 %v2920, %v2921
  %v3099 = vadd.f32 %v3098, %v2922
  %v3100 = vadd.f32 %v3099, %v2923
  %v3101 = vrot.slane %v3100, 4
  %v3102 = vadd.f32 %v3100, %v3101
  %v3103 = vrot.slane %v3102, 2
  %v3104 = vadd.f32 %v3102, %v3103
  %v3105 = vrot.slane %v3104, 1
  %v3106 = vadd.f32 %v3104, %v3105
  %v3107 = vadd.f32 %v2924, %v2925
  %v3108 = vadd.f32 %v3107, %v2926
  %v3109 = vadd.f32 %v3108, %v2927
  %v3110 = vrot.slane %v3109, 4
  %v3111 = vadd.f32 %v3109, %v3110
  %v3112 = vrot.slane %v3111, 2
  %v3113 = vadd.f32 %v3111, %v3112
  %v3114 = vrot.slane %v3113, 1
  %v3115 = vadd.f32 %v3113, %v3114
  %v3116 = vadd.f32 %v2928, %v2929
  %v3117 = vadd.f32 %v3116, %v2930
  %v3118 = vadd.f32 %v3117, %v2931
  %v3119 = vrot.slane %v3118, 4
  %v3120 = vadd.f32 %v3118, %v3119
  %v3121 = vrot.slane %v3120, 2
  %v3122 = vadd.f32 %v3120, %v3121
  %v3123 = vrot.slane %v3122, 1
  %v3124 = vadd.f32 %v3122, %v3123
  %v3125 = vadd.f32 %v2932, %v2933
  %v3126 = vadd.f32 %v3125, %v2934
  %v3127 = vadd.f32 %v3126, %v2935
  %v3128 = vrot.slane %v3127, 4
  %v3129 = vadd.f32 %v3127, %v3128
  %v3130 = vrot.slane %v3129, 2
  %v3131 = vadd.f32 %v3129, %v3130
  %v3132 = vrot.slane %v3131, 1
  %v3133 = vadd.f32 %v3131, %v3132
  %v3134 = vadd.f32 %v2936, %v2937
  %v3135 = vadd.f32 %v3134, %v2938
  %v3136 = vadd.f32 %v3135, %v2939
  %v3137 = vrot.slane %v3136, 4
  %v3138 = vadd.f32 %v3136, %v3137
  %v3139 = vrot.slane %v3138, 2
  %v3140 = vadd.f32 %v3138, %v3139
  %v3141 = vrot.slane %v3140, 1
  %v3142 = vadd.f32 %v3140, %v3141
  %v3143 = vadd.f32 %v2940, %v2941
  %v3144 = vadd.f32 %v3143, %v2942
  %v3145 = vadd.f32 %v3144, %v2943
  %v3146 = vrot.slane %v3145, 4
  %v3147 = vadd.f32 %v3145, %v3146
  %v3148 = vrot.slane %v3147, 2
  %v3149 = vadd.f32 %v3147, %v3148
  %v3150 = vrot.slane %v3149, 1
  %v3151 = vadd.f32 %v3149, %v3150
  %v3152 = vadd.f32 %v2944, %v2945
  %v3153 = vadd.f32 %v3152, %v2946
  %v3154 = vadd.f32 %v3153, %v2947
  %v3155 = vrot.slane %v3154, 4
  %v3156 = vadd.f32 %v3154, %v3155
  %v3157 = vrot.slane %v3156, 2
  %v3158 = vadd.f32 %v3156, %v3157
  %v3159 = vrot.slane %v3158, 1
  %v3160 = vadd.f32 %v3158, %v3159
  %v3161 = vadd.f32 %v2948, %v2949
  %v3162 = vadd.f32 %v3161, %v2950
  %v3163 = vadd.f32 %v3162, %v2951
  %v3164 = vrot.slane %v3163, 4
  %v3165 = vadd.f32 %v3163, %v3164
  %v3166 = vrot.slane %v3165, 2
  %v3167 = vadd.f32 %v3165, %v3166
  %v3168 = vrot.slane %v3167, 1
  %v3169 = vadd.f32 %v3167, %v3168
  %v3170 = vadd.f32 %v2952, %v2953
  %v3171 = vadd.f32 %v3170, %v2954
  %v3172 = vadd.f32 %v3171, %v2955
  %v3173 = vrot.slane %v3172, 4
  %v3174 = vadd.f32 %v3172, %v3173
  %v3175 = vrot.slane %v3174, 2
  %v3176 = vadd.f32 %v3174, %v3175
  %v3177 = vrot.slane %v3176, 1
  %v3178 = vadd.f32 %v3176, %v3177
  %v3179 = vadd.f32 %v2956, %v2957
  %v3180 = vadd.f32 %v3179, %v2958
  %v3181 = vadd.f32 %v3180, %v2959
  %v3182 = vrot.slane %v3181, 4
  %v3183 = vadd.f32 %v3181, %v3182
  %v3184 = vrot.slane %v3183, 2
  %v3185 = vadd.f32 %v3183, %v3184
  %v3186 = vrot.slane %v3185, 1
  %v3187 = vadd.f32 %v3185, %v3186
  %v3188 = vadd.f32 %v2960, %v2961
  %v3189 = vadd.f32 %v3188, %v2962
  %v3190 = vadd.f32 %v3189, %v2963
  %v3191 = vrot.slane %v3190, 4
  %v3192 = vadd.f32 %v3190, %v3191
  %v3193 = vrot.slane %v3192, 2
  %v3194 = vadd.f32 %v3192, %v3193
  %v3195 = vrot.slane %v3194, 1
  %v3196 = vadd.f32 %v3194, %v3195
  %v3197 = vadd.f32 %v2964, %v2965
  %v3198 = vadd.f32 %v3197, %v2966
  %v3199 = vadd.f32 %v3198, %v2967
  %v3200 = vrot.slane %v3199, 4
  %v3201 = vadd.f32 %v3199, %v3200
  %v3202 = vrot.slane %v3201, 2
  %v3203 = vadd.f32 %v3201, %v3202
  %v3204 = vrot.slane %v3203, 1
  %v3205 = vadd.f32 %v3203, %v3204
  %v3206 = vadd.f32 %v2968, %v2969
  %v3207 = vadd.f32 %v3206, %v2970
  %v3208 = vadd.f32 %v3207, %v2971
  %v3209 = vrot.slane %v3208, 4
  %v3210 = vadd.f32 %v3208, %v3209
  %v3211 = vrot.slane %v3210, 2
  %v3212 = vadd.f32 %v3210, %v3211
  %v3213 = vrot.slane %v3212, 1
  %v3214 = vadd.f32 %v3212, %v3213
  %v3215 = vadd.f32 %v2972, %v2973
  %v3216 = vadd.f32 %v3215, %v2974
  %v3217 = vadd.f32 %v3216, %v2975
  %v3218 = vrot.slane %v3217, 4
  %v3219 = vadd.f32 %v3217, %v3218
  %v3220 = vrot.slane %v3219, 2
  %v3221 = vadd.f32 %v3219, %v3220
  %v3222 = vrot.slane %v3221, 1
  %v3223 = vadd.f32 %v3221, %v3222
  %v3224 = vadd.f32 %v2976, %v2977
  %v3225 = vadd.f32 %v3224, %v2978
  %v3226 = vadd.f32 %v3225, %v2979
  %v3227 = vrot.slane %v3226, 4
  %v3228 = vadd.f32 %v3226, %v3227
  %v3229 = vrot.slane %v3228, 2
  %v3230 = vadd.f32 %v3228, %v3229
  %v3231 = vrot.slane %v3230, 1
  %v3232 = vadd.f32 %v3230, %v3231
  %v3233 = vadd.f32 %v2980, %v2981
  %v3234 = vadd.f32 %v3233, %v2982
  %v3235 = vadd.f32 %v3234, %v2983
  %v3236 = vrot.slane %v3235, 4
  %v3237 = vadd.f32 %v3235, %v3236
  %v3238 = vrot.slane %v3237, 2
  %v3239 = vadd.f32 %v3237, %v3238
  %v3240 = vrot.slane %v3239, 1
  %v3241 = vadd.f32 %v3239, %v3240
  %v3242 = vadd.f32 %v2984, %v2985
  %v3243 = vadd.f32 %v3242, %v2986
  %v3244 = vadd.f32 %v3243, %v2987
  %v3245 = vrot.slane %v3244, 4
  %v3246 = vadd.f32 %v3244, %v3245
  %v3247 = vrot.slane %v3246, 2
  %v3248 = vadd.f32 %v3246, %v3247
  %v3249 = vrot.slane %v3248, 1
  %v3250 = vadd.f32 %v3248, %v3249
  %v3251 = vadd.f32 %v2988, %v2989
  %v3252 = vadd.f32 %v3251, %v2990
  %v3253 = vadd.f32 %v3252, %v2991
  %v3254 = vrot.slane %v3253, 4
  %v3255 = vadd.f32 %v3253, %v3254
  %v3256 = vrot.slane %v3255, 2
  %v3257 = vadd.f32 %v3255, %v3256
  %v3258 = vrot.slane %v3257, 1
  %v3259 = vadd.f32 %v3257, %v3258
  %v3260 = vadd.f32 %v2992, %v2993
  %v3261 = vadd.f32 %v3260, %v2994
  %v3262 = vadd.f32 %v3261, %v2995
  %v3263 = vrot.slane %v3262, 4
  %v3264 = vadd.f32 %v3262, %v3263
  %v3265 = vrot.slane %v3264, 2
  %v3266 = vadd.f32 %v3264, %v3265
  %v3267 = vrot.slane %v3266, 1
  %v3268 = vadd.f32 %v3266, %v3267
  %v3269 = vadd.f32 %v2996, %v2997
  %v3270 = vadd.f32 %v3269, %v2998
  %v3271 = vadd.f32 %v3270, %v2999
  %v3272 = vrot.slane %v3271, 4
  %v3273 = vadd.f32 %v3271, %v3272
  %v3274 = vrot.slane %v3273, 2
  %v3275 = vadd.f32 %v3273, %v3274
  %v3276 = vrot.slane %v3275, 1
  %v3277 = vadd.f32 %v3275, %v3276
  %v3278 = vadd.f32 %v3000, %v3001
  %v3279 = vadd.f32 %v3278, %v3002
  %v3280 = vadd.f32 %v3279, %v3003
  %v3281 = vrot.slane %v3280, 4
  %v3282 = vadd.f32 %v3280, %v3281
  %v3283 = vrot.slane %v3282, 2
  %v3284 = vadd.f32 %v3282, %v3283
  %v3285 = vrot.slane %v3284, 1
  %v3286 = vadd.f32 %v3284, %v3285
  %v3287 = vadd.f32 %v3004, %v3005
  %v3288 = vadd.f32 %v3287, %v3006
  %v3289 = vadd.f32 %v3288, %v3007
  %v3290 = vrot.slane %v3289, 4
  %v3291 = vadd.f32 %v3289, %v3290
  %v3292 = vrot.slane %v3291, 2
  %v3293 = vadd.f32 %v3291, %v3292
  %v3294 = vrot.slane %v3293, 1
  %v3295 = vadd.f32 %v3293, %v3294
  %v3296 = vmax.f32 %v2600, 1e-30
  %v3297 = vmax.f32 %v2609, 1e-30
  %v3298 = vmax.f32 %v2618, 1e-30
  %v3299 = vmax.f32 %v2627, 1e-30
  %v3300 = vmax.f32 %v2636, 1e-30
  %v3301 = vmax.f32 %v2645, 1e-30
  %v3302 = vmax.f32 %v2654, 1e-30
  %v3303 = vmax.f32 %v2663, 1e-30
  %v3304 = vmax.f32 %v2672, 1e-30
  %v3305 = vmax.f32 %v2681, 1e-30
  %v3306 = vmax.f32 %v2690, 1e-30
  %v3307 = vmax.f32 %v2699, 1e-30
  %v3308 = vmax.f32 %v2708, 1e-30
  %v3309 = vmax.f32 %v2717, 1e-30
  %v3310 = vmax.f32 %v2726, 1e-30
  %v3311 = vmax.f32 %v2735, 1e-30
  %v3312 = vmax.f32 %v2744, 1e-30
  %v3313 = vmax.f32 %v2753, 1e-30
  %v3314 = vmax.f32 %v2762, 1e-30
  %v3315 = vmax.f32 %v2771, 1e-30
  %v3316 = vmax.f32 %v2780, 1e-30
  %v3317 = vmax.f32 %v2789, 1e-30
  %v3318 = vmax.f32 %v2798, 1e-30
  %v3319 = vmax.f32 %v2807, 1e-30
  %v3320 = vmax.f32 %v2816, 1e-30
  %v3321 = vmax.f32 %v2825, 1e-30
  %v3322 = vmax.f32 %v2834, 1e-30
  %v3323 = vmax.f32 %v2843, 1e-30
  %v3324 = vmax.f32 %v2852, 1e-30
  %v3325 = vmax.f32 %v2861, 1e-30
  %v3326 = vmax.f32 %v2870, 1e-30
  %v3327 = vmax.f32 %v2879, 1e-30
  %v3328 = vrcp.pop %v3296
  %v3329 = vmul.f32 %v3296, %v3328
  %v3330 = vsub.f32 1.0, %v3329
  %v3331 = vmul.f32 %v3328, %v3330
  %v3332 = vadd.f32 %v3328, %v3331
  %vm3333 = vweird.f32 %v3296
  %vm3334 = vweird.f32 %v3328
  %vm3335 = vmor %vm3333, %vm3334
  %v3336 = vsel %vm3335, %v3328, %v3332
  %v3337 = vand.u32 2147483647, %v3296
  %vm3338 = vcmp.eq.f32.partialorder %v3337, 8.507059e+37
  %v3339 = vand.u32 %v3296, 2147483648
  %v3340 = vor.u32 1.1754944e-38, %v3339
  %v3341 = vsel %vm3338, %v3340, %v3336
  %v3342 = vmul.f32 %v3016, %v3341
  %v3343 = vrcp.pop %v3297
  %v3344 = vmul.f32 %v3297, %v3343
  %v3345 = vsub.f32 1.0, %v3344
  %v3346 = vmul.f32 %v3343, %v3345
  %v3347 = vadd.f32 %v3343, %v3346
  %vm3348 = vweird.f32 %v3297
  %vm3349 = vweird.f32 %v3343
  %vm3350 = vmor %vm3348, %vm3349
  %v3351 = vsel %vm3350, %v3343, %v3347
  %v3352 = vand.u32 2147483647, %v3297
  %vm3353 = vcmp.eq.f32.partialorder %v3352, 8.507059e+37
  %v3354 = vand.u32 %v3297, 2147483648
  %v3355 = vor.u32 1.1754944e-38, %v3354
  %v3356 = vsel %vm3353, %v3355, %v3351
  %v3357 = vmul.f32 %v3025, %v3356
  %v3358 = vrcp.pop %v3298
  %v3359 = vmul.f32 %v3298, %v3358
  %v3360 = vsub.f32 1.0, %v3359
  %v3361 = vmul.f32 %v3358, %v3360
  %v3362 = vadd.f32 %v3358, %v3361
  %vm3363 = vweird.f32 %v3298
  %vm3364 = vweird.f32 %v3358
  %vm3365 = vmor %vm3363, %vm3364
  %v3366 = vsel %vm3365, %v3358, %v3362
  %v3367 = vand.u32 2147483647, %v3298
  %vm3368 = vcmp.eq.f32.partialorder %v3367, 8.507059e+37
  %v3369 = vand.u32 %v3298, 2147483648
  %v3370 = vor.u32 1.1754944e-38, %v3369
  %v3371 = vsel %vm3368, %v3370, %v3366
  %v3372 = vmul.f32 %v3034, %v3371
  %v3373 = vrcp.pop %v3299
  %v3374 = vmul.f32 %v3299, %v3373
  %v3375 = vsub.f32 1.0, %v3374
  %v3376 = vmul.f32 %v3373, %v3375
  %v3377 = vadd.f32 %v3373, %v3376
  %vm3378 = vweird.f32 %v3299
  %vm3379 = vweird.f32 %v3373
  %vm3380 = vmor %vm3378, %vm3379
  %v3381 = vsel %vm3380, %v3373, %v3377
  %v3382 = vand.u32 2147483647, %v3299
  %vm3383 = vcmp.eq.f32.partialorder %v3382, 8.507059e+37
  %v3384 = vand.u32 %v3299, 2147483648
  %v3385 = vor.u32 1.1754944e-38, %v3384
  %v3386 = vsel %vm3383, %v3385, %v3381
  %v3387 = vmul.f32 %v3043, %v3386
  %v3388 = vrcp.pop %v3300
  %v3389 = vmul.f32 %v3300, %v3388
  %v3390 = vsub.f32 1.0, %v3389
  %v3391 = vmul.f32 %v3388, %v3390
  %v3392 = vadd.f32 %v3388, %v3391
  %vm3393 = vweird.f32 %v3300
  %vm3394 = vweird.f32 %v3388
  %vm3395 = vmor %vm3393, %vm3394
  %v3396 = vsel %vm3395, %v3388, %v3392
  %v3397 = vand.u32 2147483647, %v3300
  %vm3398 = vcmp.eq.f32.partialorder %v3397, 8.507059e+37
  %v3399 = vand.u32 %v3300, 2147483648
  %v3400 = vor.u32 1.1754944e-38, %v3399
  %v3401 = vsel %vm3398, %v3400, %v3396
  %v3402 = vmul.f32 %v3052, %v3401
  %v3403 = vrcp.pop %v3301
  %v3404 = vmul.f32 %v3301, %v3403
  %v3405 = vsub.f32 1.0, %v3404
  %v3406 = vmul.f32 %v3403, %v3405
  %v3407 = vadd.f32 %v3403, %v3406
  %vm3408 = vweird.f32 %v3301
  %vm3409 = vweird.f32 %v3403
  %vm3410 = vmor %vm3408, %vm3409
  %v3411 = vsel %vm3410, %v3403, %v3407
  %v3412 = vand.u32 2147483647, %v3301
  %vm3413 = vcmp.eq.f32.partialorder %v3412, 8.507059e+37
  %v3414 = vand.u32 %v3301, 2147483648
  %v3415 = vor.u32 1.1754944e-38, %v3414
  %v3416 = vsel %vm3413, %v3415, %v3411
  %v3417 = vmul.f32 %v3061, %v3416
  %v3418 = vrcp.pop %v3302
  %v3419 = vmul.f32 %v3302, %v3418
  %v3420 = vsub.f32 1.0, %v3419
  %v3421 = vmul.f32 %v3418, %v3420
  %v3422 = vadd.f32 %v3418, %v3421
  %vm3423 = vweird.f32 %v3302
  %vm3424 = vweird.f32 %v3418
  %vm3425 = vmor %vm3423, %vm3424
  %v3426 = vsel %vm3425, %v3418, %v3422
  %v3427 = vand.u32 2147483647, %v3302
  %vm3428 = vcmp.eq.f32.partialorder %v3427, 8.507059e+37
  %v3429 = vand.u32 %v3302, 2147483648
  %v3430 = vor.u32 1.1754944e-38, %v3429
  %v3431 = vsel %vm3428, %v3430, %v3426
  %v3432 = vmul.f32 %v3070, %v3431
  %v3433 = vrcp.pop %v3303
  %v3434 = vmul.f32 %v3303, %v3433
  %v3435 = vsub.f32 1.0, %v3434
  %v3436 = vmul.f32 %v3433, %v3435
  %v3437 = vadd.f32 %v3433, %v3436
  %vm3438 = vweird.f32 %v3303
  %vm3439 = vweird.f32 %v3433
  %vm3440 = vmor %vm3438, %vm3439
  %v3441 = vsel %vm3440, %v3433, %v3437
  %v3442 = vand.u32 2147483647, %v3303
  %vm3443 = vcmp.eq.f32.partialorder %v3442, 8.507059e+37
  %v3444 = vand.u32 %v3303, 2147483648
  %v3445 = vor.u32 1.1754944e-38, %v3444
  %v3446 = vsel %vm3443, %v3445, %v3441
  %v3447 = vmul.f32 %v3079, %v3446
  %v3448 = vrcp.pop %v3304
  %v3449 = vmul.f32 %v3304, %v3448
  %v3450 = vsub.f32 1.0, %v3449
  %v3451 = vmul.f32 %v3448, %v3450
  %v3452 = vadd.f32 %v3448, %v3451
  %vm3453 = vweird.f32 %v3304
  %vm3454 = vweird.f32 %v3448
  %vm3455 = vmor %vm3453, %vm3454
  %v3456 = vsel %vm3455, %v3448, %v3452
  %v3457 = vand.u32 2147483647, %v3304
  %vm3458 = vcmp.eq.f32.partialorder %v3457, 8.507059e+37
  %v3459 = vand.u32 %v3304, 2147483648
  %v3460 = vor.u32 1.1754944e-38, %v3459
  %v3461 = vsel %vm3458, %v3460, %v3456
  %v3462 = vmul.f32 %v3088, %v3461
  %v3463 = vrcp.pop %v3305
  %v3464 = vmul.f32 %v3305, %v3463
  %v3465 = vsub.f32 1.0, %v3464
  %v3466 = vmul.f32 %v3463, %v3465
  %v3467 = vadd.f32 %v3463, %v3466
  %vm3468 = vweird.f32 %v3305
  %vm3469 = vweird.f32 %v3463
  %vm3470 = vmor %vm3468, %vm3469
  %v3471 = vsel %vm3470, %v3463, %v3467
  %v3472 = vand.u32 2147483647, %v3305
  %vm3473 = vcmp.eq.f32.partialorder %v3472, 8.507059e+37
  %v3474 = vand.u32 %v3305, 2147483648
  %v3475 = vor.u32 1.1754944e-38, %v3474
  %v3476 = vsel %vm3473, %v3475, %v3471
  %v3477 = vmul.f32 %v3097, %v3476
  %v3478 = vrcp.pop %v3306
  %v3479 = vmul.f32 %v3306, %v3478
  %v3480 = vsub.f32 1.0, %v3479
  %v3481 = vmul.f32 %v3478, %v3480
  %v3482 = vadd.f32 %v3478, %v3481
  %vm3483 = vweird.f32 %v3306
  %vm3484 = vweird.f32 %v3478
  %vm3485 = vmor %vm3483, %vm3484
  %v3486 = vsel %vm3485, %v3478, %v3482
  %v3487 = vand.u32 2147483647, %v3306
  %vm3488 = vcmp.eq.f32.partialorder %v3487, 8.507059e+37
  %v3489 = vand.u32 %v3306, 2147483648
  %v3490 = vor.u32 1.1754944e-38, %v3489
  %v3491 = vsel %vm3488, %v3490, %v3486
  %v3492 = vmul.f32 %v3106, %v3491
  %v3493 = vrcp.pop %v3307
  %v3494 = vmul.f32 %v3307, %v3493
  %v3495 = vsub.f32 1.0, %v3494
  %v3496 = vmul.f32 %v3493, %v3495
  %v3497 = vadd.f32 %v3493, %v3496
  %vm3498 = vweird.f32 %v3307
  %vm3499 = vweird.f32 %v3493
  %vm3500 = vmor %vm3498, %vm3499
  %v3501 = vsel %vm3500, %v3493, %v3497
  %v3502 = vand.u32 2147483647, %v3307
  %vm3503 = vcmp.eq.f32.partialorder %v3502, 8.507059e+37
  %v3504 = vand.u32 %v3307, 2147483648
  %v3505 = vor.u32 1.1754944e-38, %v3504
  %v3506 = vsel %vm3503, %v3505, %v3501
  %v3507 = vmul.f32 %v3115, %v3506
  %v3508 = vrcp.pop %v3308
  %v3509 = vmul.f32 %v3308, %v3508
  %v3510 = vsub.f32 1.0, %v3509
  %v3511 = vmul.f32 %v3508, %v3510
  %v3512 = vadd.f32 %v3508, %v3511
  %vm3513 = vweird.f32 %v3308
  %vm3514 = vweird.f32 %v3508
  %vm3515 = vmor %vm3513, %vm3514
  %v3516 = vsel %vm3515, %v3508, %v3512
  %v3517 = vand.u32 2147483647, %v3308
  %vm3518 = vcmp.eq.f32.partialorder %v3517, 8.507059e+37
  %v3519 = vand.u32 %v3308, 2147483648
  %v3520 = vor.u32 1.1754944e-38, %v3519
  %v3521 = vsel %vm3518, %v3520, %v3516
  %v3522 = vmul.f32 %v3124, %v3521
  %v3523 = vrcp.pop %v3309
  %v3524 = vmul.f32 %v3309, %v3523
  %v3525 = vsub.f32 1.0, %v3524
  %v3526 = vmul.f32 %v3523, %v3525
  %v3527 = vadd.f32 %v3523, %v3526
  %vm3528 = vweird.f32 %v3309
  %vm3529 = vweird.f32 %v3523
  %vm3530 = vmor %vm3528, %vm3529
  %v3531 = vsel %vm3530, %v3523, %v3527
  %v3532 = vand.u32 2147483647, %v3309
  %vm3533 = vcmp.eq.f32.partialorder %v3532, 8.507059e+37
  %v3534 = vand.u32 %v3309, 2147483648
  %v3535 = vor.u32 1.1754944e-38, %v3534
  %v3536 = vsel %vm3533, %v3535, %v3531
  %v3537 = vmul.f32 %v3133, %v3536
  %v3538 = vrcp.pop %v3310
  %v3539 = vmul.f32 %v3310, %v3538
  %v3540 = vsub.f32 1.0, %v3539
  %v3541 = vmul.f32 %v3538, %v3540
  %v3542 = vadd.f32 %v3538, %v3541
  %vm3543 = vweird.f32 %v3310
  %vm3544 = vweird.f32 %v3538
  %vm3545 = vmor %vm3543, %vm3544
  %v3546 = vsel %vm3545, %v3538, %v3542
  %v3547 = vand.u32 2147483647, %v3310
  %vm3548 = vcmp.eq.f32.partialorder %v3547, 8.507059e+37
  %v3549 = vand.u32 %v3310, 2147483648
  %v3550 = vor.u32 1.1754944e-38, %v3549
  %v3551 = vsel %vm3548, %v3550, %v3546
  %v3552 = vmul.f32 %v3142, %v3551
  %v3553 = vrcp.pop %v3311
  %v3554 = vmul.f32 %v3311, %v3553
  %v3555 = vsub.f32 1.0, %v3554
  %v3556 = vmul.f32 %v3553, %v3555
  %v3557 = vadd.f32 %v3553, %v3556
  %vm3558 = vweird.f32 %v3311
  %vm3559 = vweird.f32 %v3553
  %vm3560 = vmor %vm3558, %vm3559
  %v3561 = vsel %vm3560, %v3553, %v3557
  %v3562 = vand.u32 2147483647, %v3311
  %vm3563 = vcmp.eq.f32.partialorder %v3562, 8.507059e+37
  %v3564 = vand.u32 %v3311, 2147483648
  %v3565 = vor.u32 1.1754944e-38, %v3564
  %v3566 = vsel %vm3563, %v3565, %v3561
  %v3567 = vmul.f32 %v3151, %v3566
  %v3568 = vrcp.pop %v3312
  %v3569 = vmul.f32 %v3312, %v3568
  %v3570 = vsub.f32 1.0, %v3569
  %v3571 = vmul.f32 %v3568, %v3570
  %v3572 = vadd.f32 %v3568, %v3571
  %vm3573 = vweird.f32 %v3312
  %vm3574 = vweird.f32 %v3568
  %vm3575 = vmor %vm3573, %vm3574
  %v3576 = vsel %vm3575, %v3568, %v3572
  %v3577 = vand.u32 2147483647, %v3312
  %vm3578 = vcmp.eq.f32.partialorder %v3577, 8.507059e+37
  %v3579 = vand.u32 %v3312, 2147483648
  %v3580 = vor.u32 1.1754944e-38, %v3579
  %v3581 = vsel %vm3578, %v3580, %v3576
  %v3582 = vmul.f32 %v3160, %v3581
  %v3583 = vrcp.pop %v3313
  %v3584 = vmul.f32 %v3313, %v3583
  %v3585 = vsub.f32 1.0, %v3584
  %v3586 = vmul.f32 %v3583, %v3585
  %v3587 = vadd.f32 %v3583, %v3586
  %vm3588 = vweird.f32 %v3313
  %vm3589 = vweird.f32 %v3583
  %vm3590 = vmor %vm3588, %vm3589
  %v3591 = vsel %vm3590, %v3583, %v3587
  %v3592 = vand.u32 2147483647, %v3313
  %vm3593 = vcmp.eq.f32.partialorder %v3592, 8.507059e+37
  %v3594 = vand.u32 %v3313, 2147483648
  %v3595 = vor.u32 1.1754944e-38, %v3594
  %v3596 = vsel %vm3593, %v3595, %v3591
  %v3597 = vmul.f32 %v3169, %v3596
  %v3598 = vrcp.pop %v3314
  %v3599 = vmul.f32 %v3314, %v3598
  %v3600 = vsub.f32 1.0, %v3599
  %v3601 = vmul.f32 %v3598, %v3600
  %v3602 = vadd.f32 %v3598, %v3601
  %vm3603 = vweird.f32 %v3314
  %vm3604 = vweird.f32 %v3598
  %vm3605 = vmor %vm3603, %vm3604
  %v3606 = vsel %vm3605, %v3598, %v3602
  %v3607 = vand.u32 2147483647, %v3314
  %vm3608 = vcmp.eq.f32.partialorder %v3607, 8.507059e+37
  %v3609 = vand.u32 %v3314, 2147483648
  %v3610 = vor.u32 1.1754944e-38, %v3609
  %v3611 = vsel %vm3608, %v3610, %v3606
  %v3612 = vmul.f32 %v3178, %v3611
  %v3613 = vrcp.pop %v3315
  %v3614 = vmul.f32 %v3315, %v3613
  %v3615 = vsub.f32 1.0, %v3614
  %v3616 = vmul.f32 %v3613, %v3615
  %v3617 = vadd.f32 %v3613, %v3616
  %vm3618 = vweird.f32 %v3315
  %vm3619 = vweird.f32 %v3613
  %vm3620 = vmor %vm3618, %vm3619
  %v3621 = vsel %vm3620, %v3613, %v3617
  %v3622 = vand.u32 2147483647, %v3315
  %vm3623 = vcmp.eq.f32.partialorder %v3622, 8.507059e+37
  %v3624 = vand.u32 %v3315, 2147483648
  %v3625 = vor.u32 1.1754944e-38, %v3624
  %v3626 = vsel %vm3623, %v3625, %v3621
  %v3627 = vmul.f32 %v3187, %v3626
  %v3628 = vrcp.pop %v3316
  %v3629 = vmul.f32 %v3316, %v3628
  %v3630 = vsub.f32 1.0, %v3629
  %v3631 = vmul.f32 %v3628, %v3630
  %v3632 = vadd.f32 %v3628, %v3631
  %vm3633 = vweird.f32 %v3316
  %vm3634 = vweird.f32 %v3628
  %vm3635 = vmor %vm3633, %vm3634
  %v3636 = vsel %vm3635, %v3628, %v3632
  %v3637 = vand.u32 2147483647, %v3316
  %vm3638 = vcmp.eq.f32.partialorder %v3637, 8.507059e+37
  %v3639 = vand.u32 %v3316, 2147483648
  %v3640 = vor.u32 1.1754944e-38, %v3639
  %v3641 = vsel %vm3638, %v3640, %v3636
  %v3642 = vmul.f32 %v3196, %v3641
  %v3643 = vrcp.pop %v3317
  %v3644 = vmul.f32 %v3317, %v3643
  %v3645 = vsub.f32 1.0, %v3644
  %v3646 = vmul.f32 %v3643, %v3645
  %v3647 = vadd.f32 %v3643, %v3646
  %vm3648 = vweird.f32 %v3317
  %vm3649 = vweird.f32 %v3643
  %vm3650 = vmor %vm3648, %vm3649
  %v3651 = vsel %vm3650, %v3643, %v3647
  %v3652 = vand.u32 2147483647, %v3317
  %vm3653 = vcmp.eq.f32.partialorder %v3652, 8.507059e+37
  %v3654 = vand.u32 %v3317, 2147483648
  %v3655 = vor.u32 1.1754944e-38, %v3654
  %v3656 = vsel %vm3653, %v3655, %v3651
  %v3657 = vmul.f32 %v3205, %v3656
  %v3658 = vrcp.pop %v3318
  %v3659 = vmul.f32 %v3318, %v3658
  %v3660 = vsub.f32 1.0, %v3659
  %v3661 = vmul.f32 %v3658, %v3660
  %v3662 = vadd.f32 %v3658, %v3661
  %vm3663 = vweird.f32 %v3318
  %vm3664 = vweird.f32 %v3658
  %vm3665 = vmor %vm3663, %vm3664
  %v3666 = vsel %vm3665, %v3658, %v3662
  %v3667 = vand.u32 2147483647, %v3318
  %vm3668 = vcmp.eq.f32.partialorder %v3667, 8.507059e+37
  %v3669 = vand.u32 %v3318, 2147483648
  %v3670 = vor.u32 1.1754944e-38, %v3669
  %v3671 = vsel %vm3668, %v3670, %v3666
  %v3672 = vmul.f32 %v3214, %v3671
  %v3673 = vrcp.pop %v3319
  %v3674 = vmul.f32 %v3319, %v3673
  %v3675 = vsub.f32 1.0, %v3674
  %v3676 = vmul.f32 %v3673, %v3675
  %v3677 = vadd.f32 %v3673, %v3676
  %vm3678 = vweird.f32 %v3319
  %vm3679 = vweird.f32 %v3673
  %vm3680 = vmor %vm3678, %vm3679
  %v3681 = vsel %vm3680, %v3673, %v3677
  %v3682 = vand.u32 2147483647, %v3319
  %vm3683 = vcmp.eq.f32.partialorder %v3682, 8.507059e+37
  %v3684 = vand.u32 %v3319, 2147483648
  %v3685 = vor.u32 1.1754944e-38, %v3684
  %v3686 = vsel %vm3683, %v3685, %v3681
  %v3687 = vmul.f32 %v3223, %v3686
  %v3688 = vrcp.pop %v3320
  %v3689 = vmul.f32 %v3320, %v3688
  %v3690 = vsub.f32 1.0, %v3689
  %v3691 = vmul.f32 %v3688, %v3690
  %v3692 = vadd.f32 %v3688, %v3691
  %vm3693 = vweird.f32 %v3320
  %vm3694 = vweird.f32 %v3688
  %vm3695 = vmor %vm3693, %vm3694
  %v3696 = vsel %vm3695, %v3688, %v3692
  %v3697 = vand.u32 2147483647, %v3320
  %vm3698 = vcmp.eq.f32.partialorder %v3697, 8.507059e+37
  %v3699 = vand.u32 %v3320, 2147483648
  %v3700 = vor.u32 1.1754944e-38, %v3699
  %v3701 = vsel %vm3698, %v3700, %v3696
  %v3702 = vmul.f32 %v3232, %v3701
  %v3703 = vrcp.pop %v3321
  %v3704 = vmul.f32 %v3321, %v3703
  %v3705 = vsub.f32 1.0, %v3704
  %v3706 = vmul.f32 %v3703, %v3705
  %v3707 = vadd.f32 %v3703, %v3706
  %vm3708 = vweird.f32 %v3321
  %vm3709 = vweird.f32 %v3703
  %vm3710 = vmor %vm3708, %vm3709
  %v3711 = vsel %vm3710, %v3703, %v3707
  %v3712 = vand.u32 2147483647, %v3321
  %vm3713 = vcmp.eq.f32.partialorder %v3712, 8.507059e+37
  %v3714 = vand.u32 %v3321, 2147483648
  %v3715 = vor.u32 1.1754944e-38, %v3714
  %v3716 = vsel %vm3713, %v3715, %v3711
  %v3717 = vmul.f32 %v3241, %v3716
  %v3718 = vrcp.pop %v3322
  %v3719 = vmul.f32 %v3322, %v3718
  %v3720 = vsub.f32 1.0, %v3719
  %v3721 = vmul.f32 %v3718, %v3720
  %v3722 = vadd.f32 %v3718, %v3721
  %vm3723 = vweird.f32 %v3322
  %vm3724 = vweird.f32 %v3718
  %vm3725 = vmor %vm3723, %vm3724
  %v3726 = vsel %vm3725, %v3718, %v3722
  %v3727 = vand.u32 2147483647, %v3322
  %vm3728 = vcmp.eq.f32.partialorder %v3727, 8.507059e+37
  %v3729 = vand.u32 %v3322, 2147483648
  %v3730 = vor.u32 1.1754944e-38, %v3729
  %v3731 = vsel %vm3728, %v3730, %v3726
  %v3732 = vmul.f32 %v3250, %v3731
  %v3733 = vrcp.pop %v3323
  %v3734 = vmul.f32 %v3323, %v3733
  %v3735 = vsub.f32 1.0, %v3734
  %v3736 = vmul.f32 %v3733, %v3735
  %v3737 = vadd.f32 %v3733, %v3736
  %vm3738 = vweird.f32 %v3323
  %vm3739 = vweird.f32 %v3733
  %vm3740 = vmor %vm3738, %vm3739
  %v3741 = vsel %vm3740, %v3733, %v3737
  %v3742 = vand.u32 2147483647, %v3323
  %vm3743 = vcmp.eq.f32.partialorder %v3742, 8.507059e+37
  %v3744 = vand.u32 %v3323, 2147483648
  %v3745 = vor.u32 1.1754944e-38, %v3744
  %v3746 = vsel %vm3743, %v3745, %v3741
  %v3747 = vmul.f32 %v3259, %v3746
  %v3748 = vrcp.pop %v3324
  %v3749 = vmul.f32 %v3324, %v3748
  %v3750 = vsub.f32 1.0, %v3749
  %v3751 = vmul.f32 %v3748, %v3750
  %v3752 = vadd.f32 %v3748, %v3751
  %vm3753 = vweird.f32 %v3324
  %vm3754 = vweird.f32 %v3748
  %vm3755 = vmor %vm3753, %vm3754
  %v3756 = vsel %vm3755, %v3748, %v3752
  %v3757 = vand.u32 2147483647, %v3324
  %vm3758 = vcmp.eq.f32.partialorder %v3757, 8.507059e+37
  %v3759 = vand.u32 %v3324, 2147483648
  %v3760 = vor.u32 1.1754944e-38, %v3759
  %v3761 = vsel %vm3758, %v3760, %v3756
  %v3762 = vmul.f32 %v3268, %v3761
  %v3763 = vrcp.pop %v3325
  %v3764 = vmul.f32 %v3325, %v3763
  %v3765 = vsub.f32 1.0, %v3764
  %v3766 = vmul.f32 %v3763, %v3765
  %v3767 = vadd.f32 %v3763, %v3766
  %vm3768 = vweird.f32 %v3325
  %vm3769 = vweird.f32 %v3763
  %vm3770 = vmor %vm3768, %vm3769
  %v3771 = vsel %vm3770, %v3763, %v3767
  %v3772 = vand.u32 2147483647, %v3325
  %vm3773 = vcmp.eq.f32.partialorder %v3772, 8.507059e+37
  %v3774 = vand.u32 %v3325, 2147483648
  %v3775 = vor.u32 1.1754944e-38, %v3774
  %v3776 = vsel %vm3773, %v3775, %v3771
  %v3777 = vmul.f32 %v3277, %v3776
  %v3778 = vrcp.pop %v3326
  %v3779 = vmul.f32 %v3326, %v3778
  %v3780 = vsub.f32 1.0, %v3779
  %v3781 = vmul.f32 %v3778, %v3780
  %v3782 = vadd.f32 %v3778, %v3781
  %vm3783 = vweird.f32 %v3326
  %vm3784 = vweird.f32 %v3778
  %vm3785 = vmor %vm3783, %vm3784
  %v3786 = vsel %vm3785, %v3778, %v3782
  %v3787 = vand.u32 2147483647, %v3326
  %vm3788 = vcmp.eq.f32.partialorder %v3787, 8.507059e+37
  %v3789 = vand.u32 %v3326, 2147483648
  %v3790 = vor.u32 1.1754944e-38, %v3789
  %v3791 = vsel %vm3788, %v3790, %v3786
  %v3792 = vmul.f32 %v3286, %v3791
  %v3793 = vrcp.pop %v3327
  %v3794 = vmul.f32 %v3327, %v3793
  %v3795 = vsub.f32 1.0, %v3794
  %v3796 = vmul.f32 %v3793, %v3795
  %v3797 = vadd.f32 %v3793, %v3796
  %vm3798 = vweird.f32 %v3327
  %vm3799 = vweird.f32 %v3793
  %vm3800 = vmor %vm3798, %vm3799
  %v3801 = vsel %vm3800, %v3793, %v3797
  %v3802 = vand.u32 2147483647, %v3327
  %vm3803 = vcmp.eq.f32.partialorder %v3802, 8.507059e+37
  %v3804 = vand.u32 %v3327, 2147483648
  %v3805 = vor.u32 1.1754944e-38, %v3804
  %v3806 = vsel %vm3803, %v3805, %v3801
  %v3807 = vmul.f32 %v3295, %v3806
  %v3808 = vld [vmem:[%s6] sm:$0x1]
  %v3810 = vperm.slane %v3808, 0
  %v3812 = vadd.f32 %v3342, %v3810
  %v3813 = vadd.f32 %v3357, %v3810
  %v3814 = vadd.f32 %v3372, %v3810
  %v3815 = vadd.f32 %v3387, %v3810
  %v3816 = vadd.f32 %v3402, %v3810
  %v3817 = vadd.f32 %v3417, %v3810
  %v3818 = vadd.f32 %v3432, %v3810
  %v3819 = vadd.f32 %v3447, %v3810
  %v3820 = vadd.f32 %v3462, %v3810
  %v3821 = vadd.f32 %v3477, %v3810
  %v3822 = vadd.f32 %v3492, %v3810
  %v3823 = vadd.f32 %v3507, %v3810
  %v3824 = vadd.f32 %v3522, %v3810
  %v3825 = vadd.f32 %v3537, %v3810
  %v3826 = vadd.f32 %v3552, %v3810
  %v3827 = vadd.f32 %v3567, %v3810
  %v3828 = vadd.f32 %v3582, %v3810
  %v3829 = vadd.f32 %v3597, %v3810
  %v3830 = vadd.f32 %v3612, %v3810
  %v3831 = vadd.f32 %v3627, %v3810
  %v3832 = vadd.f32 %v3642, %v3810
  %v3833 = vadd.f32 %v3657, %v3810
  %v3834 = vadd.f32 %v3672, %v3810
  %v3835 = vadd.f32 %v3687, %v3810
  %v3836 = vadd.f32 %v3702, %v3810
  %v3837 = vadd.f32 %v3717, %v3810
  %v3838 = vadd.f32 %v3732, %v3810
  %v3839 = vadd.f32 %v3747, %v3810
  %v3840 = vadd.f32 %v3762, %v3810
  %v3841 = vadd.f32 %v3777, %v3810
  %v3842 = vadd.f32 %v3792, %v3810
  %v3843 = vadd.f32 %v3807, %v3810
  %vm3844 = vcmp.gt.f32.partialorder %v3812, 0.0
  %vm3845 = vcmp.gt.f32.partialorder %v3813, 0.0
  %vm3846 = vcmp.gt.f32.partialorder %v3814, 0.0
  %vm3847 = vcmp.gt.f32.partialorder %v3815, 0.0
  %vm3848 = vcmp.gt.f32.partialorder %v3816, 0.0
  %vm3849 = vcmp.gt.f32.partialorder %v3817, 0.0
  %vm3850 = vcmp.gt.f32.partialorder %v3818, 0.0
  %vm3851 = vcmp.gt.f32.partialorder %v3819, 0.0
  %vm3852 = vcmp.gt.f32.partialorder %v3820, 0.0
  %vm3853 = vcmp.gt.f32.partialorder %v3821, 0.0
  %vm3854 = vcmp.gt.f32.partialorder %v3822, 0.0
  %vm3855 = vcmp.gt.f32.partialorder %v3823, 0.0
  %vm3856 = vcmp.gt.f32.partialorder %v3824, 0.0
  %vm3857 = vcmp.gt.f32.partialorder %v3825, 0.0
  %vm3858 = vcmp.gt.f32.partialorder %v3826, 0.0
  %vm3859 = vcmp.gt.f32.partialorder %v3827, 0.0
  %vm3860 = vcmp.gt.f32.partialorder %v3828, 0.0
  %vm3861 = vcmp.gt.f32.partialorder %v3829, 0.0
  %vm3862 = vcmp.gt.f32.partialorder %v3830, 0.0
  %vm3863 = vcmp.gt.f32.partialorder %v3831, 0.0
  %vm3864 = vcmp.gt.f32.partialorder %v3832, 0.0
  %vm3865 = vcmp.gt.f32.partialorder %v3833, 0.0
  %vm3866 = vcmp.gt.f32.partialorder %v3834, 0.0
  %vm3867 = vcmp.gt.f32.partialorder %v3835, 0.0
  %vm3868 = vcmp.gt.f32.partialorder %v3836, 0.0
  %vm3869 = vcmp.gt.f32.partialorder %v3837, 0.0
  %vm3870 = vcmp.gt.f32.partialorder %v3838, 0.0
  %vm3871 = vcmp.gt.f32.partialorder %v3839, 0.0
  %vm3872 = vcmp.gt.f32.partialorder %v3840, 0.0
  %vm3873 = vcmp.gt.f32.partialorder %v3841, 0.0
  %vm3874 = vcmp.gt.f32.partialorder %v3842, 0.0
  %vm3875 = vcmp.gt.f32.partialorder %v3843, 0.0
  %v3876 = vmin.f32 %v3812, 0.0
  %v3877 = vmin.f32 %v3813, 0.0
  %v3878 = vmin.f32 %v3814, 0.0
  %v3879 = vmin.f32 %v3815, 0.0
  %v3880 = vmin.f32 %v3816, 0.0
  %v3881 = vmin.f32 %v3817, 0.0
  %v3882 = vmin.f32 %v3818, 0.0
  %v3883 = vmin.f32 %v3819, 0.0
  %v3884 = vmin.f32 %v3820, 0.0
  %v3885 = vmin.f32 %v3821, 0.0
  %v3886 = vmin.f32 %v3822, 0.0
  %v3887 = vmin.f32 %v3823, 0.0
  %v3888 = vmin.f32 %v3824, 0.0
  %v3889 = vmin.f32 %v3825, 0.0
  %v3890 = vmin.f32 %v3826, 0.0
  %v3891 = vmin.f32 %v3827, 0.0
  %v3892 = vmin.f32 %v3828, 0.0
  %v3893 = vmin.f32 %v3829, 0.0
  %v3894 = vmin.f32 %v3830, 0.0
  %v3895 = vmin.f32 %v3831, 0.0
  %v3896 = vmin.f32 %v3832, 0.0
  %v3897 = vmin.f32 %v3833, 0.0
  %v3898 = vmin.f32 %v3834, 0.0
  %v3899 = vmin.f32 %v3835, 0.0
  %v3900 = vmin.f32 %v3836, 0.0
  %v3901 = vmin.f32 %v3837, 0.0
  %v3902 = vmin.f32 %v3838, 0.0
  %v3903 = vmin.f32 %v3839, 0.0
  %v3904 = vmin.f32 %v3840, 0.0
  %v3905 = vmin.f32 %v3841, 0.0
  %v3906 = vmin.f32 %v3842, 0.0
  %v3907 = vmin.f32 %v3843, 0.0
  %v3908 = vmul.f32 %v3876, 1.442695
  %v3909 = vpow.pop %v3908
  %v3910 = vmul.f32 %v3877, 1.442695
  %v3911 = vpow.pop %v3910
  %v3912 = vmul.f32 %v3878, 1.442695
  %v3913 = vpow.pop %v3912
  %v3914 = vmul.f32 %v3879, 1.442695
  %v3915 = vpow.pop %v3914
  %v3916 = vmul.f32 %v3880, 1.442695
  %v3917 = vpow.pop %v3916
  %v3918 = vmul.f32 %v3881, 1.442695
  %v3919 = vpow.pop %v3918
  %v3920 = vmul.f32 %v3882, 1.442695
  %v3921 = vpow.pop %v3920
  %v3922 = vmul.f32 %v3883, 1.442695
  %v3923 = vpow.pop %v3922
  %v3924 = vmul.f32 %v3884, 1.442695
  %v3925 = vpow.pop %v3924
  %v3926 = vmul.f32 %v3885, 1.442695
  %v3927 = vpow.pop %v3926
  %v3928 = vmul.f32 %v3886, 1.442695
  %v3929 = vpow.pop %v3928
  %v3930 = vmul.f32 %v3887, 1.442695
  %v3931 = vpow.pop %v3930
  %v3932 = vmul.f32 %v3888, 1.442695
  %v3933 = vpow.pop %v3932
  %v3934 = vmul.f32 %v3889, 1.442695
  %v3935 = vpow.pop %v3934
  %v3936 = vmul.f32 %v3890, 1.442695
  %v3937 = vpow.pop %v3936
  %v3938 = vmul.f32 %v3891, 1.442695
  %v3939 = vpow.pop %v3938
  %v3940 = vmul.f32 %v3892, 1.442695
  %v3941 = vpow.pop %v3940
  %v3942 = vmul.f32 %v3893, 1.442695
  %v3943 = vpow.pop %v3942
  %v3944 = vmul.f32 %v3894, 1.442695
  %v3945 = vpow.pop %v3944
  %v3946 = vmul.f32 %v3895, 1.442695
  %v3947 = vpow.pop %v3946
  %v3948 = vmul.f32 %v3896, 1.442695
  %v3949 = vpow.pop %v3948
  %v3950 = vmul.f32 %v3897, 1.442695
  %v3951 = vpow.pop %v3950
  %v3952 = vmul.f32 %v3898, 1.442695
  %v3953 = vpow.pop %v3952
  %v3954 = vmul.f32 %v3899, 1.442695
  %v3955 = vpow.pop %v3954
  %v3956 = vmul.f32 %v3900, 1.442695
  %v3957 = vpow.pop %v3956
  %v3958 = vmul.f32 %v3901, 1.442695
  %v3959 = vpow.pop %v3958
  %v3960 = vmul.f32 %v3902, 1.442695
  %v3961 = vpow.pop %v3960
  %v3962 = vmul.f32 %v3903, 1.442695
  %v3963 = vpow.pop %v3962
  %v3964 = vmul.f32 %v3904, 1.442695
  %v3965 = vpow.pop %v3964
  %v3966 = vmul.f32 %v3905, 1.442695
  %v3967 = vpow.pop %v3966
  %v3968 = vmul.f32 %v3906, 1.442695
  %v3969 = vpow.pop %v3968
  %v3970 = vmul.f32 %v3907, 1.442695
  %v3971 = vpow.pop %v3970
  %v3972 = vsub.f32 %v3909, 1.0
  %v3973 = vsub.f32 %v3911, 1.0
  %v3974 = vsub.f32 %v3913, 1.0
  %v3975 = vsub.f32 %v3915, 1.0
  %v3976 = vsub.f32 %v3917, 1.0
  %v3977 = vsub.f32 %v3919, 1.0
  %v3978 = vsub.f32 %v3921, 1.0
  %v3979 = vsub.f32 %v3923, 1.0
  %v3980 = vsub.f32 %v3925, 1.0
  %v3981 = vsub.f32 %v3927, 1.0
  %v3982 = vsub.f32 %v3929, 1.0
  %v3983 = vsub.f32 %v3931, 1.0
  %v3984 = vsub.f32 %v3933, 1.0
  %v3985 = vsub.f32 %v3935, 1.0
  %v3986 = vsub.f32 %v3937, 1.0
  %v3987 = vsub.f32 %v3939, 1.0
  %v3988 = vsub.f32 %v3941, 1.0
  %v3989 = vsub.f32 %v3943, 1.0
  %v3990 = vsub.f32 %v3945, 1.0
  %v3991 = vsub.f32 %v3947, 1.0
  %v3992 = vsub.f32 %v3949, 1.0
  %v3993 = vsub.f32 %v3951, 1.0
  %v3994 = vsub.f32 %v3953, 1.0
  %v3995 = vsub.f32 %v3955, 1.0
  %v3996 = vsub.f32 %v3957, 1.0
  %v3997 = vsub.f32 %v3959, 1.0
  %v3998 = vsub.f32 %v3961, 1.0
  %v3999 = vsub.f32 %v3963, 1.0
  %v4000 = vsub.f32 %v3965, 1.0
  %v4001 = vsub.f32 %v3967, 1.0
  %v4002 = vsub.f32 %v3969, 1.0
  %v4003 = vsub.f32 %v3971, 1.0
  %v4004 = vsel %vm3844, %v3812, %v3972
  %v4005 = vsel %vm3845, %v3813, %v3973
  %v4006 = vsel %vm3846, %v3814, %v3974
  %v4007 = vsel %vm3847, %v3815, %v3975
  %v4008 = vsel %vm3848, %v3816, %v3976
  %v4009 = vsel %vm3849, %v3817, %v3977
  %v4010 = vsel %vm3850, %v3818, %v3978
  %v4011 = vsel %vm3851, %v3819, %v3979
  %v4012 = vsel %vm3852, %v3820, %v3980
  %v4013 = vsel %vm3853, %v3821, %v3981
  %v4014 = vsel %vm3854, %v3822, %v3982
  %v4015 = vsel %vm3855, %v3823, %v3983
  %v4016 = vsel %vm3856, %v3824, %v3984
  %v4017 = vsel %vm3857, %v3825, %v3985
  %v4018 = vsel %vm3858, %v3826, %v3986
  %v4019 = vsel %vm3859, %v3827, %v3987
  %v4020 = vsel %vm3860, %v3828, %v3988
  %v4021 = vsel %vm3861, %v3829, %v3989
  %v4022 = vsel %vm3862, %v3830, %v3990
  %v4023 = vsel %vm3863, %v3831, %v3991
  %v4024 = vsel %vm3864, %v3832, %v3992
  %v4025 = vsel %vm3865, %v3833, %v3993
  %v4026 = vsel %vm3866, %v3834, %v3994
  %v4027 = vsel %vm3867, %v3835, %v3995
  %v4028 = vsel %vm3868, %v3836, %v3996
  %v4029 = vsel %vm3869, %v3837, %v3997
  %v4030 = vsel %vm3870, %v3838, %v3998
  %v4031 = vsel %vm3871, %v3839, %v3999
  %v4032 = vsel %vm3872, %v3840, %v4000
  %v4033 = vsel %vm3873, %v3841, %v4001
  %v4034 = vsel %vm3874, %v3842, %v4002
  %v4035 = vsel %vm3875, %v3843, %v4003
  %v4036 = vld [vmem:[%s7] sm:$0xff]
  %v4037 = vld [vmem:[%s7 + $0x8] sm:$0xff]
  %v4038 = vld [vmem:[%s7 + $0x10] sm:$0xff]
  %v4039 = vld [vmem:[%s7 + $0x18] sm:$0xff]
  %v4040 = vld [vmem:[%s7 + $0x20] sm:$0xff]
  %v4041 = vld [vmem:[%s7 + $0x28] sm:$0xff]
  %v4042 = vld [vmem:[%s7 + $0x30] sm:$0xff]
  %v4043 = vld [vmem:[%s7 + $0x38] sm:$0xff]
  %v4044 = vld [vmem:[%s7 + $0x40] sm:$0xff]
  %v4045 = vld [vmem:[%s7 + $0x48] sm:$0xff]
  %v4046 = vld [vmem:[%s7 + $0x50] sm:$0xff]
  %v4047 = vld [vmem:[%s7 + $0x58] sm:$0xff]
  %v4048 = vld [vmem:[%s7 + $0x60] sm:$0xff]
  %v4049 = vld [vmem:[%s7 + $0x68] sm:$0xff]
  %v4050 = vld [vmem:[%s7 + $0x70] sm:$0xff]
  %v4051 = vld [vmem:[%s7 + $0x78] sm:$0xff]
  %v4052 = vld [vmem:[%s8] sm:$0x1]
  %v4054 = vperm.slane %v4052, 0
  %v4088 = vrot.slane %v4005, 7
  %vm4089 = vcmask 1041409
  %v4090 = vsel %vm4089, %v4088, %v4004
  %v4091 = vrot.slane %v4006, 6
  %vm4092 = vcmask 1042434
  %v4093 = vsel %vm4092, %v4091, %v4090
  %v4094 = vrot.slane %v4007, 5
  %vm4095 = vcmask 1043459
  %v4096 = vsel %vm4095, %v4094, %v4093
  %v4097 = vrot.slane %v4008, 4
  %vm4098 = vcmask 1044484
  %v4099 = vsel %vm4098, %v4097, %v4096
  %v4100 = vrot.slane %v4009, 3
  %vm4101 = vcmask 1045509
  %v4102 = vsel %vm4101, %v4100, %v4099
  %v4103 = vrot.slane %v4010, 2
  %vm4104 = vcmask 1046534
  %v4105 = vsel %vm4104, %v4103, %v4102
  %v4106 = vrot.slane %v4011, 1
  %vm4107 = vcmask 1047559
  %v4108 = vsel %vm4107, %v4106, %v4105
  %v4109 = vrot.slane %v4013, 7
  %v4110 = vsel %vm4089, %v4109, %v4012
  %v4111 = vrot.slane %v4014, 6
  %v4112 = vsel %vm4092, %v4111, %v4110
  %v4113 = vrot.slane %v4015, 5
  %v4114 = vsel %vm4095, %v4113, %v4112
  %v4115 = vrot.slane %v4016, 4
  %v4116 = vsel %vm4098, %v4115, %v4114
  %v4117 = vrot.slane %v4017, 3
  %v4118 = vsel %vm4101, %v4117, %v4116
  %v4119 = vrot.slane %v4018, 2
  %v4120 = vsel %vm4104, %v4119, %v4118
  %v4121 = vrot.slane %v4019, 1
  %v4122 = vsel %vm4107, %v4121, %v4120
  %v4123 = vrot.slane %v4021, 7
  %v4124 = vsel %vm4089, %v4123, %v4020
  %v4125 = vrot.slane %v4022, 6
  %v4126 = vsel %vm4092, %v4125, %v4124
  %v4127 = vrot.slane %v4023, 5
  %v4128 = vsel %vm4095, %v4127, %v4126
  %v4129 = vrot.slane %v4024, 4
  %v4130 = vsel %vm4098, %v4129, %v4128
  %v4131 = vrot.slane %v4025, 3
  %v4132 = vsel %vm4101, %v4131, %v4130
  %v4133 = vrot.slane %v4026, 2
  %v4134 = vsel %vm4104, %v4133, %v4132
  %v4135 = vrot.slane %v4027, 1
  %v4136 = vsel %vm4107, %v4135, %v4134
  %v4137 = vrot.slane %v4029, 7
  %v4138 = vsel %vm4089, %v4137, %v4028
  %v4139 = vrot.slane %v4030, 6
  %v4140 = vsel %vm4092, %v4139, %v4138
  %v4141 = vrot.slane %v4031, 5
  %v4142 = vsel %vm4095, %v4141, %v4140
  %v4143 = vrot.slane %v4032, 4
  %v4144 = vsel %vm4098, %v4143, %v4142
  %v4145 = vrot.slane %v4033, 3
  %v4146 = vsel %vm4101, %v4145, %v4144
  %v4147 = vrot.slane %v4034, 2
  %v4148 = vsel %vm4104, %v4147, %v4146
  %v4149 = vrot.slane %v4035, 1
  %v4150 = vsel %vm4107, %v4149, %v4148
  %4155 = vmatpush.msra.mxu0 %v4051
  %4156 = vmatpush.msra.mxu0 %v4050
  %4157 = vmatpush.msra.mxu0 %v4049
  %4158 = vmatpush.msra.mxu0 %v4048
  %4159 = vmatpush.msra.mxu0 %v4047
  %4160 = vmatpush.msra.mxu0 %v4046
  %4161 = vmatpush.msra.mxu0 %v4045
  %4162 = vmatpush.msra.mxu0 %v4044
  %4163 = vmatpush.msra.mxu0 %v4043
  %4164 = vmatpush.msra.mxu0 %v4042
  %4165 = vmatpush.msra.mxu0 %v4041
  %4166 = vmatpush.msra.mxu0 %v4040
  %4167 = vmatpush.msra.mxu0 %v4039
  %4168 = vmatpush.msra.mxu0 %v4038
  %4169 = vmatpush.msra.mxu0 %v4037
  %4170 = vmatpush.msra.mxu0 %v4036
  %4171 = vmatmul.f32.gmra.mxu0 %v4108
  %v4172 = vpop.f32.mrf.mxu0
  %v4173 = vadd.f32 %v4054, %v4172
  %4174 = vmatmul.f32.gmra.mxu0 %v4122
  %v4175 = vpop.f32.mrf.mxu0
  %v4176 = vadd.f32 %v4054, %v4175
  %4177 = vmatmul.f32.gmra.mxu0 %v4136
  %v4178 = vpop.f32.mrf.mxu0
  %v4179 = vadd.f32 %v4054, %v4178
  %4180 = vmatmul.f32.gmra.mxu0 %v4150
  %v4181 = vpop.f32.mrf.mxu0
  %v4182 = vadd.f32 %v4054, %v4181
  %4183 = vdwg.mxu0
  %v4184 = vld [vmem:[%s9] sm:$0xff]
  %v4185 = vld [vmem:[%s9 + $0x8] sm:$0xff]
  %v4186 = vld [vmem:[%s9 + $0x10] sm:$0xff]
  %v4187 = vld [vmem:[%s9 + $0x18] sm:$0xff]
  %v4188 = vld [vmem:[%s9 + $0x20] sm:$0xff]
  %v4189 = vld [vmem:[%s9 + $0x28] sm:$0xff]
  %v4190 = vld [vmem:[%s9 + $0x30] sm:$0xff]
  %v4191 = vld [vmem:[%s9 + $0x38] sm:$0xff]
  %v4192 = vld [vmem:[%s9 + $0x40] sm:$0xff]
  %v4193 = vld [vmem:[%s9 + $0x48] sm:$0xff]
  %v4194 = vld [vmem:[%s9 + $0x50] sm:$0xff]
  %v4195 = vld [vmem:[%s9 + $0x58] sm:$0xff]
  %v4196 = vld [vmem:[%s9 + $0x60] sm:$0xff]
  %v4197 = vld [vmem:[%s9 + $0x68] sm:$0xff]
  %v4198 = vld [vmem:[%s9 + $0x70] sm:$0xff]
  %v4199 = vld [vmem:[%s9 + $0x78] sm:$0xff]
  %v4200 = vld [vmem:[%s10] sm:$0x1]
  %v4202 = vperm.slane %v4200, 0
  %4204 = vmatpush.msra.mxu0 %v4199
  %4205 = vmatpush.msra.mxu0 %v4198
  %4206 = vmatpush.msra.mxu0 %v4197
  %4207 = vmatpush.msra.mxu0 %v4196
  %4208 = vmatpush.msra.mxu0 %v4195
  %4209 = vmatpush.msra.mxu0 %v4194
  %4210 = vmatpush.msra.mxu0 %v4193
  %4211 = vmatpush.msra.mxu0 %v4192
  %4212 = vmatpush.msra.mxu0 %v4191
  %4213 = vmatpush.msra.mxu0 %v4190
  %4214 = vmatpush.msra.mxu0 %v4189
  %4215 = vmatpush.msra.mxu0 %v4188
  %4216 = vmatpush.msra.mxu0 %v4187
  %4217 = vmatpush.msra.mxu0 %v4186
  %4218 = vmatpush.msra.mxu0 %v4185
  %4219 = vmatpush.msra.mxu0 %v4184
  %4220 = vmatmul.f32.gmra.mxu0 %v4108
  %v4221 = vpop.f32.mrf.mxu0
  %v4222 = vadd.f32 %v4202, %v4221
  %4223 = vmatmul.f32.gmra.mxu0 %v4122
  %v4224 = vpop.f32.mrf.mxu0
  %v4225 = vadd.f32 %v4202, %v4224
  %4226 = vmatmul.f32.gmra.mxu0 %v4136
  %v4227 = vpop.f32.mrf.mxu0
  %v4228 = vadd.f32 %v4202, %v4227
  %4229 = vmatmul.f32.gmra.mxu0 %v4150
  %v4230 = vpop.f32.mrf.mxu0
  %v4231 = vadd.f32 %v4202, %v4230
  %4232 = vdwg.mxu0
  %4233 = vxpose.xlu0.b32.start [1/16] %v4173, 128
  %4234 = vxpose.xlu0.b32.cont [2/16] %v4176, 128
  %4235 = vxpose.xlu0.b32.cont [3/16] %v4179, 128
  %4236 = vxpose.xlu0.b32.cont [4/16] %v4182, 128
  %4237 = vxpose.xlu0.b32.cont [5/16] 0.0, 128
  %4238 = vxpose.xlu0.b32.cont [6/16] 0.0, 128
  %4239 = vxpose.xlu0.b32.cont [7/16] 0.0, 128
  %4240 = vxpose.xlu0.b32.cont [8/16] 0.0, 128
  %4241 = vxpose.xlu0.b32.cont [9/16] 0.0, 128
  %4242 = vxpose.xlu0.b32.cont [10/16] 0.0, 128
  %4243 = vxpose.xlu0.b32.cont [11/16] 0.0, 128
  %4244 = vxpose.xlu0.b32.cont [12/16] 0.0, 128
  %4245 = vxpose.xlu0.b32.cont [13/16] 0.0, 128
  %4246 = vxpose.xlu0.b32.cont [14/16] 0.0, 128
  %4247 = vxpose.xlu0.b32.cont [15/16] 0.0, 128
  %4248 = vxpose.xlu0.b32.end [16/16] 0.0, 128
  %v4249 = vpop.trf.xlu0
  %v4250 = vpop.trf.xlu0
  %v4251 = vpop.trf.xlu0
  %v4252 = vpop.trf.xlu0
  %v4253 = vpop.trf.xlu0
  %v4254 = vpop.trf.xlu0
  %v4255 = vpop.trf.xlu0
  %v4256 = vpop.trf.xlu0
  %v4257 = vpop.trf.xlu0
  %v4258 = vpop.trf.xlu0
  %v4259 = vpop.trf.xlu0
  %v4260 = vpop.trf.xlu0
  %v4261 = vpop.trf.xlu0
  %v4262 = vpop.trf.xlu0
  %v4263 = vpop.trf.xlu0
  %v4264 = vpop.trf.xlu0
  %v4265 = vld [vmem:[%s11] sm:$0x1]
  %v4266 = vld [vmem:[%s1] sm:$0xff]
  %v4267 = vld [vmem:[%s1 + $0x8] sm:$0xff]
  %v4268 = vld [vmem:[%s1 + $0x10] sm:$0xff]
  %v4269 = vld [vmem:[%s1 + $0x18] sm:$0xff]
  %4271 = vset.pattern.permute.xlu0 0
  %4272 = vperm.xlu0 %4271, %v4222
  %v4273 = vpop.permute.xlu0 %4272
  %4276 = vset.pattern.permute.xlu0 0
  %4277 = vperm.xlu0 %4276, %v4225
  %v4278 = vpop.permute.xlu0 %4277
  %4281 = vset.pattern.permute.xlu0 0
  %4282 = vperm.xlu0 %4281, %v4228
  %v4283 = vpop.permute.xlu0 %4282
  %4286 = vset.pattern.permute.xlu0 0
  %4287 = vperm.xlu0 %4286, %v4231
  %v4288 = vpop.permute.xlu0 %4287
  %v4290 = vperm.slane %v4249, 0
  %v4291 = vadd.f32 %v4273, %v4290
  %v4292 = vadd.f32 %v4278, %v4290
  %v4293 = vadd.f32 %v4283, %v4290
  %v4294 = vadd.f32 %v4288, %v4290
  %v4295 = vmul.f32 %v4291, 0.2
  %v4296 = vmul.f32 %v4292, 0.2
  %v4297 = vmul.f32 %v4293, 0.2
  %v4298 = vmul.f32 %v4294, 0.2
  %v4299 = vmax.f32 %v4291, %v4295
  %v4300 = vmax.f32 %v4292, %v4296
  %v4301 = vmax.f32 %v4293, %v4297
  %v4302 = vmax.f32 %v4294, %v4298
  %v4304 = vperm.slane %v4265, 0
  %4305 = vset.pattern.permute.xlu0 0
  %4306 = vperm.xlu0 %4305, %v4304
  %v4307 = vpop.permute.xlu0 %4306
  %v4309 = vmul.f32 %v4307, %v4299
  %v4310 = vmul.f32 %v4307, %v4300
  %v4311 = vmul.f32 %v4307, %v4301
  %v4312 = vmul.f32 %v4307, %v4302
  %v4313 = vadd.f32 %v4266, %v4309
  %v4314 = vadd.f32 %v4267, %v4310
  %v4315 = vadd.f32 %v4268, %v4311
  %v4316 = vadd.f32 %v4269, %v4312
  %4317 = vset.pattern.permute.xlu0 1
  %4318 = vperm.xlu0 %4317, %v4222
  %v4319 = vpop.permute.xlu0 %4318
  %4321 = vset.pattern.permute.xlu0 1
  %4322 = vperm.xlu0 %4321, %v4225
  %v4323 = vpop.permute.xlu0 %4322
  %4325 = vset.pattern.permute.xlu0 1
  %4326 = vperm.xlu0 %4325, %v4228
  %v4327 = vpop.permute.xlu0 %4326
  %4329 = vset.pattern.permute.xlu0 1
  %4330 = vperm.xlu0 %4329, %v4231
  %v4331 = vpop.permute.xlu0 %4330
  %v4333 = vperm.slane %v4249, 1
  %v4334 = vadd.f32 %v4319, %v4333
  %v4335 = vadd.f32 %v4323, %v4333
  %v4336 = vadd.f32 %v4327, %v4333
  %v4337 = vadd.f32 %v4331, %v4333
  %v4338 = vmul.f32 %v4334, 0.2
  %v4339 = vmul.f32 %v4335, 0.2
  %v4340 = vmul.f32 %v4336, 0.2
  %v4341 = vmul.f32 %v4337, 0.2
  %v4342 = vmax.f32 %v4334, %v4338
  %v4343 = vmax.f32 %v4335, %v4339
  %v4344 = vmax.f32 %v4336, %v4340
  %v4345 = vmax.f32 %v4337, %v4341
  %4346 = vset.pattern.permute.xlu0 1
  %4347 = vperm.xlu0 %4346, %v4304
  %v4348 = vpop.permute.xlu0 %4347
  %v4350 = vmul.f32 %v4348, %v4342
  %v4351 = vmul.f32 %v4348, %v4343
  %v4352 = vmul.f32 %v4348, %v4344
  %v4353 = vmul.f32 %v4348, %v4345
  %v4354 = vadd.f32 %v4313, %v4350
  %v4355 = vadd.f32 %v4314, %v4351
  %v4356 = vadd.f32 %v4315, %v4352
  %v4357 = vadd.f32 %v4316, %v4353
  %4358 = vset.pattern.permute.xlu0 2
  %4359 = vperm.xlu0 %4358, %v4222
  %v4360 = vpop.permute.xlu0 %4359
  %4362 = vset.pattern.permute.xlu0 2
  %4363 = vperm.xlu0 %4362, %v4225
  %v4364 = vpop.permute.xlu0 %4363
  %4366 = vset.pattern.permute.xlu0 2
  %4367 = vperm.xlu0 %4366, %v4228
  %v4368 = vpop.permute.xlu0 %4367
  %4370 = vset.pattern.permute.xlu0 2
  %4371 = vperm.xlu0 %4370, %v4231
  %v4372 = vpop.permute.xlu0 %4371
  %v4374 = vperm.slane %v4249, 2
  %v4375 = vadd.f32 %v4360, %v4374
  %v4376 = vadd.f32 %v4364, %v4374
  %v4377 = vadd.f32 %v4368, %v4374
  %v4378 = vadd.f32 %v4372, %v4374
  %v4379 = vmul.f32 %v4375, 0.2
  %v4380 = vmul.f32 %v4376, 0.2
  %v4381 = vmul.f32 %v4377, 0.2
  %v4382 = vmul.f32 %v4378, 0.2
  %v4383 = vmax.f32 %v4375, %v4379
  %v4384 = vmax.f32 %v4376, %v4380
  %v4385 = vmax.f32 %v4377, %v4381
  %v4386 = vmax.f32 %v4378, %v4382
  %4387 = vset.pattern.permute.xlu0 2
  %4388 = vperm.xlu0 %4387, %v4304
  %v4389 = vpop.permute.xlu0 %4388
  %v4391 = vmul.f32 %v4389, %v4383
  %v4392 = vmul.f32 %v4389, %v4384
  %v4393 = vmul.f32 %v4389, %v4385
  %v4394 = vmul.f32 %v4389, %v4386
  %v4395 = vadd.f32 %v4354, %v4391
  %v4396 = vadd.f32 %v4355, %v4392
  %v4397 = vadd.f32 %v4356, %v4393
  %v4398 = vadd.f32 %v4357, %v4394
  %4399 = vset.pattern.permute.xlu0 3
  %4400 = vperm.xlu0 %4399, %v4222
  %v4401 = vpop.permute.xlu0 %4400
  %4403 = vset.pattern.permute.xlu0 3
  %4404 = vperm.xlu0 %4403, %v4225
  %v4405 = vpop.permute.xlu0 %4404
  %4407 = vset.pattern.permute.xlu0 3
  %4408 = vperm.xlu0 %4407, %v4228
  %v4409 = vpop.permute.xlu0 %4408
  %4411 = vset.pattern.permute.xlu0 3
  %4412 = vperm.xlu0 %4411, %v4231
  %v4413 = vpop.permute.xlu0 %4412
  %v4415 = vperm.slane %v4249, 3
  %v4416 = vadd.f32 %v4401, %v4415
  %v4417 = vadd.f32 %v4405, %v4415
  %v4418 = vadd.f32 %v4409, %v4415
  %v4419 = vadd.f32 %v4413, %v4415
  %v4420 = vmul.f32 %v4416, 0.2
  %v4421 = vmul.f32 %v4417, 0.2
  %v4422 = vmul.f32 %v4418, 0.2
  %v4423 = vmul.f32 %v4419, 0.2
  %v4424 = vmax.f32 %v4416, %v4420
  %v4425 = vmax.f32 %v4417, %v4421
  %v4426 = vmax.f32 %v4418, %v4422
  %v4427 = vmax.f32 %v4419, %v4423
  %4428 = vset.pattern.permute.xlu0 3
  %4429 = vperm.xlu0 %4428, %v4304
  %v4430 = vpop.permute.xlu0 %4429
  %v4432 = vmul.f32 %v4430, %v4424
  %v4433 = vmul.f32 %v4430, %v4425
  %v4434 = vmul.f32 %v4430, %v4426
  %v4435 = vmul.f32 %v4430, %v4427
  %v4436 = vadd.f32 %v4395, %v4432
  %v4437 = vadd.f32 %v4396, %v4433
  %v4438 = vadd.f32 %v4397, %v4434
  %v4439 = vadd.f32 %v4398, %v4435
  %vm4440 = vcmask 261120
  %v4441 = vsel %vm4440, %v4436, -inf
  %4442 = vmax.xlane.f32.xlu0 %v4441
  %v4443 = vpop.xlane.xlu0 %4442
  %v4444 = vsel %vm4440, %v4437, -inf
  %4445 = vmax.xlane.f32.xlu0 %v4444
  %v4446 = vpop.xlane.xlu0 %4445
  %v4447 = vsel %vm4440, %v4438, -inf
  %4448 = vmax.xlane.f32.xlu0 %v4447
  %v4449 = vpop.xlane.xlu0 %4448
  %v4450 = vsel %vm4440, %v4439, -inf
  %4451 = vmax.xlane.f32.xlu0 %v4450
  %v4452 = vpop.xlane.xlu0 %4451
  %v4453 = vsub.f32 %v4436, %v4443
  %v4454 = vsub.f32 %v4437, %v4446
  %v4455 = vsub.f32 %v4438, %v4449
  %v4456 = vsub.f32 %v4439, %v4452
  %v4457 = vmul.f32 %v4453, 1.442695
  %v4458 = vpow.pop %v4457
  %v4459 = vmul.f32 %v4454, 1.442695
  %v4460 = vpow.pop %v4459
  %v4461 = vmul.f32 %v4455, 1.442695
  %v4462 = vpow.pop %v4461
  %v4463 = vmul.f32 %v4456, 1.442695
  %v4464 = vpow.pop %v4463
  %v4465 = vsel %vm4440, %v4458, 0.0
  %4466 = vadd.xlane.f32.xlu0 %v4465
  %v4467 = vpop.xlane.xlu0 %4466
  %v4468 = vsel %vm4440, %v4460, 0.0
  %4469 = vadd.xlane.f32.xlu0 %v4468
  %v4470 = vpop.xlane.xlu0 %4469
  %v4471 = vsel %vm4440, %v4462, 0.0
  %4472 = vadd.xlane.f32.xlu0 %v4471
  %v4473 = vpop.xlane.xlu0 %4472
  %v4474 = vsel %vm4440, %v4464, 0.0
  %4475 = vadd.xlane.f32.xlu0 %v4474
  %v4476 = vpop.xlane.xlu0 %4475
  %v4478 = vsel %vm4440, %v4458, 0
  %v4481 = vsel %vm4440, %v4460, 0
  %v4484 = vsel %vm4440, %v4462, 0
  %v4487 = vsel %vm4440, %v4464, 0
  %4489 = vmatpush.msra.mxu0 0.0
  %4490 = vmatpush.msra.mxu0 0.0
  %4491 = vmatpush.msra.mxu0 0.0
  %4492 = vmatpush.msra.mxu0 0.0
  %4493 = vmatpush.msra.mxu0 0.0
  %4494 = vmatpush.msra.mxu0 0.0
  %4495 = vmatpush.msra.mxu0 0.0
  %4496 = vmatpush.msra.mxu0 0.0
  %4497 = vmatpush.msra.mxu0 0.0
  %4498 = vmatpush.msra.mxu0 0.0
  %4499 = vmatpush.msra.mxu0 0.0
  %4500 = vmatpush.msra.mxu0 0.0
  %4501 = vmatpush.msra.mxu0 %v4182
  %4502 = vmatpush.msra.mxu0 %v4179
  %4503 = vmatpush.msra.mxu0 %v4176
  %4504 = vmatpush.msra.mxu0 %v4173
  %4505 = vmatmul.f32.gmra.mxu0 %v4478
  %v4506 = vpop.f32.mrf.mxu0
  %v4507 = vadd.f32 0.0, %v4506
  %4508 = vmatmul.f32.gmra.mxu0 %v4481
  %v4509 = vpop.f32.mrf.mxu0
  %v4510 = vadd.f32 0.0, %v4509
  %4511 = vmatmul.f32.gmra.mxu0 %v4484
  %v4512 = vpop.f32.mrf.mxu0
  %v4513 = vadd.f32 0.0, %v4512
  %4514 = vmatmul.f32.gmra.mxu0 %v4487
  %v4515 = vpop.f32.mrf.mxu0
  %v4516 = vadd.f32 0.0, %v4515
  %4517 = vdwg.mxu0
  %v4518 = vmax.f32 %v4467, 1e-30
  %v4519 = vmax.f32 %v4470, 1e-30
  %v4520 = vmax.f32 %v4473, 1e-30
  %v4521 = vmax.f32 %v4476, 1e-30
  %v4522 = vrcp.pop %v4518
  %v4523 = vmul.f32 %v4518, %v4522
  %v4524 = vsub.f32 1.0, %v4523
  %v4525 = vmul.f32 %v4522, %v4524
  %v4526 = vadd.f32 %v4522, %v4525
  %vm4527 = vweird.f32 %v4518
  %vm4528 = vweird.f32 %v4522
  %vm4529 = vmor %vm4527, %vm4528
  %v4530 = vsel %vm4529, %v4522, %v4526
  %v4531 = vand.u32 2147483647, %v4518
  %vm4532 = vcmp.eq.f32.partialorder %v4531, 8.507059e+37
  %v4533 = vand.u32 %v4518, 2147483648
  %v4534 = vor.u32 1.1754944e-38, %v4533
  %v4535 = vsel %vm4532, %v4534, %v4530
  %v4536 = vmul.f32 %v4507, %v4535
  %v4537 = vrcp.pop %v4519
  %v4538 = vmul.f32 %v4519, %v4537
  %v4539 = vsub.f32 1.0, %v4538
  %v4540 = vmul.f32 %v4537, %v4539
  %v4541 = vadd.f32 %v4537, %v4540
  %vm4542 = vweird.f32 %v4519
  %vm4543 = vweird.f32 %v4537
  %vm4544 = vmor %vm4542, %vm4543
  %v4545 = vsel %vm4544, %v4537, %v4541
  %v4546 = vand.u32 2147483647, %v4519
  %vm4547 = vcmp.eq.f32.partialorder %v4546, 8.507059e+37
  %v4548 = vand.u32 %v4519, 2147483648
  %v4549 = vor.u32 1.1754944e-38, %v4548
  %v4550 = vsel %vm4547, %v4549, %v4545
  %v4551 = vmul.f32 %v4510, %v4550
  %v4552 = vrcp.pop %v4520
  %v4553 = vmul.f32 %v4520, %v4552
  %v4554 = vsub.f32 1.0, %v4553
  %v4555 = vmul.f32 %v4552, %v4554
  %v4556 = vadd.f32 %v4552, %v4555
  %vm4557 = vweird.f32 %v4520
  %vm4558 = vweird.f32 %v4552
  %vm4559 = vmor %vm4557, %vm4558
  %v4560 = vsel %vm4559, %v4552, %v4556
  %v4561 = vand.u32 2147483647, %v4520
  %vm4562 = vcmp.eq.f32.partialorder %v4561, 8.507059e+37
  %v4563 = vand.u32 %v4520, 2147483648
  %v4564 = vor.u32 1.1754944e-38, %v4563
  %v4565 = vsel %vm4562, %v4564, %v4560
  %v4566 = vmul.f32 %v4513, %v4565
  %v4567 = vrcp.pop %v4521
  %v4568 = vmul.f32 %v4521, %v4567
  %v4569 = vsub.f32 1.0, %v4568
  %v4570 = vmul.f32 %v4567, %v4569
  %v4571 = vadd.f32 %v4567, %v4570
  %vm4572 = vweird.f32 %v4521
  %vm4573 = vweird.f32 %v4567
  %vm4574 = vmor %vm4572, %vm4573
  %v4575 = vsel %vm4574, %v4567, %v4571
  %v4576 = vand.u32 2147483647, %v4521
  %vm4577 = vcmp.eq.f32.partialorder %v4576, 8.507059e+37
  %v4578 = vand.u32 %v4521, 2147483648
  %v4579 = vor.u32 1.1754944e-38, %v4578
  %v4580 = vsel %vm4577, %v4579, %v4575
  %v4581 = vmul.f32 %v4516, %v4580
  %v4582 = vld [vmem:[%s12] sm:$0x1]
  %v4584 = vperm.slane %v4582, 0
  %v4586 = vadd.f32 %v4536, %v4584
  %v4587 = vadd.f32 %v4551, %v4584
  %v4588 = vadd.f32 %v4566, %v4584
  %v4589 = vadd.f32 %v4581, %v4584
  %vm4590 = vcmask 31744
  %v4591 = vsel %vm4590, %v4586, -inf
  %4592 = vmax.xlane.f32.xlu0 %v4591
  %v4593 = vpop.xlane.xlu0 %4592
  %v4594 = vsel %vm4590, %v4587, -inf
  %4595 = vmax.xlane.f32.xlu0 %v4594
  %v4596 = vpop.xlane.xlu0 %4595
  %v4597 = vsel %vm4590, %v4588, -inf
  %4598 = vmax.xlane.f32.xlu0 %v4597
  %v4599 = vpop.xlane.xlu0 %4598
  %v4600 = vsel %vm4590, %v4589, -inf
  %4601 = vmax.xlane.f32.xlu0 %v4600
  %v4602 = vpop.xlane.xlu0 %4601
  %v4603 = vsub.f32 %v4586, %v4593
  %v4604 = vsub.f32 %v4587, %v4596
  %v4605 = vsub.f32 %v4588, %v4599
  %v4606 = vsub.f32 %v4589, %v4602
  %v4607 = vmul.f32 %v4603, 1.442695
  %v4608 = vpow.pop %v4607
  %v4609 = vmul.f32 %v4604, 1.442695
  %v4610 = vpow.pop %v4609
  %v4611 = vmul.f32 %v4605, 1.442695
  %v4612 = vpow.pop %v4611
  %v4613 = vmul.f32 %v4606, 1.442695
  %v4614 = vpow.pop %v4613
  %v4615 = vsel %vm4590, %v4608, 0.0
  %4616 = vadd.xlane.f32.xlu0 %v4615
  %v4617 = vpop.xlane.xlu0 %4616
  %v4618 = vsel %vm4590, %v4610, 0.0
  %4619 = vadd.xlane.f32.xlu0 %v4618
  %v4620 = vpop.xlane.xlu0 %4619
  %v4621 = vsel %vm4590, %v4612, 0.0
  %4622 = vadd.xlane.f32.xlu0 %v4621
  %v4623 = vpop.xlane.xlu0 %4622
  %v4624 = vsel %vm4590, %v4614, 0.0
  %4625 = vadd.xlane.f32.xlu0 %v4624
  %v4626 = vpop.xlane.xlu0 %4625
  %v4627 = vlog2.pop %v4617
  %v4628 = vmul.f32 %v4627, 0.6931472
  %v4629 = vlog2.pop %v4620
  %v4630 = vmul.f32 %v4629, 0.6931472
  %v4631 = vlog2.pop %v4623
  %v4632 = vmul.f32 %v4631, 0.6931472
  %v4633 = vlog2.pop %v4626
  %v4634 = vmul.f32 %v4633, 0.6931472
  %v4635 = vadd.f32 %v4628, %v4593
  %v4636 = vadd.f32 %v4630, %v4596
  %v4637 = vadd.f32 %v4632, %v4599
  %v4638 = vadd.f32 %v4634, %v4602
  %v4639 = vsub.f32 %v4586, %v4635
  %v4640 = vsub.f32 %v4587, %v4636
  %v4641 = vsub.f32 %v4588, %v4637
  %v4642 = vsub.f32 %v4589, %v4638
  %4643 = vst.msk [vmem:[%s13] sm:$0xff] %vm4590, %v4639
  %4644 = vst.msk [vmem:[%s13 + $0x8] sm:$0xff] %vm4590, %v4640
  %4645 = vst.msk [vmem:[%s13 + $0x10] sm:$0xff] %vm4590, %v4641
  %4646 = vst.msk [vmem:[%s13 + $0x18] sm:$0xff] %vm4590, %v4642
  // Predicated region
  $region54: #{tpu_custom_call.1} parent=0 // pred_check
    _
  $region55: #{tpu_custom_call.1} parent=0 // pred_check_branch
    %4648 = sbr.rel (0) target = $region57
  $region56: #{tpu_custom_call.1} parent=0 // pred_region
    _
  $region57: #{tpu_custom_call.1} parent=0 // pred_fallthru
    _
  // Predicated region
  $region58: #{tpu_custom_call.1} parent=0 // pred_check
    _
  $region59: #{tpu_custom_call.1} parent=0 // pred_check_branch
    %4650 = sbr.rel (0) target = $region61
  $region60: #{tpu_custom_call.1} parent=0 // pred_region
    _
  $region61: #{tpu_custom_call.1} parent=0 // pred_fallthru
    _

</llo_original>
